<compile_context>
chip_gen: v6e
topology: v6e:2x2x1
jax: 0.10.0
libtpu: 0.0.40
codegen_flags: <defaults>
</compile_context>

<pallas_src>
import jax
import jax.numpy as jnp
from jax import lax
from jax.experimental import pallas as pl
from jax.experimental.pallas import tpu as pltpu


def _rationalizer_head_kernel(u_ref, v_ref, w1_ref, wc_ref, bc_ref, out_ref):
    # u_ref:  (TB, Su, H)  bf16
    # v_ref:  (TB, Sv, H)  bf16
    # w1_ref: (H, H)       bf16
    # wc_ref: (2, 3H)      f32   (torch Linear layout, lane-dense)
    # bc_ref: (1, 2)       f32
    # out_ref:(TB, Sv, 2)  f32
    tb, su, h = u_ref.shape
    _, sv, _ = v_ref.shape

    u = u_ref[...]                                  # (tb, su, h) bf16
    v = v_ref[...]                                  # (tb, sv, h) bf16
    w1 = w1_ref[...]                                # (h, h)      bf16

    u_f32 = u.astype(jnp.float32)                   # exact widening

    # ---- main MXU matmul: flatten the batch so M = tb*su fills MXU rows ----
    # (reshape done on the f32 copy: su % 8 == 0 => tile-exact, no bf16 relayout;
    #  bf16 -> f32 -> bf16 roundtrip is value-exact)
    u_flat = u_f32.reshape(tb * su, h).astype(jnp.bfloat16)
    t = jnp.tanh(jnp.dot(u_flat, w1, preferred_element_type=jnp.float32))
    t = t.reshape(tb, su, h).astype(jnp.bfloat16)   # (tb, su, h)

    # ---- scores^T = per-batch v @ t^T -> (tb, sv, su); softmax over su in f32 ----
    s = jnp.einsum("bkh,bsh->bks", v, t, preferred_element_type=jnp.float32)
    s = s - jnp.max(s, axis=-1, keepdims=True)
    e = jnp.exp(s)
    p = e * pl.reciprocal(jnp.sum(e, axis=-1, keepdims=True), approx=True)

    # ---- attention-weighted context over u ----
    ctx = jnp.einsum("bks,bsh->bkh", p.astype(jnp.bfloat16), u,
                     preferred_element_type=jnp.float32)        # (tb, sv, h) f32

    # ---- classifier on cat([ctx, v, u_sent]): split (2, 3H) weight into 3 slabs ----
    wc_a = wc_ref[:, 0:h]            # (2, h) acts on ctx
    wc_b = wc_ref[:, h:2 * h]        # (2, h) acts on v
    wc_c = wc_ref[:, 2 * h:3 * h]    # (2, h) acts on u_sent (broadcast over sv)

    dn = (((1,), (1,)), ((), ()))    # contract last dims: X @ W^T
    ctx_flat = ctx.reshape(tb * sv, h)
    v_flat = v.astype(jnp.float32).reshape(tb * sv, h)
    u_sent = jnp.max(u_f32, axis=1)                              # (tb, h)

    logits = (lax.dot_general(ctx_flat, wc_a, dn, preferred_element_type=jnp.float32)
              + lax.dot_general(v_flat, wc_b, dn, preferred_element_type=jnp.float32)
              ).reshape(tb, sv, 2)
    logits = logits + lax.dot_general(u_sent, wc_c, dn,
                                      preferred_element_type=jnp.float32)[:, None, :]
    logits = logits + bc_ref[...]                                # (1, 2) broadcast

    out_ref[...] = logits.astype(out_ref.dtype)


def _choose_block_b(B, Su, *, mxu_rows=256):
    """Batch tile so TB*Su ~ MXU rows, while keeping >= 2 grid steps (v7x: 2 TCs)."""
    tb = max(1, mxu_rows // max(Su, 1))
    if B >= 2:
        tb = min(tb, pl.cdiv(B, 2))
    return max(1, min(tb, B))


def rationalizer_head(u_states, v_states, w1, wc, bc, *, block_b=None):
    """Pallas implementation of the Rationalizer head (post-encoder, eval mode).

    u_states: (B, Su, H) f32, v_states: (B, Sv, H) f32, w1: (H, H) f32,
    wc: (2, 3H) f32 (torch Linear weight layout), bc: (2,) f32.
    Returns logits (B, Sv, 2) f32.
    """
    B, Su, H = u_states.shape
    Bv, Sv, Hv = v_states.shape
    assert Bv == B and Hv == H
    assert w1.shape == (H, H)
    assert wc.shape == (2, 3 * H)
    bc2 = jnp.asarray(bc, jnp.float32).reshape(1, 2)

    tb = _choose_block_b(B, Su) if block_b is None else block_b
    nb = pl.cdiv(B, tb)
    Bp = nb * tb
    if Bp != B:
        # Zero-pad the batch; padded rows produce finite garbage (uniform
        # softmax over zeros) and are sliced off below.
        pad = ((0, Bp - B), (0, 0), (0, 0))
        u_states = jnp.pad(u_states, pad)
        v_states = jnp.pad(v_states, pad)

    # bf16 at the boundary for the matmul operands; accumulation stays f32.
    u_bf = u_states.astype(jnp.bfloat16)
    v_bf = v_states.astype(jnp.bfloat16)
    w1_bf = w1.astype(jnp.bfloat16)
    wc_f = wc.astype(jnp.float32)

    out = pl.pallas_call(
        _rationalizer_head_kernel,
        out_shape=jax.ShapeDtypeStruct((Bp, Sv, 2), jnp.float32),
        grid_spec=pltpu.PrefetchScalarGridSpec(
            num_scalar_prefetch=0,
            grid=(nb,),
            in_specs=[
                pl.BlockSpec((tb, Su, H), lambda b: (b, 0, 0)),
                pl.BlockSpec((tb, Sv, H), lambda b: (b, 0, 0)),
                # Broadcast operands (constant index_map): single-buffered.
                pl.BlockSpec((H, H), lambda b: (0, 0),
                             pipeline_mode=pl.Buffered(1)),
                pl.BlockSpec((2, 3 * H), lambda b: (0, 0),
                             pipeline_mode=pl.Buffered(1)),
                pl.BlockSpec((1, 2), lambda b: (0, 0),
                             pipeline_mode=pl.Buffered(1)),
            ],
            out_specs=pl.BlockSpec((tb, Sv, 2), lambda b: (b, 0, 0)),
        ),
        # VMEM footprint at these shapes is only a few MiB — comfortably under
        # even the 16 MiB v5e scoped default, so no vmem_limit_bytes override.
        compiler_params=pltpu.CompilerParams(
            dimension_semantics=("parallel",)),
    )(u_bf, v_bf, w1_bf, wc_f, bc2)
    return out[:B]


def rationalizer_head_ref(u_states, v_states, w1, wc, bc):
    """Pure-JAX reference mirroring the PyTorch forward (eval mode).

    Uses the kernel's precision policy (bf16 matmul inputs, f32 accumulation
    and softmax) so the comparison isolates kernel bugs from the deliberate
    mixed-precision choice; the math is otherwise identical to the torch head.
    """
    u_bf = u_states.astype(jnp.bfloat16)
    v_bf = v_states.astype(jnp.bfloat16)
    w1_bf = w1.astype(jnp.bfloat16)

    t = jnp.tanh(jnp.einsum("bsh,hj->bsj", u_bf, w1_bf,
                            preferred_element_type=jnp.float32))
    t = t.astype(jnp.bfloat16)
    scores = jnp.einsum("bsh,bkh->bsk", t, v_bf,
                        preferred_element_type=jnp.float32)          # (B, Su, Sv)
    p = jax.nn.softmax(jnp.swapaxes(scores, 1, 2), axis=-1)          # (B, Sv, Su)
    ctx = jnp.einsum("bks,bsh->bkh", p.astype(jnp.bfloat16), u_bf,
                     preferred_element_type=jnp.float32)             # (B, Sv, H)
    u_sent = jnp.max(u_bf.astype(jnp.float32), axis=1)               # (B, H)
    B, Sv = v_states.shape[0], v_states.shape[1]
    feats = jnp.concatenate(
        [ctx, v_bf.astype(jnp.float32),
         jnp.broadcast_to(u_sent[:, None, :], (B, Sv, u_sent.shape[-1]))],
        axis=-1)                                                     # (B, Sv, 3H)
    return feats @ wc.T + bc[None, None, :]                          # (B, Sv, 2)


if __name__ == "__main__":
    B, Su, Sv, H = 8, 8, 8, 768  # hidden size fixed to 768 by the module

    key = jax.random.PRNGKey(0)
    k_u, k_v, k_w1, k_wc, k_bc = jax.random.split(key, 5)

    # "encoder hidden states" stand-ins + deterministic parameters
    u_states = jax.random.normal(k_u, (B, Su, H), dtype=jnp.float32)
    v_states = jax.random.normal(k_v, (B, Sv, H), dtype=jnp.float32)
    w1 = jax.random.normal(k_w1, (H, H), dtype=jnp.float32)
    wc = jax.random.normal(k_wc, (2, 3 * H), dtype=jnp.float32) * 0.02  # Linear weight
    bc = jax.random.normal(k_bc, (2,), dtype=jnp.float32) * 0.02        # Linear bias

    logits = rationalizer_head(u_states, v_states, w1, wc, bc)
    logits = jax.block_until_ready(logits)

    ref = rationalizer_head_ref(u_states, v_states, w1, wc, bc)
    assert logits.shape == (B, Sv, 2)
    max_err = float(jnp.max(jnp.abs(logits - ref)))
    assert jnp.allclose(logits, ref, atol=2e-2, rtol=2e-2), max_err

    print("KERNEL_OK")
</pallas_src>

<mosaic_0001>
module attributes {stable_mosaic.version = 11 : i64} {
  func.func @_rationalizer_head_kernel(%arg0: i32, %arg1: memref<4x8x768xbf16, #tpu.memory_space<vmem>>, %arg2: memref<4x8x768xbf16, #tpu.memory_space<vmem>>, %arg3: memref<768x768xbf16, #tpu.memory_space<vmem>>, %arg4: memref<2x2304xf32, #tpu.memory_space<vmem>>, %arg5: memref<1x2xf32, #tpu.memory_space<vmem>>, %arg6: memref<4x8x2xf32, #tpu.memory_space<vmem>>) attributes {dimension_semantics = [#tpu.dimension_semantics<parallel>], iteration_bounds = array<i64: 2>, scalar_prefetch = 0 : i64, scratch_operands = 0 : i64, tpu.core_type = #tpu.core_type<tc>, window_params = [{transform_indices = @transform_0, window_bounds = array<i64: 4, 8, 768>}, {transform_indices = @transform_1, window_bounds = array<i64: 4, 8, 768>}, {pipeline_mode = #tpu.pipeline_mode<synchronous>, transform_indices = @transform_2, window_bounds = array<i64: 768, 768>}, {pipeline_mode = #tpu.pipeline_mode<synchronous>, transform_indices = @transform_3, window_bounds = array<i64: 2, 2304>}, {pipeline_mode = #tpu.pipeline_mode<synchronous>, transform_indices = @transform_4, window_bounds = array<i64: 1, 2>}, {transform_indices = @transform_5, window_bounds = array<i64: 4, 8, 2>}]} {
    %c0 = arith.constant 0 : index
    %c0_0 = arith.constant 0 : index
    %c0_1 = arith.constant 0 : index
    %0 = vector.load %arg1[%c0, %c0_0, %c0_1] : memref<4x8x768xbf16, #tpu.memory_space<vmem>>, vector<4x8x768xbf16>
    %c0_2 = arith.constant 0 : index
    %c0_3 = arith.constant 0 : index
    %c0_4 = arith.constant 0 : index
    %1 = vector.load %arg2[%c0_2, %c0_3, %c0_4] : memref<4x8x768xbf16, #tpu.memory_space<vmem>>, vector<4x8x768xbf16>
    %c0_5 = arith.constant 0 : index
    %c0_6 = arith.constant 0 : index
    %2 = vector.load %arg3[%c0_5, %c0_6] : memref<768x768xbf16, #tpu.memory_space<vmem>>, vector<768x768xbf16>
    %3 = arith.extf %0 : vector<4x8x768xbf16> to vector<4x8x768xf32>
    %4 = vector.shape_cast %3 : vector<4x8x768xf32> to vector<32x768xf32>
    %5 = arith.truncf %4 : vector<32x768xf32> to vector<32x768xbf16>
    %cst = arith.constant dense<0.000000e+00> : vector<32x768xf32>
    %6 = tpu.matmul %5, %2, %cst {dimension_numbers = #tpu.dot_dimension_numbers<[1], [0], [0], [1], [0, 0, 1, 1], [], []>} : vector<32x768xbf16>, vector<768x768xbf16>, vector<32x768xf32> -> vector<32x768xf32>
    %7 = math.tanh %6 : vector<32x768xf32>
    %8 = vector.shape_cast %7 : vector<32x768xf32> to vector<4x8x768xf32>
    %9 = arith.truncf %8 : vector<4x8x768xf32> to vector<4x8x768xbf16>
    "tpu.trace_start"() <{level = 10 : i32, message = "bkh,bsh->bks"}> : () -> ()
    %cst_7 = arith.constant dense<0.000000e+00> : vector<4x8x8xf32>
    %10 = tpu.matmul %1, %9, %cst_7 {dimension_numbers = #tpu.dot_dimension_numbers<[2], [2], [1], [1], [0, 0, 0, 1, 1, 1], [0], [0]>} : vector<4x8x768xbf16>, vector<4x8x768xbf16>, vector<4x8x8xf32> -> vector<4x8x8xf32>
    "tpu.trace_stop"() : () -> ()
    %cst_8 = arith.constant dense<0xFF800000> : vector<4x8xf32>
    %11 = vector.multi_reduction <maximumf>, %10, %cst_8 [2] : vector<4x8x8xf32> to vector<4x8xf32>
    %12 = vector.shape_cast %11 : vector<4x8xf32> to vector<4x8x1xf32>
    %13 = vector.broadcast %12 : vector<4x8x1xf32> to vector<4x8x8xf32>
    %14 = arith.subf %10, %13 : vector<4x8x8xf32>
    %15 = math.exp %14 : vector<4x8x8xf32>
    %cst_9 = arith.constant dense<0.000000e+00> : vector<4x8xf32>
    %16 = vector.multi_reduction <add>, %15, %cst_9 [2] : vector<4x8x8xf32> to vector<4x8xf32>
    %17 = vector.shape_cast %16 : vector<4x8xf32> to vector<4x8x1xf32>
    %18 = tpu.reciprocal %17 {approx = true} : vector<4x8x1xf32> -> vector<4x8x1xf32>
    %19 = vector.broadcast %18 : vector<4x8x1xf32> to vector<4x8x8xf32>
    %20 = arith.mulf %15, %19 : vector<4x8x8xf32>
    %21 = arith.truncf %20 : vector<4x8x8xf32> to vector<4x8x8xbf16>
    "tpu.trace_start"() <{level = 10 : i32, message = "bks,bsh->bkh"}> : () -> ()
    %cst_10 = arith.constant dense<0.000000e+00> : vector<4x8x768xf32>
    %22 = tpu.matmul %21, %0, %cst_10 {dimension_numbers = #tpu.dot_dimension_numbers<[2], [1], [1], [2], [0, 0, 0, 1, 1, 2], [0], [0]>} : vector<4x8x8xbf16>, vector<4x8x768xbf16>, vector<4x8x768xf32> -> vector<4x8x768xf32>
    "tpu.trace_stop"() : () -> ()
    %c0_11 = arith.constant 0 : index
    %c0_12 = arith.constant 0 : index
    %23 = vector.load %arg4[%c0_11, %c0_12] : memref<2x2304xf32, #tpu.memory_space<vmem>>, vector<2x768xf32>
    %c0_13 = arith.constant 0 : index
    %c768 = arith.constant 768 : index
    %24 = vector.load %arg4[%c0_13, %c768] : memref<2x2304xf32, #tpu.memory_space<vmem>>, vector<2x768xf32>
    %c0_14 = arith.constant 0 : index
    %c1536 = arith.constant 1536 : index
    %25 = vector.load %arg4[%c0_14, %c1536] : memref<2x2304xf32, #tpu.memory_space<vmem>>, vector<2x768xf32>
    %26 = vector.shape_cast %22 : vector<4x8x768xf32> to vector<32x768xf32>
    %27 = arith.extf %1 : vector<4x8x768xbf16> to vector<4x8x768xf32>
    %28 = vector.shape_cast %27 : vector<4x8x768xf32> to vector<32x768xf32>
    %cst_15 = arith.constant dense<0xFF800000> : vector<4x768xf32>
    %29 = vector.multi_reduction <maximumf>, %3, %cst_15 [1] : vector<4x8x768xf32> to vector<4x768xf32>
    %cst_16 = arith.constant dense<0.000000e+00> : vector<32x2xf32>
    %30 = tpu.matmul %26, %23, %cst_16 {dimension_numbers = #tpu.dot_dimension_numbers<[1], [1], [0], [0], [0, 0, 1, 0], [], []>} : vector<32x768xf32>, vector<2x768xf32>, vector<32x2xf32> -> vector<32x2xf32>
    %cst_17 = arith.constant dense<0.000000e+00> : vector<32x2xf32>
    %31 = tpu.matmul %28, %24, %cst_17 {dimension_numbers = #tpu.dot_dimension_numbers<[1], [1], [0], [0], [0, 0, 1, 0], [], []>} : vector<32x768xf32>, vector<2x768xf32>, vector<32x2xf32> -> vector<32x2xf32>
    %32 = arith.addf %30, %31 : vector<32x2xf32>
    %33 = vector.shape_cast %32 : vector<32x2xf32> to vector<4x8x2xf32>
    %cst_18 = arith.constant dense<0.000000e+00> : vector<4x2xf32>
    %34 = tpu.matmul %29, %25, %cst_18 {dimension_numbers = #tpu.dot_dimension_numbers<[1], [1], [0], [0], [0, 0, 1, 0], [], []>} : vector<4x768xf32>, vector<2x768xf32>, vector<4x2xf32> -> vector<4x2xf32>
    %35 = vector.shape_cast %34 : vector<4x2xf32> to vector<4x1x2xf32>
    %36 = vector.broadcast %35 : vector<4x1x2xf32> to vector<4x8x2xf32>
    %37 = arith.addf %33, %36 : vector<4x8x2xf32>
    %c0_19 = arith.constant 0 : index
    %c0_20 = arith.constant 0 : index
    %38 = vector.load %arg5[%c0_19, %c0_20] : memref<1x2xf32, #tpu.memory_space<vmem>>, vector<1x2xf32>
    %39 = vector.shape_cast %38 : vector<1x2xf32> to vector<1x1x2xf32>
    %40 = vector.broadcast %39 : vector<1x1x2xf32> to vector<4x8x2xf32>
    %41 = arith.addf %37, %40 : vector<4x8x2xf32>
    %c0_21 = arith.constant 0 : index
    %c0_22 = arith.constant 0 : index
    %c0_23 = arith.constant 0 : index
    %42 = vector.load %arg6[%c0_21, %c0_22, %c0_23] : memref<4x8x2xf32, #tpu.memory_space<vmem>>, vector<4x8x2xf32>
    tpu.vector_store %arg6[%c0_21, %c0_22, %c0_23], %41 {strides = array<i32>} : memref<4x8x2xf32, #tpu.memory_space<vmem>>, vector<4x8x2xf32>,
    return
  }
  func.func @transform_0(%arg0: i32) -> (i32, i32, i32) {
    %c0_i32 = arith.constant 0 : i32
    %c0_i32_0 = arith.constant 0 : i32
    %c0_i32_1 = arith.constant 0 : i32
    return %arg0, %c0_i32, %c0_i32_0 : i32, i32, i32
  }
  func.func @transform_1(%arg0: i32) -> (i32, i32, i32) {
    %c0_i32 = arith.constant 0 : i32
    %c0_i32_0 = arith.constant 0 : i32
    %c0_i32_1 = arith.constant 0 : i32
    return %arg0, %c0_i32, %c0_i32_0 : i32, i32, i32
  }
  func.func @transform_2(%arg0: i32) -> (i32, i32) {
    %c0_i32 = arith.constant 0 : i32
    %c0_i32_0 = arith.constant 0 : i32
    %c0_i32_1 = arith.constant 0 : i32
    return %c0_i32, %c0_i32_0 : i32, i32
  }
  func.func @transform_3(%arg0: i32) -> (i32, i32) {
    %c0_i32 = arith.constant 0 : i32
    %c0_i32_0 = arith.constant 0 : i32
    %c0_i32_1 = arith.constant 0 : i32
    return %c0_i32, %c0_i32_0 : i32, i32
  }
  func.func @transform_4(%arg0: i32) -> (i32, i32) {
    %c0_i32 = arith.constant 0 : i32
    %c0_i32_0 = arith.constant 0 : i32
    %c0_i32_1 = arith.constant 0 : i32
    return %c0_i32, %c0_i32_0 : i32, i32
  }
  func.func @transform_5(%arg0: i32) -> (i32, i32, i32) {
    %c0_i32 = arith.constant 0 : i32
    %c0_i32_0 = arith.constant 0 : i32
    %c0_i32_1 = arith.constant 0 : i32
    return %arg0, %c0_i32, %c0_i32_0 : i32, i32, i32
  }
}

</mosaic_0001>

<llo_original>
// kernel: tpu_custom_call.1
$region0: #{tpu_custom_call.1}
  #allocation0 [shape = 'u32[]', space=smem, size = 0x4, offset = 0x4, fixed_abs, tag = 'smem constant byte address 0x4 - core index']
  #allocation1 [shape = 'u32[144,128]{1,0:T(1,128)}', space=vmem, size = 0x12000, scoped, tag = 'internal scratch']
  %s0 = inlined_call_operand.hbm [shape: bf16[8,8,768], index: 0, kind: input, shape index: {}]
  %s1 = inlined_call_operand.hbm [shape: bf16[8,8,768], index: 1, kind: input, shape index: {}]
  %s2 = inlined_call_operand.hbm [shape: bf16[768,768], index: 2, kind: input, shape index: {}]
  %s3 = inlined_call_operand.hbm [shape: f32[2,2304], index: 3, kind: input, shape index: {}]
  %s4 = inlined_call_operand.hbm [shape: f32[1,2], index: 4, kind: input, shape index: {}]
  %s5 = inlined_call_operand.vmem [shape: f32[8,8,2], index: 5, kind: output, shape index: {}]
  %s6 = sld [smem:[#allocation0]]
  $region73: #{tpu_custom_call.1} parent=0
    _
  %s8 = ssub.s32 1, %s6
  %s9 = scalar_select 0, %s8, %s6
  $region1: #{tpu_custom_call.1} parent=0
    #allocation2 [shape = 'u8[98304]{0}', space=vmem, size = 0x18000, scoped, tag = 'input window, operand 0']
    #allocation3 [shape = 's32[2]{0}', space=sflag, size = 0x8, scoped, tag = 'scoped memory for tpu_custom_call.1']
    #allocation4 [shape = 'u8[98304]{0}', space=vmem, size = 0x18000, scoped, tag = 'input window, operand 1']
    #allocation5 [shape = 's32[2]{0}', space=sflag, size = 0x8, scoped, tag = 'scoped memory for tpu_custom_call.1']
    #allocation6 [shape = 'u8[1179648]{0}', space=vmem, size = 0x120000, scoped, tag = 'input window, operand 2, single buffered']
    #allocation7 [shape = 'u8[18432]{0}', space=vmem, size = 0x4800, scoped, tag = 'input window, operand 3, single buffered']
    #allocation8 [shape = 's32[1]{0}', space=sflag, size = 0x4, scoped, tag = 'scoped memory for tpu_custom_call.1']
    #allocation9 [shape = 'u8[512]{0}', space=vmem, size = 0x400, scoped, tag = 'input window, operand 4, single buffered']
    %10 = vsyncpa [#allocation3], 0
    %s11 = scalar_lea.sflag [#allocation3], 1
    %12 = vsyncpa %s11, 0
    %13 = vsyncpa [#allocation5], 0
    %s14 = scalar_lea.sflag [#allocation5], 1
    %15 = vsyncpa %s14, 0
    %16 = vsyncpa [#allocation8], 0
    loop: start=0, step=1, limit=4
    $region2: #{tpu_custom_call.1} parent=1 // loop_pre_header
      _
    $region3: #{tpu_custom_call.1} parent=1 // loop_header
      %s18 = sphi 0, %s22
      %p19 = scmp.ge.s32.totalorder %s18, 4
      %s28 = sphi 0, %s30
      %s31 = sphi 0, %s28
      %s32 = sphi 0, %s31
      %s48 = sphi 0, %s32
      %s54 = sphi 0, %s56
      %s57 = sphi 0, %s54
      %s58 = sphi 0, %s57
      %s74 = sphi 0, %s58
      %s78 = sphi 0, %s78
      %s80 = sphi 0, %s78
      %s81 = sphi 0, %s80
      %s95 = sphi 0, %s81
      %s99 = sphi 0, %s99
      %s101 = sphi 0, %s99
      %s102 = sphi 0, %s101
      %s116 = sphi 0, %s102
      %s120 = sphi 0, %s120
      %s122 = sphi 0, %s120
      %s123 = sphi 0, %s122
      %s137 = sphi 0, %s123
      %s143 = sphi 0, %s145
      %s146 = sphi 0, %s143
      %s147 = sphi 0, %s146
      %s163 = sphi 0, %s147
    $region4: #{tpu_custom_call.1} parent=1 // loop_header_branch
      %21 = sbr.rel (%p19) target = $region8
    $region5: #{tpu_custom_call.1} parent=1 // loop_body
      %s23 = ssub.s32 %s18, 1
      %s24 = ssub.s32 %s18, 2
      %s25 = sadd.s32 %s18, 1
      %s26 = ssub.s32 %s18, %s25
      %p27 = scmp.eq.s32.totalorder %s26, 0
      %s29 = sadd.s32 %s28, 1
      %s30 = scalar_select %p27, %s28, %s29
      %p33 = pneg %p27
      %p34 = scmp.eq.s32.totalorder %s18, 1
      %p35 = por %p33, %p34
      %p36 = scmp.ne.s32.totalorder %s28, %s31
      %p37 = scmp.eq.s32.totalorder %s18, 0
      %p38 = por %p36, %p37
      %p39 = scmp.ne.s32.totalorder %s28, %s31
      %p40 = scmp.eq.s32.totalorder %s23, 1
      %p41 = por %p39, %p40
      %p42 = scmp.ne.s32.totalorder %s31, %s32
      %p43 = scmp.eq.s32.totalorder %s23, 0
      %p44 = por %p42, %p43
      %p45 = scmp.ne.s32.totalorder %s31, %s32
      %p46 = scmp.eq.s32.totalorder %s24, 1
      %p47 = por %p45, %p46
      %p49 = scmp.ne.s32.totalorder %s32, %s48
      %p50 = scmp.eq.s32.totalorder %s24, 0
      %p51 = por %p49, %p50
      %s52 = ssub.s32 %s18, %s25
      %p53 = scmp.eq.s32.totalorder %s52, 0
      %s55 = sadd.s32 %s54, 1
      %s56 = scalar_select %p53, %s54, %s55
      %p59 = pneg %p53
      %p60 = scmp.eq.s32.totalorder %s18, 1
      %p61 = por %p59, %p60
      %p62 = scmp.ne.s32.totalorder %s54, %s57
      %p63 = scmp.eq.s32.totalorder %s18, 0
      %p64 = por %p62, %p63
      %p65 = scmp.ne.s32.totalorder %s54, %s57
      %p66 = scmp.eq.s32.totalorder %s23, 1
      %p67 = por %p65, %p66
      %p68 = scmp.ne.s32.totalorder %s57, %s58
      %p69 = scmp.eq.s32.totalorder %s23, 0
      %p70 = por %p68, %p69
      %p71 = scmp.ne.s32.totalorder %s57, %s58
      %p72 = scmp.eq.s32.totalorder %s24, 1
      %p73 = por %p71, %p72
      %p75 = scmp.ne.s32.totalorder %s58, %s74
      %p76 = scmp.eq.s32.totalorder %s24, 0
      %p77 = por %p75, %p76
      %s79 = sadd.s32 %s78, 1
      %p82 = scmp.eq.s32.totalorder %s18, 1
      %p83 = scmp.ne.s32.totalorder %s78, %s80
      %p84 = scmp.eq.s32.totalorder %s18, 0
      %p85 = por %p83, %p84
      %p86 = scmp.ne.s32.totalorder %s78, %s80
      %p87 = scmp.eq.s32.totalorder %s23, 1
      %p88 = por %p86, %p87
      %p89 = scmp.ne.s32.totalorder %s80, %s81
      %p90 = scmp.eq.s32.totalorder %s23, 0
      %p91 = por %p89, %p90
      %p92 = scmp.ne.s32.totalorder %s80, %s81
      %p93 = scmp.eq.s32.totalorder %s24, 1
      %p94 = por %p92, %p93
      %p96 = scmp.ne.s32.totalorder %s81, %s95
      %p97 = scmp.eq.s32.totalorder %s24, 0
      %p98 = por %p96, %p97
      %s100 = sadd.s32 %s99, 1
      %p103 = scmp.eq.s32.totalorder %s18, 1
      %p104 = scmp.ne.s32.totalorder %s99, %s101
      %p105 = scmp.eq.s32.totalorder %s18, 0
      %p106 = por %p104, %p105
      %p107 = scmp.ne.s32.totalorder %s99, %s101
      %p108 = scmp.eq.s32.totalorder %s23, 1
      %p109 = por %p107, %p108
      %p110 = scmp.ne.s32.totalorder %s101, %s102
      %p111 = scmp.eq.s32.totalorder %s23, 0
      %p112 = por %p110, %p111
      %p113 = scmp.ne.s32.totalorder %s101, %s102
      %p114 = scmp.eq.s32.totalorder %s24, 1
      %p115 = por %p113, %p114
      %p117 = scmp.ne.s32.totalorder %s102, %s116
      %p118 = scmp.eq.s32.totalorder %s24, 0
      %p119 = por %p117, %p118
      %s121 = sadd.s32 %s120, 1
      %p124 = scmp.eq.s32.totalorder %s18, 1
      %p125 = scmp.ne.s32.totalorder %s120, %s122
      %p126 = scmp.eq.s32.totalorder %s18, 0
      %p127 = por %p125, %p126
      %p128 = scmp.ne.s32.totalorder %s120, %s122
      %p129 = scmp.eq.s32.totalorder %s23, 1
      %p130 = por %p128, %p129
      %p131 = scmp.ne.s32.totalorder %s122, %s123
      %p132 = scmp.eq.s32.totalorder %s23, 0
      %p133 = por %p131, %p132
      %p134 = scmp.ne.s32.totalorder %s122, %s123
      %p135 = scmp.eq.s32.totalorder %s24, 1
      %p136 = por %p134, %p135
      %p138 = scmp.ne.s32.totalorder %s123, %s137
      %p139 = scmp.eq.s32.totalorder %s24, 0
      %p140 = por %p138, %p139
      %s141 = ssub.s32 %s18, %s25
      %p142 = scmp.eq.s32.totalorder %s141, 0
      %s144 = sadd.s32 %s143, 1
      %s145 = scalar_select %p142, %s143, %s144
      %p148 = pneg %p142
      %p149 = scmp.eq.s32.totalorder %s18, 1
      %p150 = por %p148, %p149
      %p151 = scmp.ne.s32.totalorder %s143, %s146
      %p152 = scmp.eq.s32.totalorder %s18, 0
      %p153 = por %p151, %p152
      %p154 = scmp.ne.s32.totalorder %s143, %s146
      %p155 = scmp.eq.s32.totalorder %s23, 1
      %p156 = por %p154, %p155
      %p157 = scmp.ne.s32.totalorder %s146, %s147
      %p158 = scmp.eq.s32.totalorder %s23, 0
      %p159 = por %p157, %p158
      %p160 = scmp.ne.s32.totalorder %s146, %s147
      %p161 = scmp.eq.s32.totalorder %s24, 1
      %p162 = por %p160, %p161
      %p164 = scmp.ne.s32.totalorder %s147, %s163
      %p165 = scmp.eq.s32.totalorder %s24, 0
      %p166 = por %p164, %p165
      %p167 = scmp.le.s32.totalorder 1, %s18
      %p168 = scmp.lt.s32.totalorder %s18, 3
      %p169 = pnand %p167, %p168
      %p170 = pneg %p169
      // Predicated region
      $region9: #{tpu_custom_call.1} parent=5 // pred_check
        _
      $region10: #{tpu_custom_call.1} parent=5 // pred_check_branch
        %172 = sbr.rel (%p169) target = $region12
      $region11: #{tpu_custom_call.1} parent=5 // pred_region
        %s173 = ssub.s32 %s18, 1
        // Predicated region
        $region13: #{tpu_custom_call.1} parent=11 // pred_check
          %p174 = pneg %p91
        $region14: #{tpu_custom_call.1} parent=11 // pred_check_branch
          %176 = sbr.rel (%p174) target = $region16
        $region15: #{tpu_custom_call.1} parent=11 // pred_region
          %s178 = ssub.s32 36864, 36864
          %179 = vsyncadd [#allocation5], %s178
          %s180 = sshll.u32 [#allocation6], 4
          %s181 = int_to_ptr.vmem [resolvable:$true] %s180
          %186 = dma.hbm_to_vmem [thread:$0]  %s2, 36864, %s181, [#allocation5], 384, 384, 24
        $region16: #{tpu_custom_call.1} parent=11 // pred_fallthru
          _
        // Predicated region
        $region17: #{tpu_custom_call.1} parent=11 // pred_check
          %p187 = pneg %p112
        $region18: #{tpu_custom_call.1} parent=11 // pred_check_branch
          %189 = sbr.rel (%p187) target = $region20
        $region19: #{tpu_custom_call.1} parent=11 // pred_region
          %s191 = ssub.s32 576, 576
          %192 = vsyncadd [#allocation8], %s191
          %s194 = sshll.u32 [#allocation7], 4
          %s195 = int_to_ptr.vmem [resolvable:$true] %s194
          %197 = dma.hbm_to_vmem [thread:$0]  %s3, 576, %s195, [#allocation8]
        $region20: #{tpu_custom_call.1} parent=11 // pred_fallthru
          _
        // Predicated region
        $region21: #{tpu_custom_call.1} parent=11 // pred_check
          %p198 = pneg %p133
        $region22: #{tpu_custom_call.1} parent=11 // pred_check_branch
          %200 = sbr.rel (%p198) target = $region24
        $region23: #{tpu_custom_call.1} parent=11 // pred_region
          %s202 = ssub.s32 16, 16
          %203 = vsyncadd [#allocation8], %s202
          %s205 = sshll.u32 [#allocation9], 4
          %s206 = int_to_ptr.vmem [resolvable:$true] %s205
          %208 = dma.hbm_to_vmem [thread:$0]  %s4, 16, %s206, [#allocation8]
        $region24: #{tpu_custom_call.1} parent=11 // pred_fallthru
          _
      $region12: #{tpu_custom_call.1} parent=5 // pred_fallthru
        _
      %p209 = scmp.lt.s32.totalorder %s18, 2
      // Predicated region
      $region25: #{tpu_custom_call.1} parent=5 // pred_check
        %p210 = pneg %p209
      $region26: #{tpu_custom_call.1} parent=5 // pred_check_branch
        %212 = sbr.rel (%p210) target = $region28
      $region27: #{tpu_custom_call.1} parent=5 // pred_region
        // Predicated region
        $region29: #{tpu_custom_call.1} parent=27 // pred_check
          %p213 = pneg %p38
        $region30: #{tpu_custom_call.1} parent=27 // pred_check_branch
          %215 = sbr.rel (%p213) target = $region32
        $region31: #{tpu_custom_call.1} parent=27 // pred_region
          %s216 = sand.u32 %s28, 1
          %s217 = scalar_lea.sflag [#allocation3], %s216
          %s218 = sand.u32 %s28, 1
          %s219 = smul.addr %s218, 96
          %s220 = scalar_lea.vmem [#allocation2], %s219
          %s221 = smul.u32 4, %s18
          %s223 = ssub.s32 1536, 1536
          %224 = vsyncadd %s217, %s223
          %s225 = smul.addr %s221, 6
          %s226 = smul.addr %s225, 64
          %s227 = scalar_lea.hbm %s0, %s226
          %s228 = sshll.u32 %s220, 4
          %s229 = int_to_ptr.vmem [resolvable:$true] %s228
          %234 = dma.hbm_to_vmem [thread:$0]  %s227, 1536, %s229, %s217, 384, 384, 24
        $region32: #{tpu_custom_call.1} parent=27 // pred_fallthru
          _
        // Predicated region
        $region33: #{tpu_custom_call.1} parent=27 // pred_check
          %p235 = pneg %p64
        $region34: #{tpu_custom_call.1} parent=27 // pred_check_branch
          %237 = sbr.rel (%p235) target = $region36
        $region35: #{tpu_custom_call.1} parent=27 // pred_region
          %s238 = sand.u32 %s18, 1
          %s239 = scalar_lea.sflag [#allocation5], %s238
          %s240 = sand.u32 %s54, 1
          %s241 = smul.addr %s240, 96
          %s242 = scalar_lea.vmem [#allocation4], %s241
          %s243 = smul.u32 4, %s18
          %s245 = ssub.s32 1536, 1536
          %246 = vsyncadd %s239, %s245
          %s247 = smul.addr %s243, 6
          %s248 = smul.addr %s247, 64
          %s249 = scalar_lea.hbm %s1, %s248
          %s250 = sshll.u32 %s242, 4
          %s251 = int_to_ptr.vmem [resolvable:$true] %s250
          %256 = dma.hbm_to_vmem [thread:$0]  %s249, 1536, %s251, %s239, 384, 384, 24
        $region36: #{tpu_custom_call.1} parent=27 // pred_fallthru
          _
      $region28: #{tpu_custom_call.1} parent=5 // pred_fallthru
        _
      %p257 = scmp.le.s32.totalorder 1, %s18
      %p258 = scmp.lt.s32.totalorder %s18, 3
      %p259 = pnand %p257, %p258
      %p260 = pneg %p259
      // Predicated region
      $region37: #{tpu_custom_call.1} parent=5 // pred_check
        _
      $region38: #{tpu_custom_call.1} parent=5 // pred_check_branch
        %262 = sbr.rel (%p259) target = $region40
      $region39: #{tpu_custom_call.1} parent=5 // pred_region
        %s263 = ssub.s32 %s18, 1
        %s264 = sand.u32 %s31, 1
        %s265 = scalar_lea.sflag [#allocation3], %s264
        %s266 = sand.u32 %s31, 1
        %s267 = smul.addr %s266, 96
        %s268 = scalar_lea.vmem [#allocation2], %s267
        // Predicated region
        $region41: #{tpu_custom_call.1} parent=39 // pred_check
          %p269 = pneg %p44
        $region42: #{tpu_custom_call.1} parent=39 // pred_check_branch
          %271 = sbr.rel (%p269) target = $region44
        $region43: #{tpu_custom_call.1} parent=39 // pred_region
          %272 = dma.done %s265, 1536
        $region44: #{tpu_custom_call.1} parent=39 // pred_fallthru
          _
        %s273 = sand.u32 %s23, 1
        %s274 = scalar_lea.sflag [#allocation5], %s273
        %s275 = sand.u32 %s57, 1
        %s276 = smul.addr %s275, 96
        %s277 = scalar_lea.vmem [#allocation4], %s276
        // Predicated region
        $region45: #{tpu_custom_call.1} parent=39 // pred_check
          %p278 = pneg %p70
        $region46: #{tpu_custom_call.1} parent=39 // pred_check_branch
          %280 = sbr.rel (%p278) target = $region48
        $region47: #{tpu_custom_call.1} parent=39 // pred_region
          %281 = dma.done %s274, 1536
        $region48: #{tpu_custom_call.1} parent=39 // pred_fallthru
          _
        // Predicated region
        $region49: #{tpu_custom_call.1} parent=39 // pred_check
          %p282 = pneg %p91
        $region50: #{tpu_custom_call.1} parent=39 // pred_check_branch
          %284 = sbr.rel (%p282) target = $region52
        $region51: #{tpu_custom_call.1} parent=39 // pred_region
          %285 = dma.done [#allocation5], 36864
        $region52: #{tpu_custom_call.1} parent=39 // pred_fallthru
          _
        // Predicated region
        $region53: #{tpu_custom_call.1} parent=39 // pred_check
          %p286 = pneg %p112
        $region54: #{tpu_custom_call.1} parent=39 // pred_check_branch
          %288 = sbr.rel (%p286) target = $region56
        $region55: #{tpu_custom_call.1} parent=39 // pred_region
          %289 = dma.done [#allocation8], 576
        $region56: #{tpu_custom_call.1} parent=39 // pred_fallthru
          _
        // Predicated region
        $region57: #{tpu_custom_call.1} parent=39 // pred_check
          %p290 = pneg %p133
        $region58: #{tpu_custom_call.1} parent=39 // pred_check_branch
          %292 = sbr.rel (%p290) target = $region60
        $region59: #{tpu_custom_call.1} parent=39 // pred_region
          %293 = dma.done [#allocation8], 16
        $region60: #{tpu_custom_call.1} parent=39 // pred_fallthru
          _
        %s294 = sand.u32 %s31, 1
        %s295 = scalar_lea.sflag [#allocation3], %s294
        %s296 = sand.u32 %s31, 1
        %s297 = smul.addr %s296, 96
        %s298 = scalar_lea.vmem [#allocation2], %s297
        %p299 = pneg %p44
        %p300 = pneg %p41
        %s301 = sand.u32 %s23, 1
        %s302 = scalar_lea.sflag [#allocation5], %s301
        %s303 = sand.u32 %s57, 1
        %s304 = smul.addr %s303, 96
        %s305 = scalar_lea.vmem [#allocation4], %s304
        %p306 = pneg %p70
        %p307 = pneg %p67
        %p308 = pneg %p91
        %p309 = pneg %p88
        %p310 = pneg %p112
        %p311 = pneg %p109
        %p312 = pneg %p133
        %p313 = pneg %p130
        %p314 = pneg %p159
        %p315 = pneg %p156
        %s316 = smul.u32 4, %s23
        %p317 = scmp.lt.s32.totalorder %s316, 7
        %s318 = scalar_select %p317, %s316, 7
        %s319 = smul.addr %s318, 8
        %s320 = scalar_lea.vmem %s5, %s319
        %s321 = smul.u32 4, %s23
        %s322 = smul.u32 4, %s23
        %s323 = smul.u32 4, %s23
        %p324 = scmp.lt.s32.totalorder %s323, 7
        %s325 = scalar_select %p324, %s323, 7
        %s326 = smul.addr %s325, 8
        %s327 = scalar_lea.vmem %s5, %s326
        %s328 = smul.u32 4, %s23
        %v330 = vld [vmem:[%s268] sm:$0xff]
        %v331 = vld [vmem:[%s268 + $0x8] sm:$0xff]
        %v332 = vld [vmem:[%s268 + $0x10] sm:$0xff]
        %v333 = vld [vmem:[%s268 + $0x18] sm:$0xff]
        %v334 = vld [vmem:[%s268 + $0x20] sm:$0xff]
        %v335 = vld [vmem:[%s268 + $0x28] sm:$0xff]
        %v336 = vld [vmem:[%s268 + $0x30] sm:$0xff]
        %v337 = vld [vmem:[%s268 + $0x38] sm:$0xff]
        %v338 = vld [vmem:[%s268 + $0x40] sm:$0xff]
        %v339 = vld [vmem:[%s268 + $0x48] sm:$0xff]
        %v340 = vld [vmem:[%s268 + $0x50] sm:$0xff]
        %v341 = vld [vmem:[%s268 + $0x58] sm:$0xff]
        %v342 = vld [vmem:[%s277] sm:$0xff]
        %v343 = vld [vmem:[%s277 + $0x8] sm:$0xff]
        %v344 = vld [vmem:[%s277 + $0x10] sm:$0xff]
        %v345 = vld [vmem:[%s277 + $0x18] sm:$0xff]
        %v346 = vld [vmem:[%s277 + $0x20] sm:$0xff]
        %v347 = vld [vmem:[%s277 + $0x28] sm:$0xff]
        %v348 = vld [vmem:[%s277 + $0x30] sm:$0xff]
        %v349 = vld [vmem:[%s277 + $0x38] sm:$0xff]
        %v350 = vld [vmem:[%s277 + $0x40] sm:$0xff]
        %v351 = vld [vmem:[%s277 + $0x48] sm:$0xff]
        %v352 = vld [vmem:[%s277 + $0x50] sm:$0xff]
        %v353 = vld [vmem:[%s277 + $0x58] sm:$0xff]
        %v354 = vld [vmem:[#allocation6] sm:$0xff]
        %v355 = vld [vmem:[#allocation6 + $0x8] sm:$0xff]
        %v356 = vld [vmem:[#allocation6 + $0x10] sm:$0xff]
        %v357 = vld [vmem:[#allocation6 + $0x18] sm:$0xff]
        %v358 = vld [vmem:[#allocation6 + $0x20] sm:$0xff]
        %v359 = vld [vmem:[#allocation6 + $0x28] sm:$0xff]
        %v360 = vld [vmem:[#allocation6 + $0x30] sm:$0xff]
        %v361 = vld [vmem:[#allocation6 + $0x38] sm:$0xff]
        %v362 = vld [vmem:[#allocation6 + $0x40] sm:$0xff]
        %v363 = vld [vmem:[#allocation6 + $0x48] sm:$0xff]
        %v364 = vld [vmem:[#allocation6 + $0x50] sm:$0xff]
        %v365 = vld [vmem:[#allocation6 + $0x58] sm:$0xff]
        %v366 = vld [vmem:[#allocation6 + $0x60] sm:$0xff]
        %v367 = vld [vmem:[#allocation6 + $0x68] sm:$0xff]
        %v368 = vld [vmem:[#allocation6 + $0x70] sm:$0xff]
        %v369 = vld [vmem:[#allocation6 + $0x78] sm:$0xff]
        %v370 = vld [vmem:[#allocation6 + $0x80] sm:$0xff]
        %v371 = vld [vmem:[#allocation6 + $0x88] sm:$0xff]
        %v372 = vld [vmem:[#allocation6 + $0x90] sm:$0xff]
        %v373 = vld [vmem:[#allocation6 + $0x98] sm:$0xff]
        %v374 = vld [vmem:[#allocation6 + $0xa0] sm:$0xff]
        %v375 = vld [vmem:[#allocation6 + $0xa8] sm:$0xff]
        %v376 = vld [vmem:[#allocation6 + $0xb0] sm:$0xff]
        %v377 = vld [vmem:[#allocation6 + $0xb8] sm:$0xff]
        %v378 = vld [vmem:[#allocation6 + $0xc0] sm:$0xff]
        %v379 = vld [vmem:[#allocation6 + $0xc8] sm:$0xff]
        %v380 = vld [vmem:[#allocation6 + $0xd0] sm:$0xff]
        %v381 = vld [vmem:[#allocation6 + $0xd8] sm:$0xff]
        %v382 = vld [vmem:[#allocation6 + $0xe0] sm:$0xff]
        %v383 = vld [vmem:[#allocation6 + $0xe8] sm:$0xff]
        %v384 = vld [vmem:[#allocation6 + $0xf0] sm:$0xff]
        %v385 = vld [vmem:[#allocation6 + $0xf8] sm:$0xff]
        %v386 = vld [vmem:[#allocation6 + $0x100] sm:$0xff]
        %v387 = vld [vmem:[#allocation6 + $0x108] sm:$0xff]
        %v388 = vld [vmem:[#allocation6 + $0x110] sm:$0xff]
        %v389 = vld [vmem:[#allocation6 + $0x118] sm:$0xff]
        %v390 = vld [vmem:[#allocation6 + $0x120] sm:$0xff]
        %v391 = vld [vmem:[#allocation6 + $0x128] sm:$0xff]
        %v392 = vld [vmem:[#allocation6 + $0x130] sm:$0xff]
        %v393 = vld [vmem:[#allocation6 + $0x138] sm:$0xff]
        %v394 = vld [vmem:[#allocation6 + $0x140] sm:$0xff]
        %v395 = vld [vmem:[#allocation6 + $0x148] sm:$0xff]
        %v396 = vld [vmem:[#allocation6 + $0x150] sm:$0xff]
        %v397 = vld [vmem:[#allocation6 + $0x158] sm:$0xff]
        %v398 = vld [vmem:[#allocation6 + $0x160] sm:$0xff]
        %v399 = vld [vmem:[#allocation6 + $0x168] sm:$0xff]
        %v400 = vld [vmem:[#allocation6 + $0x170] sm:$0xff]
        %v401 = vld [vmem:[#allocation6 + $0x178] sm:$0xff]
        %v402 = vld [vmem:[#allocation6 + $0x180] sm:$0xff]
        %v403 = vld [vmem:[#allocation6 + $0x188] sm:$0xff]
        %v404 = vld [vmem:[#allocation6 + $0x190] sm:$0xff]
        %v405 = vld [vmem:[#allocation6 + $0x198] sm:$0xff]
        %v406 = vld [vmem:[#allocation6 + $0x1a0] sm:$0xff]
        %v407 = vld [vmem:[#allocation6 + $0x1a8] sm:$0xff]
        %v408 = vld [vmem:[#allocation6 + $0x1b0] sm:$0xff]
        %v409 = vld [vmem:[#allocation6 + $0x1b8] sm:$0xff]
        %v410 = vld [vmem:[#allocation6 + $0x1c0] sm:$0xff]
        %v411 = vld [vmem:[#allocation6 + $0x1c8] sm:$0xff]
        %v412 = vld [vmem:[#allocation6 + $0x1d0] sm:$0xff]
        %v413 = vld [vmem:[#allocation6 + $0x1d8] sm:$0xff]
        %v414 = vld [vmem:[#allocation6 + $0x1e0] sm:$0xff]
        %v415 = vld [vmem:[#allocation6 + $0x1e8] sm:$0xff]
        %v416 = vld [vmem:[#allocation6 + $0x1f0] sm:$0xff]
        %v417 = vld [vmem:[#allocation6 + $0x1f8] sm:$0xff]
        %v418 = vld [vmem:[#allocation6 + $0x200] sm:$0xff]
        %v419 = vld [vmem:[#allocation6 + $0x208] sm:$0xff]
        %v420 = vld [vmem:[#allocation6 + $0x210] sm:$0xff]
        %v421 = vld [vmem:[#allocation6 + $0x218] sm:$0xff]
        %v422 = vld [vmem:[#allocation6 + $0x220] sm:$0xff]
        %v423 = vld [vmem:[#allocation6 + $0x228] sm:$0xff]
        %v424 = vld [vmem:[#allocation6 + $0x230] sm:$0xff]
        %v425 = vld [vmem:[#allocation6 + $0x238] sm:$0xff]
        %v426 = vld [vmem:[#allocation6 + $0x240] sm:$0xff]
        %v427 = vld [vmem:[#allocation6 + $0x248] sm:$0xff]
        %v428 = vld [vmem:[#allocation6 + $0x250] sm:$0xff]
        %v429 = vld [vmem:[#allocation6 + $0x258] sm:$0xff]
        %v430 = vld [vmem:[#allocation6 + $0x260] sm:$0xff]
        %v431 = vld [vmem:[#allocation6 + $0x268] sm:$0xff]
        %v432 = vld [vmem:[#allocation6 + $0x270] sm:$0xff]
        %v433 = vld [vmem:[#allocation6 + $0x278] sm:$0xff]
        %v434 = vld [vmem:[#allocation6 + $0x280] sm:$0xff]
        %v435 = vld [vmem:[#allocation6 + $0x288] sm:$0xff]
        %v436 = vld [vmem:[#allocation6 + $0x290] sm:$0xff]
        %v437 = vld [vmem:[#allocation6 + $0x298] sm:$0xff]
        %v438 = vld [vmem:[#allocation6 + $0x2a0] sm:$0xff]
        %v439 = vld [vmem:[#allocation6 + $0x2a8] sm:$0xff]
        %v440 = vld [vmem:[#allocation6 + $0x2b0] sm:$0xff]
        %v441 = vld [vmem:[#allocation6 + $0x2b8] sm:$0xff]
        %v442 = vld [vmem:[#allocation6 + $0x2c0] sm:$0xff]
        %v443 = vld [vmem:[#allocation6 + $0x2c8] sm:$0xff]
        %v444 = vld [vmem:[#allocation6 + $0x2d0] sm:$0xff]
        %v445 = vld [vmem:[#allocation6 + $0x2d8] sm:$0xff]
        %v446 = vld [vmem:[#allocation6 + $0x2e0] sm:$0xff]
        %v447 = vld [vmem:[#allocation6 + $0x2e8] sm:$0xff]
        %v448 = vld [vmem:[#allocation6 + $0x2f0] sm:$0xff]
        %v449 = vld [vmem:[#allocation6 + $0x2f8] sm:$0xff]
        %v450 = vld [vmem:[#allocation6 + $0x300] sm:$0xff]
        %v451 = vld [vmem:[#allocation6 + $0x308] sm:$0xff]
        %v452 = vld [vmem:[#allocation6 + $0x310] sm:$0xff]
        %v453 = vld [vmem:[#allocation6 + $0x318] sm:$0xff]
        %v454 = vld [vmem:[#allocation6 + $0x320] sm:$0xff]
        %v455 = vld [vmem:[#allocation6 + $0x328] sm:$0xff]
        %v456 = vld [vmem:[#allocation6 + $0x330] sm:$0xff]
        %v457 = vld [vmem:[#allocation6 + $0x338] sm:$0xff]
        %v458 = vld [vmem:[#allocation6 + $0x340] sm:$0xff]
        %v459 = vld [vmem:[#allocation6 + $0x348] sm:$0xff]
        %v460 = vld [vmem:[#allocation6 + $0x350] sm:$0xff]
        %v461 = vld [vmem:[#allocation6 + $0x358] sm:$0xff]
        %v462 = vld [vmem:[#allocation6 + $0x360] sm:$0xff]
        %v463 = vld [vmem:[#allocation6 + $0x368] sm:$0xff]
        %v464 = vld [vmem:[#allocation6 + $0x370] sm:$0xff]
        %v465 = vld [vmem:[#allocation6 + $0x378] sm:$0xff]
        %v466 = vld [vmem:[#allocation6 + $0x380] sm:$0xff]
        %v467 = vld [vmem:[#allocation6 + $0x388] sm:$0xff]
        %v468 = vld [vmem:[#allocation6 + $0x390] sm:$0xff]
        %v469 = vld [vmem:[#allocation6 + $0x398] sm:$0xff]
        %v470 = vld [vmem:[#allocation6 + $0x3a0] sm:$0xff]
        %v471 = vld [vmem:[#allocation6 + $0x3a8] sm:$0xff]
        %v472 = vld [vmem:[#allocation6 + $0x3b0] sm:$0xff]
        %v473 = vld [vmem:[#allocation6 + $0x3b8] sm:$0xff]
        %v474 = vld [vmem:[#allocation6 + $0x3c0] sm:$0xff]
        %v475 = vld [vmem:[#allocation6 + $0x3c8] sm:$0xff]
        %v476 = vld [vmem:[#allocation6 + $0x3d0] sm:$0xff]
        %v477 = vld [vmem:[#allocation6 + $0x3d8] sm:$0xff]
        %v478 = vld [vmem:[#allocation6 + $0x3e0] sm:$0xff]
        %v479 = vld [vmem:[#allocation6 + $0x3e8] sm:$0xff]
        %v480 = vld [vmem:[#allocation6 + $0x3f0] sm:$0xff]
        %v481 = vld [vmem:[#allocation6 + $0x3f8] sm:$0xff]
        %v482 = vld [vmem:[#allocation6 + $0x400] sm:$0xff]
        %v483 = vld [vmem:[#allocation6 + $0x408] sm:$0xff]
        %v484 = vld [vmem:[#allocation6 + $0x410] sm:$0xff]
        %v485 = vld [vmem:[#allocation6 + $0x418] sm:$0xff]
        %v486 = vld [vmem:[#allocation6 + $0x420] sm:$0xff]
        %v487 = vld [vmem:[#allocation6 + $0x428] sm:$0xff]
        %v488 = vld [vmem:[#allocation6 + $0x430] sm:$0xff]
        %v489 = vld [vmem:[#allocation6 + $0x438] sm:$0xff]
        %v490 = vld [vmem:[#allocation6 + $0x440] sm:$0xff]
        %v491 = vld [vmem:[#allocation6 + $0x448] sm:$0xff]
        %v492 = vld [vmem:[#allocation6 + $0x450] sm:$0xff]
        %v493 = vld [vmem:[#allocation6 + $0x458] sm:$0xff]
        %v494 = vld [vmem:[#allocation6 + $0x460] sm:$0xff]
        %v495 = vld [vmem:[#allocation6 + $0x468] sm:$0xff]
        %v496 = vld [vmem:[#allocation6 + $0x470] sm:$0xff]
        %v497 = vld [vmem:[#allocation6 + $0x478] sm:$0xff]
        %v498 = vld [vmem:[#allocation6 + $0x480] sm:$0xff]
        %v499 = vld [vmem:[#allocation6 + $0x488] sm:$0xff]
        %v500 = vld [vmem:[#allocation6 + $0x490] sm:$0xff]
        %v501 = vld [vmem:[#allocation6 + $0x498] sm:$0xff]
        %v502 = vld [vmem:[#allocation6 + $0x4a0] sm:$0xff]
        %v503 = vld [vmem:[#allocation6 + $0x4a8] sm:$0xff]
        %v504 = vld [vmem:[#allocation6 + $0x4b0] sm:$0xff]
        %v505 = vld [vmem:[#allocation6 + $0x4b8] sm:$0xff]
        %v506 = vld [vmem:[#allocation6 + $0x4c0] sm:$0xff]
        %v507 = vld [vmem:[#allocation6 + $0x4c8] sm:$0xff]
        %v508 = vld [vmem:[#allocation6 + $0x4d0] sm:$0xff]
        %v509 = vld [vmem:[#allocation6 + $0x4d8] sm:$0xff]
        %v510 = vld [vmem:[#allocation6 + $0x4e0] sm:$0xff]
        %v511 = vld [vmem:[#allocation6 + $0x4e8] sm:$0xff]
        %v512 = vld [vmem:[#allocation6 + $0x4f0] sm:$0xff]
        %v513 = vld [vmem:[#allocation6 + $0x4f8] sm:$0xff]
        %v514 = vld [vmem:[#allocation6 + $0x500] sm:$0xff]
        %v515 = vld [vmem:[#allocation6 + $0x508] sm:$0xff]
        %v516 = vld [vmem:[#allocation6 + $0x510] sm:$0xff]
        %v517 = vld [vmem:[#allocation6 + $0x518] sm:$0xff]
        %v518 = vld [vmem:[#allocation6 + $0x520] sm:$0xff]
        %v519 = vld [vmem:[#allocation6 + $0x528] sm:$0xff]
        %v520 = vld [vmem:[#allocation6 + $0x530] sm:$0xff]
        %v521 = vld [vmem:[#allocation6 + $0x538] sm:$0xff]
        %v522 = vld [vmem:[#allocation6 + $0x540] sm:$0xff]
        %v523 = vld [vmem:[#allocation6 + $0x548] sm:$0xff]
        %v524 = vld [vmem:[#allocation6 + $0x550] sm:$0xff]
        %v525 = vld [vmem:[#allocation6 + $0x558] sm:$0xff]
        %v526 = vld [vmem:[#allocation6 + $0x560] sm:$0xff]
        %v527 = vld [vmem:[#allocation6 + $0x568] sm:$0xff]
        %v528 = vld [vmem:[#allocation6 + $0x570] sm:$0xff]
        %v529 = vld [vmem:[#allocation6 + $0x578] sm:$0xff]
        %v530 = vld [vmem:[#allocation6 + $0x580] sm:$0xff]
        %v531 = vld [vmem:[#allocation6 + $0x588] sm:$0xff]
        %v532 = vld [vmem:[#allocation6 + $0x590] sm:$0xff]
        %v533 = vld [vmem:[#allocation6 + $0x598] sm:$0xff]
        %v534 = vld [vmem:[#allocation6 + $0x5a0] sm:$0xff]
        %v535 = vld [vmem:[#allocation6 + $0x5a8] sm:$0xff]
        %v536 = vld [vmem:[#allocation6 + $0x5b0] sm:$0xff]
        %v537 = vld [vmem:[#allocation6 + $0x5b8] sm:$0xff]
        %v538 = vld [vmem:[#allocation6 + $0x5c0] sm:$0xff]
        %v539 = vld [vmem:[#allocation6 + $0x5c8] sm:$0xff]
        %v540 = vld [vmem:[#allocation6 + $0x5d0] sm:$0xff]
        %v541 = vld [vmem:[#allocation6 + $0x5d8] sm:$0xff]
        %v542 = vld [vmem:[#allocation6 + $0x5e0] sm:$0xff]
        %v543 = vld [vmem:[#allocation6 + $0x5e8] sm:$0xff]
        %v544 = vld [vmem:[#allocation6 + $0x5f0] sm:$0xff]
        %v545 = vld [vmem:[#allocation6 + $0x5f8] sm:$0xff]
        %v546 = vld [vmem:[#allocation6 + $0x600] sm:$0xff]
        %v547 = vld [vmem:[#allocation6 + $0x608] sm:$0xff]
        %v548 = vld [vmem:[#allocation6 + $0x610] sm:$0xff]
        %v549 = vld [vmem:[#allocation6 + $0x618] sm:$0xff]
        %v550 = vld [vmem:[#allocation6 + $0x620] sm:$0xff]
        %v551 = vld [vmem:[#allocation6 + $0x628] sm:$0xff]
        %v552 = vld [vmem:[#allocation6 + $0x630] sm:$0xff]
        %v553 = vld [vmem:[#allocation6 + $0x638] sm:$0xff]
        %v554 = vld [vmem:[#allocation6 + $0x640] sm:$0xff]
        %v555 = vld [vmem:[#allocation6 + $0x648] sm:$0xff]
        %v556 = vld [vmem:[#allocation6 + $0x650] sm:$0xff]
        %v557 = vld [vmem:[#allocation6 + $0x658] sm:$0xff]
        %v558 = vld [vmem:[#allocation6 + $0x660] sm:$0xff]
        %v559 = vld [vmem:[#allocation6 + $0x668] sm:$0xff]
        %v560 = vld [vmem:[#allocation6 + $0x670] sm:$0xff]
        %v561 = vld [vmem:[#allocation6 + $0x678] sm:$0xff]
        %v562 = vld [vmem:[#allocation6 + $0x680] sm:$0xff]
        %v563 = vld [vmem:[#allocation6 + $0x688] sm:$0xff]
        %v564 = vld [vmem:[#allocation6 + $0x690] sm:$0xff]
        %v565 = vld [vmem:[#allocation6 + $0x698] sm:$0xff]
        %v566 = vld [vmem:[#allocation6 + $0x6a0] sm:$0xff]
        %v567 = vld [vmem:[#allocation6 + $0x6a8] sm:$0xff]
        %v568 = vld [vmem:[#allocation6 + $0x6b0] sm:$0xff]
        %v569 = vld [vmem:[#allocation6 + $0x6b8] sm:$0xff]
        %v570 = vld [vmem:[#allocation6 + $0x6c0] sm:$0xff]
        %v571 = vld [vmem:[#allocation6 + $0x6c8] sm:$0xff]
        %v572 = vld [vmem:[#allocation6 + $0x6d0] sm:$0xff]
        %v573 = vld [vmem:[#allocation6 + $0x6d8] sm:$0xff]
        %v574 = vld [vmem:[#allocation6 + $0x6e0] sm:$0xff]
        %v575 = vld [vmem:[#allocation6 + $0x6e8] sm:$0xff]
        %v576 = vld [vmem:[#allocation6 + $0x6f0] sm:$0xff]
        %v577 = vld [vmem:[#allocation6 + $0x6f8] sm:$0xff]
        %v578 = vld [vmem:[#allocation6 + $0x700] sm:$0xff]
        %v579 = vld [vmem:[#allocation6 + $0x708] sm:$0xff]
        %v580 = vld [vmem:[#allocation6 + $0x710] sm:$0xff]
        %v581 = vld [vmem:[#allocation6 + $0x718] sm:$0xff]
        %v582 = vld [vmem:[#allocation6 + $0x720] sm:$0xff]
        %v583 = vld [vmem:[#allocation6 + $0x728] sm:$0xff]
        %v584 = vld [vmem:[#allocation6 + $0x730] sm:$0xff]
        %v585 = vld [vmem:[#allocation6 + $0x738] sm:$0xff]
        %v586 = vld [vmem:[#allocation6 + $0x740] sm:$0xff]
        %v587 = vld [vmem:[#allocation6 + $0x748] sm:$0xff]
        %v588 = vld [vmem:[#allocation6 + $0x750] sm:$0xff]
        %v589 = vld [vmem:[#allocation6 + $0x758] sm:$0xff]
        %v590 = vld [vmem:[#allocation6 + $0x760] sm:$0xff]
        %v591 = vld [vmem:[#allocation6 + $0x768] sm:$0xff]
        %v592 = vld [vmem:[#allocation6 + $0x770] sm:$0xff]
        %v593 = vld [vmem:[#allocation6 + $0x778] sm:$0xff]
        %v594 = vld [vmem:[#allocation6 + $0x780] sm:$0xff]
        %v595 = vld [vmem:[#allocation6 + $0x788] sm:$0xff]
        %v596 = vld [vmem:[#allocation6 + $0x790] sm:$0xff]
        %v597 = vld [vmem:[#allocation6 + $0x798] sm:$0xff]
        %v598 = vld [vmem:[#allocation6 + $0x7a0] sm:$0xff]
        %v599 = vld [vmem:[#allocation6 + $0x7a8] sm:$0xff]
        %v600 = vld [vmem:[#allocation6 + $0x7b0] sm:$0xff]
        %v601 = vld [vmem:[#allocation6 + $0x7b8] sm:$0xff]
        %v602 = vld [vmem:[#allocation6 + $0x7c0] sm:$0xff]
        %v603 = vld [vmem:[#allocation6 + $0x7c8] sm:$0xff]
        %v604 = vld [vmem:[#allocation6 + $0x7d0] sm:$0xff]
        %v605 = vld [vmem:[#allocation6 + $0x7d8] sm:$0xff]
        %v606 = vld [vmem:[#allocation6 + $0x7e0] sm:$0xff]
        %v607 = vld [vmem:[#allocation6 + $0x7e8] sm:$0xff]
        %v608 = vld [vmem:[#allocation6 + $0x7f0] sm:$0xff]
        %v609 = vld [vmem:[#allocation6 + $0x7f8] sm:$0xff]
        %v610 = vld [vmem:[#allocation6 + $0x800] sm:$0xff]
        %v611 = vld [vmem:[#allocation6 + $0x808] sm:$0xff]
        %v612 = vld [vmem:[#allocation6 + $0x810] sm:$0xff]
        %v613 = vld [vmem:[#allocation6 + $0x818] sm:$0xff]
        %v614 = vld [vmem:[#allocation6 + $0x820] sm:$0xff]
        %v615 = vld [vmem:[#allocation6 + $0x828] sm:$0xff]
        %v616 = vld [vmem:[#allocation6 + $0x830] sm:$0xff]
        %v617 = vld [vmem:[#allocation6 + $0x838] sm:$0xff]
        %v618 = vld [vmem:[#allocation6 + $0x840] sm:$0xff]
        %v619 = vld [vmem:[#allocation6 + $0x848] sm:$0xff]
        %v620 = vld [vmem:[#allocation6 + $0x850] sm:$0xff]
        %v621 = vld [vmem:[#allocation6 + $0x858] sm:$0xff]
        %v622 = vld [vmem:[#allocation6 + $0x860] sm:$0xff]
        %v623 = vld [vmem:[#allocation6 + $0x868] sm:$0xff]
        %v624 = vld [vmem:[#allocation6 + $0x870] sm:$0xff]
        %v625 = vld [vmem:[#allocation6 + $0x878] sm:$0xff]
        %v626 = vld [vmem:[#allocation6 + $0x880] sm:$0xff]
        %v627 = vld [vmem:[#allocation6 + $0x888] sm:$0xff]
        %v628 = vld [vmem:[#allocation6 + $0x890] sm:$0xff]
        %v629 = vld [vmem:[#allocation6 + $0x898] sm:$0xff]
        %v630 = vld [vmem:[#allocation6 + $0x8a0] sm:$0xff]
        %v631 = vld [vmem:[#allocation6 + $0x8a8] sm:$0xff]
        %v632 = vld [vmem:[#allocation6 + $0x8b0] sm:$0xff]
        %v633 = vld [vmem:[#allocation6 + $0x8b8] sm:$0xff]
        %v634 = vld [vmem:[#allocation6 + $0x8c0] sm:$0xff]
        %v635 = vld [vmem:[#allocation6 + $0x8c8] sm:$0xff]
        %v636 = vld [vmem:[#allocation6 + $0x8d0] sm:$0xff]
        %v637 = vld [vmem:[#allocation6 + $0x8d8] sm:$0xff]
        %v638 = vld [vmem:[#allocation6 + $0x8e0] sm:$0xff]
        %v639 = vld [vmem:[#allocation6 + $0x8e8] sm:$0xff]
        %v640 = vld [vmem:[#allocation6 + $0x8f0] sm:$0xff]
        %v641 = vld [vmem:[#allocation6 + $0x8f8] sm:$0xff]
        %v642 = vunpack.c.l.bf16 %v330
        %v643 = vunpack.c.h.bf16 %v330
        %v644 = vunpack.c.l.bf16 %v331
        %v645 = vunpack.c.h.bf16 %v331
        %v646 = vunpack.c.l.bf16 %v332
        %v647 = vunpack.c.h.bf16 %v332
        %v648 = vunpack.c.l.bf16 %v333
        %v649 = vunpack.c.h.bf16 %v333
        %v650 = vunpack.c.l.bf16 %v334
        %v651 = vunpack.c.h.bf16 %v334
        %v652 = vunpack.c.l.bf16 %v335
        %v653 = vunpack.c.h.bf16 %v335
        %v654 = vunpack.c.l.bf16 %v336
        %v655 = vunpack.c.h.bf16 %v336
        %v656 = vunpack.c.l.bf16 %v337
        %v657 = vunpack.c.h.bf16 %v337
        %v658 = vunpack.c.l.bf16 %v338
        %v659 = vunpack.c.h.bf16 %v338
        %v660 = vunpack.c.l.bf16 %v339
        %v661 = vunpack.c.h.bf16 %v339
        %v662 = vunpack.c.l.bf16 %v340
        %v663 = vunpack.c.h.bf16 %v340
        %v664 = vunpack.c.l.bf16 %v341
        %v665 = vunpack.c.h.bf16 %v341
        %v666 = vpack.c.bf16 %v648, %v642
        %v667 = vpack.c.bf16 %v649, %v643
        %v668 = vpack.c.bf16 %v650, %v644
        %v669 = vpack.c.bf16 %v651, %v645
        %v670 = vpack.c.bf16 %v652, %v646
        %v671 = vpack.c.bf16 %v653, %v647
        %v672 = vpack.c.bf16 %v660, %v654
        %v673 = vpack.c.bf16 %v661, %v655
        %v674 = vpack.c.bf16 %v662, %v656
        %v675 = vpack.c.bf16 %v663, %v657
        %v676 = vpack.c.bf16 %v664, %v658
        %v677 = vpack.c.bf16 %v665, %v659
        %v966 = vunpack.c.l.b16 %v354
        %v967 = vunpack.c.h.b16 %v354
        %v968 = vunpack.c.l.b16 %v355
        %v969 = vunpack.c.h.b16 %v355
        %v970 = vunpack.c.l.b16 %v356
        %v971 = vunpack.c.h.b16 %v356
        %v972 = vunpack.c.l.b16 %v357
        %v973 = vunpack.c.h.b16 %v357
        %v974 = vunpack.c.l.b16 %v358
        %v975 = vunpack.c.h.b16 %v358
        %v976 = vunpack.c.l.b16 %v359
        %v977 = vunpack.c.h.b16 %v359
        %v978 = vunpack.c.l.b16 %v360
        %v979 = vunpack.c.h.b16 %v360
        %v980 = vunpack.c.l.b16 %v361
        %v981 = vunpack.c.h.b16 %v361
        %v982 = vunpack.c.l.b16 %v362
        %v983 = vunpack.c.h.b16 %v362
        %v984 = vunpack.c.l.b16 %v363
        %v985 = vunpack.c.h.b16 %v363
        %v986 = vunpack.c.l.b16 %v364
        %v987 = vunpack.c.h.b16 %v364
        %v988 = vunpack.c.l.b16 %v365
        %v989 = vunpack.c.h.b16 %v365
        %v990 = vunpack.c.l.b16 %v366
        %v991 = vunpack.c.h.b16 %v366
        %v992 = vunpack.c.l.b16 %v367
        %v993 = vunpack.c.h.b16 %v367
        %v994 = vunpack.c.l.b16 %v368
        %v995 = vunpack.c.h.b16 %v368
        %v996 = vunpack.c.l.b16 %v369
        %v997 = vunpack.c.h.b16 %v369
        %v998 = vunpack.c.l.b16 %v370
        %v999 = vunpack.c.h.b16 %v370
        %v1000 = vunpack.c.l.b16 %v371
        %v1001 = vunpack.c.h.b16 %v371
        %v1002 = vunpack.c.l.b16 %v372
        %v1003 = vunpack.c.h.b16 %v372
        %v1004 = vunpack.c.l.b16 %v373
        %v1005 = vunpack.c.h.b16 %v373
        %v1006 = vunpack.c.l.b16 %v374
        %v1007 = vunpack.c.h.b16 %v374
        %v1008 = vunpack.c.l.b16 %v375
        %v1009 = vunpack.c.h.b16 %v375
        %v1010 = vunpack.c.l.b16 %v376
        %v1011 = vunpack.c.h.b16 %v376
        %v1012 = vunpack.c.l.b16 %v377
        %v1013 = vunpack.c.h.b16 %v377
        %v1014 = vunpack.c.l.b16 %v378
        %v1015 = vunpack.c.h.b16 %v378
        %v1016 = vunpack.c.l.b16 %v379
        %v1017 = vunpack.c.h.b16 %v379
        %v1018 = vunpack.c.l.b16 %v380
        %v1019 = vunpack.c.h.b16 %v380
        %v1020 = vunpack.c.l.b16 %v381
        %v1021 = vunpack.c.h.b16 %v381
        %v1022 = vunpack.c.l.b16 %v382
        %v1023 = vunpack.c.h.b16 %v382
        %v1024 = vunpack.c.l.b16 %v383
        %v1025 = vunpack.c.h.b16 %v383
        %v1026 = vunpack.c.l.b16 %v384
        %v1027 = vunpack.c.h.b16 %v384
        %v1028 = vunpack.c.l.b16 %v385
        %v1029 = vunpack.c.h.b16 %v385
        %v1030 = vunpack.c.l.b16 %v386
        %v1031 = vunpack.c.h.b16 %v386
        %v1032 = vunpack.c.l.b16 %v387
        %v1033 = vunpack.c.h.b16 %v387
        %v1034 = vunpack.c.l.b16 %v388
        %v1035 = vunpack.c.h.b16 %v388
        %v1036 = vunpack.c.l.b16 %v389
        %v1037 = vunpack.c.h.b16 %v389
        %v1038 = vunpack.c.l.b16 %v390
        %v1039 = vunpack.c.h.b16 %v390
        %v1040 = vunpack.c.l.b16 %v391
        %v1041 = vunpack.c.h.b16 %v391
        %v1042 = vunpack.c.l.b16 %v392
        %v1043 = vunpack.c.h.b16 %v392
        %v1044 = vunpack.c.l.b16 %v393
        %v1045 = vunpack.c.h.b16 %v393
        %v1046 = vunpack.c.l.b16 %v394
        %v1047 = vunpack.c.h.b16 %v394
        %v1048 = vunpack.c.l.b16 %v395
        %v1049 = vunpack.c.h.b16 %v395
        %v1050 = vunpack.c.l.b16 %v396
        %v1051 = vunpack.c.h.b16 %v396
        %v1052 = vunpack.c.l.b16 %v397
        %v1053 = vunpack.c.h.b16 %v397
        %v1054 = vunpack.c.l.b16 %v398
        %v1055 = vunpack.c.h.b16 %v398
        %v1056 = vunpack.c.l.b16 %v399
        %v1057 = vunpack.c.h.b16 %v399
        %v1058 = vunpack.c.l.b16 %v400
        %v1059 = vunpack.c.h.b16 %v400
        %v1060 = vunpack.c.l.b16 %v401
        %v1061 = vunpack.c.h.b16 %v401
        %v1062 = vunpack.c.l.b16 %v402
        %v1063 = vunpack.c.h.b16 %v402
        %v1064 = vunpack.c.l.b16 %v403
        %v1065 = vunpack.c.h.b16 %v403
        %v1066 = vunpack.c.l.b16 %v404
        %v1067 = vunpack.c.h.b16 %v404
        %v1068 = vunpack.c.l.b16 %v405
        %v1069 = vunpack.c.h.b16 %v405
        %v1070 = vunpack.c.l.b16 %v406
        %v1071 = vunpack.c.h.b16 %v406
        %v1072 = vunpack.c.l.b16 %v407
        %v1073 = vunpack.c.h.b16 %v407
        %v1074 = vunpack.c.l.b16 %v408
        %v1075 = vunpack.c.h.b16 %v408
        %v1076 = vunpack.c.l.b16 %v409
        %v1077 = vunpack.c.h.b16 %v409
        %v1078 = vunpack.c.l.b16 %v410
        %v1079 = vunpack.c.h.b16 %v410
        %v1080 = vunpack.c.l.b16 %v411
        %v1081 = vunpack.c.h.b16 %v411
        %v1082 = vunpack.c.l.b16 %v412
        %v1083 = vunpack.c.h.b16 %v412
        %v1084 = vunpack.c.l.b16 %v413
        %v1085 = vunpack.c.h.b16 %v413
        %v1086 = vunpack.c.l.b16 %v414
        %v1087 = vunpack.c.h.b16 %v414
        %v1088 = vunpack.c.l.b16 %v415
        %v1089 = vunpack.c.h.b16 %v415
        %v1090 = vunpack.c.l.b16 %v416
        %v1091 = vunpack.c.h.b16 %v416
        %v1092 = vunpack.c.l.b16 %v417
        %v1093 = vunpack.c.h.b16 %v417
        %v1094 = vunpack.c.l.b16 %v418
        %v1095 = vunpack.c.h.b16 %v418
        %v1096 = vunpack.c.l.b16 %v419
        %v1097 = vunpack.c.h.b16 %v419
        %v1098 = vunpack.c.l.b16 %v420
        %v1099 = vunpack.c.h.b16 %v420
        %v1100 = vunpack.c.l.b16 %v421
        %v1101 = vunpack.c.h.b16 %v421
        %v1102 = vunpack.c.l.b16 %v422
        %v1103 = vunpack.c.h.b16 %v422
        %v1104 = vunpack.c.l.b16 %v423
        %v1105 = vunpack.c.h.b16 %v423
        %v1106 = vunpack.c.l.b16 %v424
        %v1107 = vunpack.c.h.b16 %v424
        %v1108 = vunpack.c.l.b16 %v425
        %v1109 = vunpack.c.h.b16 %v425
        %v1110 = vunpack.c.l.b16 %v426
        %v1111 = vunpack.c.h.b16 %v426
        %v1112 = vunpack.c.l.b16 %v427
        %v1113 = vunpack.c.h.b16 %v427
        %v1114 = vunpack.c.l.b16 %v428
        %v1115 = vunpack.c.h.b16 %v428
        %v1116 = vunpack.c.l.b16 %v429
        %v1117 = vunpack.c.h.b16 %v429
        %v1118 = vunpack.c.l.b16 %v430
        %v1119 = vunpack.c.h.b16 %v430
        %v1120 = vunpack.c.l.b16 %v431
        %v1121 = vunpack.c.h.b16 %v431
        %v1122 = vunpack.c.l.b16 %v432
        %v1123 = vunpack.c.h.b16 %v432
        %v1124 = vunpack.c.l.b16 %v433
        %v1125 = vunpack.c.h.b16 %v433
        %v1126 = vunpack.c.l.b16 %v434
        %v1127 = vunpack.c.h.b16 %v434
        %v1128 = vunpack.c.l.b16 %v435
        %v1129 = vunpack.c.h.b16 %v435
        %v1130 = vunpack.c.l.b16 %v436
        %v1131 = vunpack.c.h.b16 %v436
        %v1132 = vunpack.c.l.b16 %v437
        %v1133 = vunpack.c.h.b16 %v437
        %v1134 = vunpack.c.l.b16 %v438
        %v1135 = vunpack.c.h.b16 %v438
        %v1136 = vunpack.c.l.b16 %v439
        %v1137 = vunpack.c.h.b16 %v439
        %v1138 = vunpack.c.l.b16 %v440
        %v1139 = vunpack.c.h.b16 %v440
        %v1140 = vunpack.c.l.b16 %v441
        %v1141 = vunpack.c.h.b16 %v441
        %v1142 = vunpack.c.l.b16 %v442
        %v1143 = vunpack.c.h.b16 %v442
        %v1144 = vunpack.c.l.b16 %v443
        %v1145 = vunpack.c.h.b16 %v443
        %v1146 = vunpack.c.l.b16 %v444
        %v1147 = vunpack.c.h.b16 %v444
        %v1148 = vunpack.c.l.b16 %v445
        %v1149 = vunpack.c.h.b16 %v445
        %v1150 = vunpack.c.l.b16 %v446
        %v1151 = vunpack.c.h.b16 %v446
        %v1152 = vunpack.c.l.b16 %v447
        %v1153 = vunpack.c.h.b16 %v447
        %v1154 = vunpack.c.l.b16 %v448
        %v1155 = vunpack.c.h.b16 %v448
        %v1156 = vunpack.c.l.b16 %v449
        %v1157 = vunpack.c.h.b16 %v449
        %v1158 = vunpack.c.l.b16 %v450
        %v1159 = vunpack.c.h.b16 %v450
        %v1160 = vunpack.c.l.b16 %v451
        %v1161 = vunpack.c.h.b16 %v451
        %v1162 = vunpack.c.l.b16 %v452
        %v1163 = vunpack.c.h.b16 %v452
        %v1164 = vunpack.c.l.b16 %v453
        %v1165 = vunpack.c.h.b16 %v453
        %v1166 = vunpack.c.l.b16 %v454
        %v1167 = vunpack.c.h.b16 %v454
        %v1168 = vunpack.c.l.b16 %v455
        %v1169 = vunpack.c.h.b16 %v455
        %v1170 = vunpack.c.l.b16 %v456
        %v1171 = vunpack.c.h.b16 %v456
        %v1172 = vunpack.c.l.b16 %v457
        %v1173 = vunpack.c.h.b16 %v457
        %v1174 = vunpack.c.l.b16 %v458
        %v1175 = vunpack.c.h.b16 %v458
        %v1176 = vunpack.c.l.b16 %v459
        %v1177 = vunpack.c.h.b16 %v459
        %v1178 = vunpack.c.l.b16 %v460
        %v1179 = vunpack.c.h.b16 %v460
        %v1180 = vunpack.c.l.b16 %v461
        %v1181 = vunpack.c.h.b16 %v461
        %v1182 = vunpack.c.l.b16 %v462
        %v1183 = vunpack.c.h.b16 %v462
        %v1184 = vunpack.c.l.b16 %v463
        %v1185 = vunpack.c.h.b16 %v463
        %v1186 = vunpack.c.l.b16 %v464
        %v1187 = vunpack.c.h.b16 %v464
        %v1188 = vunpack.c.l.b16 %v465
        %v1189 = vunpack.c.h.b16 %v465
        %v1190 = vunpack.c.l.b16 %v466
        %v1191 = vunpack.c.h.b16 %v466
        %v1192 = vunpack.c.l.b16 %v467
        %v1193 = vunpack.c.h.b16 %v467
        %v1194 = vunpack.c.l.b16 %v468
        %v1195 = vunpack.c.h.b16 %v468
        %v1196 = vunpack.c.l.b16 %v469
        %v1197 = vunpack.c.h.b16 %v469
        %v1198 = vunpack.c.l.b16 %v470
        %v1199 = vunpack.c.h.b16 %v470
        %v1200 = vunpack.c.l.b16 %v471
        %v1201 = vunpack.c.h.b16 %v471
        %v1202 = vunpack.c.l.b16 %v472
        %v1203 = vunpack.c.h.b16 %v472
        %v1204 = vunpack.c.l.b16 %v473
        %v1205 = vunpack.c.h.b16 %v473
        %v1206 = vunpack.c.l.b16 %v474
        %v1207 = vunpack.c.h.b16 %v474
        %v1208 = vunpack.c.l.b16 %v475
        %v1209 = vunpack.c.h.b16 %v475
        %v1210 = vunpack.c.l.b16 %v476
        %v1211 = vunpack.c.h.b16 %v476
        %v1212 = vunpack.c.l.b16 %v477
        %v1213 = vunpack.c.h.b16 %v477
        %v1214 = vunpack.c.l.b16 %v478
        %v1215 = vunpack.c.h.b16 %v478
        %v1216 = vunpack.c.l.b16 %v479
        %v1217 = vunpack.c.h.b16 %v479
        %v1218 = vunpack.c.l.b16 %v480
        %v1219 = vunpack.c.h.b16 %v480
        %v1220 = vunpack.c.l.b16 %v481
        %v1221 = vunpack.c.h.b16 %v481
        %v1222 = vunpack.c.l.b16 %v482
        %v1223 = vunpack.c.h.b16 %v482
        %v1224 = vunpack.c.l.b16 %v483
        %v1225 = vunpack.c.h.b16 %v483
        %v1226 = vunpack.c.l.b16 %v484
        %v1227 = vunpack.c.h.b16 %v484
        %v1228 = vunpack.c.l.b16 %v485
        %v1229 = vunpack.c.h.b16 %v485
        %v1230 = vunpack.c.l.b16 %v486
        %v1231 = vunpack.c.h.b16 %v486
        %v1232 = vunpack.c.l.b16 %v487
        %v1233 = vunpack.c.h.b16 %v487
        %v1234 = vunpack.c.l.b16 %v488
        %v1235 = vunpack.c.h.b16 %v488
        %v1236 = vunpack.c.l.b16 %v489
        %v1237 = vunpack.c.h.b16 %v489
        %v1238 = vunpack.c.l.b16 %v490
        %v1239 = vunpack.c.h.b16 %v490
        %v1240 = vunpack.c.l.b16 %v491
        %v1241 = vunpack.c.h.b16 %v491
        %v1242 = vunpack.c.l.b16 %v492
        %v1243 = vunpack.c.h.b16 %v492
        %v1244 = vunpack.c.l.b16 %v493
        %v1245 = vunpack.c.h.b16 %v493
        %v1246 = vunpack.c.l.b16 %v494
        %v1247 = vunpack.c.h.b16 %v494
        %v1248 = vunpack.c.l.b16 %v495
        %v1249 = vunpack.c.h.b16 %v495
        %v1250 = vunpack.c.l.b16 %v496
        %v1251 = vunpack.c.h.b16 %v496
        %v1252 = vunpack.c.l.b16 %v497
        %v1253 = vunpack.c.h.b16 %v497
        %v1254 = vunpack.c.l.b16 %v498
        %v1255 = vunpack.c.h.b16 %v498
        %v1256 = vunpack.c.l.b16 %v499
        %v1257 = vunpack.c.h.b16 %v499
        %v1258 = vunpack.c.l.b16 %v500
        %v1259 = vunpack.c.h.b16 %v500
        %v1260 = vunpack.c.l.b16 %v501
        %v1261 = vunpack.c.h.b16 %v501
        %v1262 = vunpack.c.l.b16 %v502
        %v1263 = vunpack.c.h.b16 %v502
        %v1264 = vunpack.c.l.b16 %v503
        %v1265 = vunpack.c.h.b16 %v503
        %v1266 = vunpack.c.l.b16 %v504
        %v1267 = vunpack.c.h.b16 %v504
        %v1268 = vunpack.c.l.b16 %v505
        %v1269 = vunpack.c.h.b16 %v505
        %v1270 = vunpack.c.l.b16 %v506
        %v1271 = vunpack.c.h.b16 %v506
        %v1272 = vunpack.c.l.b16 %v507
        %v1273 = vunpack.c.h.b16 %v507
        %v1274 = vunpack.c.l.b16 %v508
        %v1275 = vunpack.c.h.b16 %v508
        %v1276 = vunpack.c.l.b16 %v509
        %v1277 = vunpack.c.h.b16 %v509
        %v1278 = vunpack.c.l.b16 %v510
        %v1279 = vunpack.c.h.b16 %v510
        %v1280 = vunpack.c.l.b16 %v511
        %v1281 = vunpack.c.h.b16 %v511
        %v1282 = vunpack.c.l.b16 %v512
        %v1283 = vunpack.c.h.b16 %v512
        %v1284 = vunpack.c.l.b16 %v513
        %v1285 = vunpack.c.h.b16 %v513
        %v1286 = vunpack.c.l.b16 %v514
        %v1287 = vunpack.c.h.b16 %v514
        %v1288 = vunpack.c.l.b16 %v515
        %v1289 = vunpack.c.h.b16 %v515
        %v1290 = vunpack.c.l.b16 %v516
        %v1291 = vunpack.c.h.b16 %v516
        %v1292 = vunpack.c.l.b16 %v517
        %v1293 = vunpack.c.h.b16 %v517
        %v1294 = vunpack.c.l.b16 %v518
        %v1295 = vunpack.c.h.b16 %v518
        %v1296 = vunpack.c.l.b16 %v519
        %v1297 = vunpack.c.h.b16 %v519
        %v1298 = vunpack.c.l.b16 %v520
        %v1299 = vunpack.c.h.b16 %v520
        %v1300 = vunpack.c.l.b16 %v521
        %v1301 = vunpack.c.h.b16 %v521
        %v1302 = vunpack.c.l.b16 %v522
        %v1303 = vunpack.c.h.b16 %v522
        %v1304 = vunpack.c.l.b16 %v523
        %v1305 = vunpack.c.h.b16 %v523
        %v1306 = vunpack.c.l.b16 %v524
        %v1307 = vunpack.c.h.b16 %v524
        %v1308 = vunpack.c.l.b16 %v525
        %v1309 = vunpack.c.h.b16 %v525
        %v1310 = vunpack.c.l.b16 %v526
        %v1311 = vunpack.c.h.b16 %v526
        %v1312 = vunpack.c.l.b16 %v527
        %v1313 = vunpack.c.h.b16 %v527
        %v1314 = vunpack.c.l.b16 %v528
        %v1315 = vunpack.c.h.b16 %v528
        %v1316 = vunpack.c.l.b16 %v529
        %v1317 = vunpack.c.h.b16 %v529
        %v1318 = vunpack.c.l.b16 %v530
        %v1319 = vunpack.c.h.b16 %v530
        %v1320 = vunpack.c.l.b16 %v531
        %v1321 = vunpack.c.h.b16 %v531
        %v1322 = vunpack.c.l.b16 %v532
        %v1323 = vunpack.c.h.b16 %v532
        %v1324 = vunpack.c.l.b16 %v533
        %v1325 = vunpack.c.h.b16 %v533
        %v1326 = vunpack.c.l.b16 %v534
        %v1327 = vunpack.c.h.b16 %v534
        %v1328 = vunpack.c.l.b16 %v535
        %v1329 = vunpack.c.h.b16 %v535
        %v1330 = vunpack.c.l.b16 %v536
        %v1331 = vunpack.c.h.b16 %v536
        %v1332 = vunpack.c.l.b16 %v537
        %v1333 = vunpack.c.h.b16 %v537
        %v1334 = vunpack.c.l.b16 %v538
        %v1335 = vunpack.c.h.b16 %v538
        %v1336 = vunpack.c.l.b16 %v539
        %v1337 = vunpack.c.h.b16 %v539
        %v1338 = vunpack.c.l.b16 %v540
        %v1339 = vunpack.c.h.b16 %v540
        %v1340 = vunpack.c.l.b16 %v541
        %v1341 = vunpack.c.h.b16 %v541
        %v1342 = vunpack.c.l.b16 %v542
        %v1343 = vunpack.c.h.b16 %v542
        %v1344 = vunpack.c.l.b16 %v543
        %v1345 = vunpack.c.h.b16 %v543
        %v1346 = vunpack.c.l.b16 %v544
        %v1347 = vunpack.c.h.b16 %v544
        %v1348 = vunpack.c.l.b16 %v545
        %v1349 = vunpack.c.h.b16 %v545
        %v1350 = vunpack.c.l.b16 %v546
        %v1351 = vunpack.c.h.b16 %v546
        %v1352 = vunpack.c.l.b16 %v547
        %v1353 = vunpack.c.h.b16 %v547
        %v1354 = vunpack.c.l.b16 %v548
        %v1355 = vunpack.c.h.b16 %v548
        %v1356 = vunpack.c.l.b16 %v549
        %v1357 = vunpack.c.h.b16 %v549
        %v1358 = vunpack.c.l.b16 %v550
        %v1359 = vunpack.c.h.b16 %v550
        %v1360 = vunpack.c.l.b16 %v551
        %v1361 = vunpack.c.h.b16 %v551
        %v1362 = vunpack.c.l.b16 %v552
        %v1363 = vunpack.c.h.b16 %v552
        %v1364 = vunpack.c.l.b16 %v553
        %v1365 = vunpack.c.h.b16 %v553
        %v1366 = vunpack.c.l.b16 %v554
        %v1367 = vunpack.c.h.b16 %v554
        %v1368 = vunpack.c.l.b16 %v555
        %v1369 = vunpack.c.h.b16 %v555
        %v1370 = vunpack.c.l.b16 %v556
        %v1371 = vunpack.c.h.b16 %v556
        %v1372 = vunpack.c.l.b16 %v557
        %v1373 = vunpack.c.h.b16 %v557
        %v1374 = vunpack.c.l.b16 %v558
        %v1375 = vunpack.c.h.b16 %v558
        %v1376 = vunpack.c.l.b16 %v559
        %v1377 = vunpack.c.h.b16 %v559
        %v1378 = vunpack.c.l.b16 %v560
        %v1379 = vunpack.c.h.b16 %v560
        %v1380 = vunpack.c.l.b16 %v561
        %v1381 = vunpack.c.h.b16 %v561
        %v1382 = vunpack.c.l.b16 %v562
        %v1383 = vunpack.c.h.b16 %v562
        %v1384 = vunpack.c.l.b16 %v563
        %v1385 = vunpack.c.h.b16 %v563
        %v1386 = vunpack.c.l.b16 %v564
        %v1387 = vunpack.c.h.b16 %v564
        %v1388 = vunpack.c.l.b16 %v565
        %v1389 = vunpack.c.h.b16 %v565
        %v1390 = vunpack.c.l.b16 %v566
        %v1391 = vunpack.c.h.b16 %v566
        %v1392 = vunpack.c.l.b16 %v567
        %v1393 = vunpack.c.h.b16 %v567
        %v1394 = vunpack.c.l.b16 %v568
        %v1395 = vunpack.c.h.b16 %v568
        %v1396 = vunpack.c.l.b16 %v569
        %v1397 = vunpack.c.h.b16 %v569
        %v1398 = vunpack.c.l.b16 %v570
        %v1399 = vunpack.c.h.b16 %v570
        %v1400 = vunpack.c.l.b16 %v571
        %v1401 = vunpack.c.h.b16 %v571
        %v1402 = vunpack.c.l.b16 %v572
        %v1403 = vunpack.c.h.b16 %v572
        %v1404 = vunpack.c.l.b16 %v573
        %v1405 = vunpack.c.h.b16 %v573
        %v1406 = vunpack.c.l.b16 %v574
        %v1407 = vunpack.c.h.b16 %v574
        %v1408 = vunpack.c.l.b16 %v575
        %v1409 = vunpack.c.h.b16 %v575
        %v1410 = vunpack.c.l.b16 %v576
        %v1411 = vunpack.c.h.b16 %v576
        %v1412 = vunpack.c.l.b16 %v577
        %v1413 = vunpack.c.h.b16 %v577
        %v1414 = vunpack.c.l.b16 %v578
        %v1415 = vunpack.c.h.b16 %v578
        %v1416 = vunpack.c.l.b16 %v579
        %v1417 = vunpack.c.h.b16 %v579
        %v1418 = vunpack.c.l.b16 %v580
        %v1419 = vunpack.c.h.b16 %v580
        %v1420 = vunpack.c.l.b16 %v581
        %v1421 = vunpack.c.h.b16 %v581
        %v1422 = vunpack.c.l.b16 %v582
        %v1423 = vunpack.c.h.b16 %v582
        %v1424 = vunpack.c.l.b16 %v583
        %v1425 = vunpack.c.h.b16 %v583
        %v1426 = vunpack.c.l.b16 %v584
        %v1427 = vunpack.c.h.b16 %v584
        %v1428 = vunpack.c.l.b16 %v585
        %v1429 = vunpack.c.h.b16 %v585
        %v1430 = vunpack.c.l.b16 %v586
        %v1431 = vunpack.c.h.b16 %v586
        %v1432 = vunpack.c.l.b16 %v587
        %v1433 = vunpack.c.h.b16 %v587
        %v1434 = vunpack.c.l.b16 %v588
        %v1435 = vunpack.c.h.b16 %v588
        %v1436 = vunpack.c.l.b16 %v589
        %v1437 = vunpack.c.h.b16 %v589
        %v1438 = vunpack.c.l.b16 %v590
        %v1439 = vunpack.c.h.b16 %v590
        %v1440 = vunpack.c.l.b16 %v591
        %v1441 = vunpack.c.h.b16 %v591
        %v1442 = vunpack.c.l.b16 %v592
        %v1443 = vunpack.c.h.b16 %v592
        %v1444 = vunpack.c.l.b16 %v593
        %v1445 = vunpack.c.h.b16 %v593
        %v1446 = vunpack.c.l.b16 %v594
        %v1447 = vunpack.c.h.b16 %v594
        %v1448 = vunpack.c.l.b16 %v595
        %v1449 = vunpack.c.h.b16 %v595
        %v1450 = vunpack.c.l.b16 %v596
        %v1451 = vunpack.c.h.b16 %v596
        %v1452 = vunpack.c.l.b16 %v597
        %v1453 = vunpack.c.h.b16 %v597
        %v1454 = vunpack.c.l.b16 %v598
        %v1455 = vunpack.c.h.b16 %v598
        %v1456 = vunpack.c.l.b16 %v599
        %v1457 = vunpack.c.h.b16 %v599
        %v1458 = vunpack.c.l.b16 %v600
        %v1459 = vunpack.c.h.b16 %v600
        %v1460 = vunpack.c.l.b16 %v601
        %v1461 = vunpack.c.h.b16 %v601
        %v1462 = vunpack.c.l.b16 %v602
        %v1463 = vunpack.c.h.b16 %v602
        %v1464 = vunpack.c.l.b16 %v603
        %v1465 = vunpack.c.h.b16 %v603
        %v1466 = vunpack.c.l.b16 %v604
        %v1467 = vunpack.c.h.b16 %v604
        %v1468 = vunpack.c.l.b16 %v605
        %v1469 = vunpack.c.h.b16 %v605
        %v1470 = vunpack.c.l.b16 %v606
        %v1471 = vunpack.c.h.b16 %v606
        %v1472 = vunpack.c.l.b16 %v607
        %v1473 = vunpack.c.h.b16 %v607
        %v1474 = vunpack.c.l.b16 %v608
        %v1475 = vunpack.c.h.b16 %v608
        %v1476 = vunpack.c.l.b16 %v609
        %v1477 = vunpack.c.h.b16 %v609
        %v1478 = vunpack.c.l.b16 %v610
        %v1479 = vunpack.c.h.b16 %v610
        %v1480 = vunpack.c.l.b16 %v611
        %v1481 = vunpack.c.h.b16 %v611
        %v1482 = vunpack.c.l.b16 %v612
        %v1483 = vunpack.c.h.b16 %v612
        %v1484 = vunpack.c.l.b16 %v613
        %v1485 = vunpack.c.h.b16 %v613
        %v1486 = vunpack.c.l.b16 %v614
        %v1487 = vunpack.c.h.b16 %v614
        %v1488 = vunpack.c.l.b16 %v615
        %v1489 = vunpack.c.h.b16 %v615
        %v1490 = vunpack.c.l.b16 %v616
        %v1491 = vunpack.c.h.b16 %v616
        %v1492 = vunpack.c.l.b16 %v617
        %v1493 = vunpack.c.h.b16 %v617
        %v1494 = vunpack.c.l.b16 %v618
        %v1495 = vunpack.c.h.b16 %v618
        %v1496 = vunpack.c.l.b16 %v619
        %v1497 = vunpack.c.h.b16 %v619
        %v1498 = vunpack.c.l.b16 %v620
        %v1499 = vunpack.c.h.b16 %v620
        %v1500 = vunpack.c.l.b16 %v621
        %v1501 = vunpack.c.h.b16 %v621
        %v1502 = vunpack.c.l.b16 %v622
        %v1503 = vunpack.c.h.b16 %v622
        %v1504 = vunpack.c.l.b16 %v623
        %v1505 = vunpack.c.h.b16 %v623
        %v1506 = vunpack.c.l.b16 %v624
        %v1507 = vunpack.c.h.b16 %v624
        %v1508 = vunpack.c.l.b16 %v625
        %v1509 = vunpack.c.h.b16 %v625
        %v1510 = vunpack.c.l.b16 %v626
        %v1511 = vunpack.c.h.b16 %v626
        %v1512 = vunpack.c.l.b16 %v627
        %v1513 = vunpack.c.h.b16 %v627
        %v1514 = vunpack.c.l.b16 %v628
        %v1515 = vunpack.c.h.b16 %v628
        %v1516 = vunpack.c.l.b16 %v629
        %v1517 = vunpack.c.h.b16 %v629
        %v1518 = vunpack.c.l.b16 %v630
        %v1519 = vunpack.c.h.b16 %v630
        %v1520 = vunpack.c.l.b16 %v631
        %v1521 = vunpack.c.h.b16 %v631
        %v1522 = vunpack.c.l.b16 %v632
        %v1523 = vunpack.c.h.b16 %v632
        %v1524 = vunpack.c.l.b16 %v633
        %v1525 = vunpack.c.h.b16 %v633
        %v1526 = vunpack.c.l.b16 %v634
        %v1527 = vunpack.c.h.b16 %v634
        %v1528 = vunpack.c.l.b16 %v635
        %v1529 = vunpack.c.h.b16 %v635
        %v1530 = vunpack.c.l.b16 %v636
        %v1531 = vunpack.c.h.b16 %v636
        %v1532 = vunpack.c.l.b16 %v637
        %v1533 = vunpack.c.h.b16 %v637
        %v1534 = vunpack.c.l.b16 %v638
        %v1535 = vunpack.c.h.b16 %v638
        %v1536 = vunpack.c.l.b16 %v639
        %v1537 = vunpack.c.h.b16 %v639
        %v1538 = vunpack.c.l.b16 %v640
        %v1539 = vunpack.c.h.b16 %v640
        %v1540 = vunpack.c.l.b16 %v641
        %v1541 = vunpack.c.h.b16 %v641
        %v1542 = vpack.c.b16 %v972, %v966
        %v1543 = vpack.c.b16 %v973, %v967
        %v1544 = vpack.c.b16 %v974, %v968
        %v1545 = vpack.c.b16 %v975, %v969
        %v1546 = vpack.c.b16 %v976, %v970
        %v1547 = vpack.c.b16 %v977, %v971
        %v1548 = vpack.c.b16 %v984, %v978
        %v1549 = vpack.c.b16 %v985, %v979
        %v1550 = vpack.c.b16 %v986, %v980
        %v1551 = vpack.c.b16 %v987, %v981
        %v1552 = vpack.c.b16 %v988, %v982
        %v1553 = vpack.c.b16 %v989, %v983
        %v1554 = vpack.c.b16 %v996, %v990
        %v1555 = vpack.c.b16 %v997, %v991
        %v1556 = vpack.c.b16 %v998, %v992
        %v1557 = vpack.c.b16 %v999, %v993
        %v1558 = vpack.c.b16 %v1000, %v994
        %v1559 = vpack.c.b16 %v1001, %v995
        %v1560 = vpack.c.b16 %v1008, %v1002
        %v1561 = vpack.c.b16 %v1009, %v1003
        %v1562 = vpack.c.b16 %v1010, %v1004
        %v1563 = vpack.c.b16 %v1011, %v1005
        %v1564 = vpack.c.b16 %v1012, %v1006
        %v1565 = vpack.c.b16 %v1013, %v1007
        %v1566 = vpack.c.b16 %v1020, %v1014
        %v1567 = vpack.c.b16 %v1021, %v1015
        %v1568 = vpack.c.b16 %v1022, %v1016
        %v1569 = vpack.c.b16 %v1023, %v1017
        %v1570 = vpack.c.b16 %v1024, %v1018
        %v1571 = vpack.c.b16 %v1025, %v1019
        %v1572 = vpack.c.b16 %v1032, %v1026
        %v1573 = vpack.c.b16 %v1033, %v1027
        %v1574 = vpack.c.b16 %v1034, %v1028
        %v1575 = vpack.c.b16 %v1035, %v1029
        %v1576 = vpack.c.b16 %v1036, %v1030
        %v1577 = vpack.c.b16 %v1037, %v1031
        %v1578 = vpack.c.b16 %v1044, %v1038
        %v1579 = vpack.c.b16 %v1045, %v1039
        %v1580 = vpack.c.b16 %v1046, %v1040
        %v1581 = vpack.c.b16 %v1047, %v1041
        %v1582 = vpack.c.b16 %v1048, %v1042
        %v1583 = vpack.c.b16 %v1049, %v1043
        %v1584 = vpack.c.b16 %v1056, %v1050
        %v1585 = vpack.c.b16 %v1057, %v1051
        %v1586 = vpack.c.b16 %v1058, %v1052
        %v1587 = vpack.c.b16 %v1059, %v1053
        %v1588 = vpack.c.b16 %v1060, %v1054
        %v1589 = vpack.c.b16 %v1061, %v1055
        %v1590 = vpack.c.b16 %v1068, %v1062
        %v1591 = vpack.c.b16 %v1069, %v1063
        %v1592 = vpack.c.b16 %v1070, %v1064
        %v1593 = vpack.c.b16 %v1071, %v1065
        %v1594 = vpack.c.b16 %v1072, %v1066
        %v1595 = vpack.c.b16 %v1073, %v1067
        %v1596 = vpack.c.b16 %v1080, %v1074
        %v1597 = vpack.c.b16 %v1081, %v1075
        %v1598 = vpack.c.b16 %v1082, %v1076
        %v1599 = vpack.c.b16 %v1083, %v1077
        %v1600 = vpack.c.b16 %v1084, %v1078
        %v1601 = vpack.c.b16 %v1085, %v1079
        %v1602 = vpack.c.b16 %v1092, %v1086
        %v1603 = vpack.c.b16 %v1093, %v1087
        %v1604 = vpack.c.b16 %v1094, %v1088
        %v1605 = vpack.c.b16 %v1095, %v1089
        %v1606 = vpack.c.b16 %v1096, %v1090
        %v1607 = vpack.c.b16 %v1097, %v1091
        %v1608 = vpack.c.b16 %v1104, %v1098
        %v1609 = vpack.c.b16 %v1105, %v1099
        %v1610 = vpack.c.b16 %v1106, %v1100
        %v1611 = vpack.c.b16 %v1107, %v1101
        %v1612 = vpack.c.b16 %v1108, %v1102
        %v1613 = vpack.c.b16 %v1109, %v1103
        %v1614 = vpack.c.b16 %v1116, %v1110
        %v1615 = vpack.c.b16 %v1117, %v1111
        %v1616 = vpack.c.b16 %v1118, %v1112
        %v1617 = vpack.c.b16 %v1119, %v1113
        %v1618 = vpack.c.b16 %v1120, %v1114
        %v1619 = vpack.c.b16 %v1121, %v1115
        %v1620 = vpack.c.b16 %v1128, %v1122
        %v1621 = vpack.c.b16 %v1129, %v1123
        %v1622 = vpack.c.b16 %v1130, %v1124
        %v1623 = vpack.c.b16 %v1131, %v1125
        %v1624 = vpack.c.b16 %v1132, %v1126
        %v1625 = vpack.c.b16 %v1133, %v1127
        %v1626 = vpack.c.b16 %v1140, %v1134
        %v1627 = vpack.c.b16 %v1141, %v1135
        %v1628 = vpack.c.b16 %v1142, %v1136
        %v1629 = vpack.c.b16 %v1143, %v1137
        %v1630 = vpack.c.b16 %v1144, %v1138
        %v1631 = vpack.c.b16 %v1145, %v1139
        %v1632 = vpack.c.b16 %v1152, %v1146
        %v1633 = vpack.c.b16 %v1153, %v1147
        %v1634 = vpack.c.b16 %v1154, %v1148
        %v1635 = vpack.c.b16 %v1155, %v1149
        %v1636 = vpack.c.b16 %v1156, %v1150
        %v1637 = vpack.c.b16 %v1157, %v1151
        %v1638 = vpack.c.b16 %v1164, %v1158
        %v1639 = vpack.c.b16 %v1165, %v1159
        %v1640 = vpack.c.b16 %v1166, %v1160
        %v1641 = vpack.c.b16 %v1167, %v1161
        %v1642 = vpack.c.b16 %v1168, %v1162
        %v1643 = vpack.c.b16 %v1169, %v1163
        %v1644 = vpack.c.b16 %v1176, %v1170
        %v1645 = vpack.c.b16 %v1177, %v1171
        %v1646 = vpack.c.b16 %v1178, %v1172
        %v1647 = vpack.c.b16 %v1179, %v1173
        %v1648 = vpack.c.b16 %v1180, %v1174
        %v1649 = vpack.c.b16 %v1181, %v1175
        %v1650 = vpack.c.b16 %v1188, %v1182
        %v1651 = vpack.c.b16 %v1189, %v1183
        %v1652 = vpack.c.b16 %v1190, %v1184
        %v1653 = vpack.c.b16 %v1191, %v1185
        %v1654 = vpack.c.b16 %v1192, %v1186
        %v1655 = vpack.c.b16 %v1193, %v1187
        %v1656 = vpack.c.b16 %v1200, %v1194
        %v1657 = vpack.c.b16 %v1201, %v1195
        %v1658 = vpack.c.b16 %v1202, %v1196
        %v1659 = vpack.c.b16 %v1203, %v1197
        %v1660 = vpack.c.b16 %v1204, %v1198
        %v1661 = vpack.c.b16 %v1205, %v1199
        %v1662 = vpack.c.b16 %v1212, %v1206
        %v1663 = vpack.c.b16 %v1213, %v1207
        %v1664 = vpack.c.b16 %v1214, %v1208
        %v1665 = vpack.c.b16 %v1215, %v1209
        %v1666 = vpack.c.b16 %v1216, %v1210
        %v1667 = vpack.c.b16 %v1217, %v1211
        %v1668 = vpack.c.b16 %v1224, %v1218
        %v1669 = vpack.c.b16 %v1225, %v1219
        %v1670 = vpack.c.b16 %v1226, %v1220
        %v1671 = vpack.c.b16 %v1227, %v1221
        %v1672 = vpack.c.b16 %v1228, %v1222
        %v1673 = vpack.c.b16 %v1229, %v1223
        %v1674 = vpack.c.b16 %v1236, %v1230
        %v1675 = vpack.c.b16 %v1237, %v1231
        %v1676 = vpack.c.b16 %v1238, %v1232
        %v1677 = vpack.c.b16 %v1239, %v1233
        %v1678 = vpack.c.b16 %v1240, %v1234
        %v1679 = vpack.c.b16 %v1241, %v1235
        %v1680 = vpack.c.b16 %v1248, %v1242
        %v1681 = vpack.c.b16 %v1249, %v1243
        %v1682 = vpack.c.b16 %v1250, %v1244
        %v1683 = vpack.c.b16 %v1251, %v1245
        %v1684 = vpack.c.b16 %v1252, %v1246
        %v1685 = vpack.c.b16 %v1253, %v1247
        %v1686 = vpack.c.b16 %v1260, %v1254
        %v1687 = vpack.c.b16 %v1261, %v1255
        %v1688 = vpack.c.b16 %v1262, %v1256
        %v1689 = vpack.c.b16 %v1263, %v1257
        %v1690 = vpack.c.b16 %v1264, %v1258
        %v1691 = vpack.c.b16 %v1265, %v1259
        %v1692 = vpack.c.b16 %v1272, %v1266
        %v1693 = vpack.c.b16 %v1273, %v1267
        %v1694 = vpack.c.b16 %v1274, %v1268
        %v1695 = vpack.c.b16 %v1275, %v1269
        %v1696 = vpack.c.b16 %v1276, %v1270
        %v1697 = vpack.c.b16 %v1277, %v1271
        %v1698 = vpack.c.b16 %v1284, %v1278
        %v1699 = vpack.c.b16 %v1285, %v1279
        %v1700 = vpack.c.b16 %v1286, %v1280
        %v1701 = vpack.c.b16 %v1287, %v1281
        %v1702 = vpack.c.b16 %v1288, %v1282
        %v1703 = vpack.c.b16 %v1289, %v1283
        %v1704 = vpack.c.b16 %v1296, %v1290
        %v1705 = vpack.c.b16 %v1297, %v1291
        %v1706 = vpack.c.b16 %v1298, %v1292
        %v1707 = vpack.c.b16 %v1299, %v1293
        %v1708 = vpack.c.b16 %v1300, %v1294
        %v1709 = vpack.c.b16 %v1301, %v1295
        %v1710 = vpack.c.b16 %v1308, %v1302
        %v1711 = vpack.c.b16 %v1309, %v1303
        %v1712 = vpack.c.b16 %v1310, %v1304
        %v1713 = vpack.c.b16 %v1311, %v1305
        %v1714 = vpack.c.b16 %v1312, %v1306
        %v1715 = vpack.c.b16 %v1313, %v1307
        %v1716 = vpack.c.b16 %v1320, %v1314
        %v1717 = vpack.c.b16 %v1321, %v1315
        %v1718 = vpack.c.b16 %v1322, %v1316
        %v1719 = vpack.c.b16 %v1323, %v1317
        %v1720 = vpack.c.b16 %v1324, %v1318
        %v1721 = vpack.c.b16 %v1325, %v1319
        %v1722 = vpack.c.b16 %v1332, %v1326
        %v1723 = vpack.c.b16 %v1333, %v1327
        %v1724 = vpack.c.b16 %v1334, %v1328
        %v1725 = vpack.c.b16 %v1335, %v1329
        %v1726 = vpack.c.b16 %v1336, %v1330
        %v1727 = vpack.c.b16 %v1337, %v1331
        %v1728 = vpack.c.b16 %v1344, %v1338
        %v1729 = vpack.c.b16 %v1345, %v1339
        %v1730 = vpack.c.b16 %v1346, %v1340
        %v1731 = vpack.c.b16 %v1347, %v1341
        %v1732 = vpack.c.b16 %v1348, %v1342
        %v1733 = vpack.c.b16 %v1349, %v1343
        %v1734 = vpack.c.b16 %v1356, %v1350
        %v1735 = vpack.c.b16 %v1357, %v1351
        %v1736 = vpack.c.b16 %v1358, %v1352
        %v1737 = vpack.c.b16 %v1359, %v1353
        %v1738 = vpack.c.b16 %v1360, %v1354
        %v1739 = vpack.c.b16 %v1361, %v1355
        %v1740 = vpack.c.b16 %v1368, %v1362
        %v1741 = vpack.c.b16 %v1369, %v1363
        %v1742 = vpack.c.b16 %v1370, %v1364
        %v1743 = vpack.c.b16 %v1371, %v1365
        %v1744 = vpack.c.b16 %v1372, %v1366
        %v1745 = vpack.c.b16 %v1373, %v1367
        %v1746 = vpack.c.b16 %v1380, %v1374
        %v1747 = vpack.c.b16 %v1381, %v1375
        %v1748 = vpack.c.b16 %v1382, %v1376
        %v1749 = vpack.c.b16 %v1383, %v1377
        %v1750 = vpack.c.b16 %v1384, %v1378
        %v1751 = vpack.c.b16 %v1385, %v1379
        %v1752 = vpack.c.b16 %v1392, %v1386
        %v1753 = vpack.c.b16 %v1393, %v1387
        %v1754 = vpack.c.b16 %v1394, %v1388
        %v1755 = vpack.c.b16 %v1395, %v1389
        %v1756 = vpack.c.b16 %v1396, %v1390
        %v1757 = vpack.c.b16 %v1397, %v1391
        %v1758 = vpack.c.b16 %v1404, %v1398
        %v1759 = vpack.c.b16 %v1405, %v1399
        %v1760 = vpack.c.b16 %v1406, %v1400
        %v1761 = vpack.c.b16 %v1407, %v1401
        %v1762 = vpack.c.b16 %v1408, %v1402
        %v1763 = vpack.c.b16 %v1409, %v1403
        %v1764 = vpack.c.b16 %v1416, %v1410
        %v1765 = vpack.c.b16 %v1417, %v1411
        %v1766 = vpack.c.b16 %v1418, %v1412
        %v1767 = vpack.c.b16 %v1419, %v1413
        %v1768 = vpack.c.b16 %v1420, %v1414
        %v1769 = vpack.c.b16 %v1421, %v1415
        %v1770 = vpack.c.b16 %v1428, %v1422
        %v1771 = vpack.c.b16 %v1429, %v1423
        %v1772 = vpack.c.b16 %v1430, %v1424
        %v1773 = vpack.c.b16 %v1431, %v1425
        %v1774 = vpack.c.b16 %v1432, %v1426
        %v1775 = vpack.c.b16 %v1433, %v1427
        %v1776 = vpack.c.b16 %v1440, %v1434
        %v1777 = vpack.c.b16 %v1441, %v1435
        %v1778 = vpack.c.b16 %v1442, %v1436
        %v1779 = vpack.c.b16 %v1443, %v1437
        %v1780 = vpack.c.b16 %v1444, %v1438
        %v1781 = vpack.c.b16 %v1445, %v1439
        %v1782 = vpack.c.b16 %v1452, %v1446
        %v1783 = vpack.c.b16 %v1453, %v1447
        %v1784 = vpack.c.b16 %v1454, %v1448
        %v1785 = vpack.c.b16 %v1455, %v1449
        %v1786 = vpack.c.b16 %v1456, %v1450
        %v1787 = vpack.c.b16 %v1457, %v1451
        %v1788 = vpack.c.b16 %v1464, %v1458
        %v1789 = vpack.c.b16 %v1465, %v1459
        %v1790 = vpack.c.b16 %v1466, %v1460
        %v1791 = vpack.c.b16 %v1467, %v1461
        %v1792 = vpack.c.b16 %v1468, %v1462
        %v1793 = vpack.c.b16 %v1469, %v1463
        %v1794 = vpack.c.b16 %v1476, %v1470
        %v1795 = vpack.c.b16 %v1477, %v1471
        %v1796 = vpack.c.b16 %v1478, %v1472
        %v1797 = vpack.c.b16 %v1479, %v1473
        %v1798 = vpack.c.b16 %v1480, %v1474
        %v1799 = vpack.c.b16 %v1481, %v1475
        %v1800 = vpack.c.b16 %v1488, %v1482
        %v1801 = vpack.c.b16 %v1489, %v1483
        %v1802 = vpack.c.b16 %v1490, %v1484
        %v1803 = vpack.c.b16 %v1491, %v1485
        %v1804 = vpack.c.b16 %v1492, %v1486
        %v1805 = vpack.c.b16 %v1493, %v1487
        %v1806 = vpack.c.b16 %v1500, %v1494
        %v1807 = vpack.c.b16 %v1501, %v1495
        %v1808 = vpack.c.b16 %v1502, %v1496
        %v1809 = vpack.c.b16 %v1503, %v1497
        %v1810 = vpack.c.b16 %v1504, %v1498
        %v1811 = vpack.c.b16 %v1505, %v1499
        %v1812 = vpack.c.b16 %v1512, %v1506
        %v1813 = vpack.c.b16 %v1513, %v1507
        %v1814 = vpack.c.b16 %v1514, %v1508
        %v1815 = vpack.c.b16 %v1515, %v1509
        %v1816 = vpack.c.b16 %v1516, %v1510
        %v1817 = vpack.c.b16 %v1517, %v1511
        %v1818 = vpack.c.b16 %v1524, %v1518
        %v1819 = vpack.c.b16 %v1525, %v1519
        %v1820 = vpack.c.b16 %v1526, %v1520
        %v1821 = vpack.c.b16 %v1527, %v1521
        %v1822 = vpack.c.b16 %v1528, %v1522
        %v1823 = vpack.c.b16 %v1529, %v1523
        %v1824 = vpack.c.b16 %v1536, %v1530
        %v1825 = vpack.c.b16 %v1537, %v1531
        %v1826 = vpack.c.b16 %v1538, %v1532
        %v1827 = vpack.c.b16 %v1539, %v1533
        %v1828 = vpack.c.b16 %v1540, %v1534
        %v1829 = vpack.c.b16 %v1541, %v1535
        %2118 = vmatprep.subr.bf16.mxu0 %v1585
        %2119 = vmatpush1.bf16.msra.mxu0 %v1584
        %2120 = vmatprep.subr.bf16.mxu0 %v1579
        %2121 = vmatpush1.bf16.msra.mxu0 %v1578
        %2122 = vmatprep.subr.bf16.mxu0 %v1573
        %2123 = vmatpush1.bf16.msra.mxu0 %v1572
        %2124 = vmatprep.subr.bf16.mxu0 %v1567
        %2125 = vmatpush1.bf16.msra.mxu0 %v1566
        %2126 = vmatprep.subr.bf16.mxu0 %v1561
        %2127 = vmatpush1.bf16.msra.mxu0 %v1560
        %2128 = vmatprep.subr.bf16.mxu0 %v1555
        %2129 = vmatpush1.bf16.msra.mxu0 %v1554
        %2130 = vmatprep.subr.bf16.mxu0 %v1549
        %2131 = vmatpush1.bf16.msra.mxu0 %v1548
        %2132 = vmatprep.subr.bf16.mxu0 %v1543
        %2133 = vmatpush1.bf16.msra.mxu0 %v1542
        %2134 = vmatprep.subr.bf16.mxu0 %v1633
        %2135 = vmatpush2.bf16.msra.mxu0 %v1632
        %2136 = vmatprep.subr.bf16.mxu0 %v1627
        %2137 = vmatpush2.bf16.msra.mxu0 %v1626
        %2138 = vmatprep.subr.bf16.mxu0 %v1621
        %2139 = vmatpush2.bf16.msra.mxu0 %v1620
        %2140 = vmatprep.subr.bf16.mxu0 %v1615
        %2141 = vmatpush2.bf16.msra.mxu0 %v1614
        %2142 = vmatprep.subr.bf16.mxu0 %v1609
        %2143 = vmatpush2.bf16.msra.mxu0 %v1608
        %2144 = vmatprep.subr.bf16.mxu0 %v1603
        %2145 = vmatpush2.bf16.msra.mxu0 %v1602
        %2146 = vmatprep.subr.bf16.mxu0 %v1597
        %2147 = vmatpush2.bf16.msra.mxu0 %v1596
        %2148 = vmatprep.subr.bf16.mxu0 %v1591
        %2149 = vmatpush2.bf16.msra.mxu0 %v1590
        %2150 = vmatprep.mubr.bf16.mxu0 %v667
        %2151 = vmatmul.mubr.bf16.gmra.mxu0 %v666
        %v2152 = vpop.f32.mrf.mxu0
        %v2153 = vadd.f32 0.0, %v2152
        %v2154 = vpop.f32.mrf.mxu0
        %v2155 = vadd.f32 0.0, %v2154
        %v2156 = vpop.f32.mrf.mxu0
        %v2157 = vadd.f32 0.0, %v2156
        %v2158 = vpop.f32.mrf.mxu0
        %v2159 = vadd.f32 0.0, %v2158
        %2160 = vmatprep.mubr.bf16.mxu0 %v673
        %2161 = vmatmul.mubr.bf16.gmra.mxu0 %v672
        %v2162 = vpop.f32.mrf.mxu0
        %v2163 = vadd.f32 0.0, %v2162
        %v2164 = vpop.f32.mrf.mxu0
        %v2165 = vadd.f32 0.0, %v2164
        %v2166 = vpop.f32.mrf.mxu0
        %v2167 = vadd.f32 0.0, %v2166
        %v2168 = vpop.f32.mrf.mxu0
        %v2169 = vadd.f32 0.0, %v2168
        %2170 = vdwg.mxu0
        %2171 = vmatprep.subr.bf16.mxu0 %v1681
        %2172 = vmatpush1.bf16.msra.mxu0 %v1680
        %2173 = vmatprep.subr.bf16.mxu0 %v1675
        %2174 = vmatpush1.bf16.msra.mxu0 %v1674
        %2175 = vmatprep.subr.bf16.mxu0 %v1669
        %2176 = vmatpush1.bf16.msra.mxu0 %v1668
        %2177 = vmatprep.subr.bf16.mxu0 %v1663
        %2178 = vmatpush1.bf16.msra.mxu0 %v1662
        %2179 = vmatprep.subr.bf16.mxu0 %v1657
        %2180 = vmatpush1.bf16.msra.mxu0 %v1656
        %2181 = vmatprep.subr.bf16.mxu0 %v1651
        %2182 = vmatpush1.bf16.msra.mxu0 %v1650
        %2183 = vmatprep.subr.bf16.mxu0 %v1645
        %2184 = vmatpush1.bf16.msra.mxu0 %v1644
        %2185 = vmatprep.subr.bf16.mxu0 %v1639
        %2186 = vmatpush1.bf16.msra.mxu0 %v1638
        %2187 = vmatprep.subr.bf16.mxu0 %v1729
        %2188 = vmatpush2.bf16.msra.mxu0 %v1728
        %2189 = vmatprep.subr.bf16.mxu0 %v1723
        %2190 = vmatpush2.bf16.msra.mxu0 %v1722
        %2191 = vmatprep.subr.bf16.mxu0 %v1717
        %2192 = vmatpush2.bf16.msra.mxu0 %v1716
        %2193 = vmatprep.subr.bf16.mxu0 %v1711
        %2194 = vmatpush2.bf16.msra.mxu0 %v1710
        %2195 = vmatprep.subr.bf16.mxu0 %v1705
        %2196 = vmatpush2.bf16.msra.mxu0 %v1704
        %2197 = vmatprep.subr.bf16.mxu0 %v1699
        %2198 = vmatpush2.bf16.msra.mxu0 %v1698
        %2199 = vmatprep.subr.bf16.mxu0 %v1693
        %2200 = vmatpush2.bf16.msra.mxu0 %v1692
        %2201 = vmatprep.subr.bf16.mxu0 %v1687
        %2202 = vmatpush2.bf16.msra.mxu0 %v1686
        %2203 = vmatprep.mubr.bf16.mxu0 %v669
        %2204 = vmatmul.mubr.bf16.gmra.mxu0 %v668
        %v2205 = vpop.f32.mrf.mxu0
        %v2206 = vadd.f32 %v2153, %v2205
        %v2207 = vpop.f32.mrf.mxu0
        %v2208 = vadd.f32 %v2155, %v2207
        %v2209 = vpop.f32.mrf.mxu0
        %v2210 = vadd.f32 %v2157, %v2209
        %v2211 = vpop.f32.mrf.mxu0
        %v2212 = vadd.f32 %v2159, %v2211
        %2213 = vmatprep.mubr.bf16.mxu0 %v675
        %2214 = vmatmul.mubr.bf16.gmra.mxu0 %v674
        %v2215 = vpop.f32.mrf.mxu0
        %v2216 = vadd.f32 %v2163, %v2215
        %v2217 = vpop.f32.mrf.mxu0
        %v2218 = vadd.f32 %v2165, %v2217
        %v2219 = vpop.f32.mrf.mxu0
        %v2220 = vadd.f32 %v2167, %v2219
        %v2221 = vpop.f32.mrf.mxu0
        %v2222 = vadd.f32 %v2169, %v2221
        %2223 = vdwg.mxu0
        %2224 = vmatprep.subr.bf16.mxu0 %v1777
        %2225 = vmatpush1.bf16.msra.mxu0 %v1776
        %2226 = vmatprep.subr.bf16.mxu0 %v1771
        %2227 = vmatpush1.bf16.msra.mxu0 %v1770
        %2228 = vmatprep.subr.bf16.mxu0 %v1765
        %2229 = vmatpush1.bf16.msra.mxu0 %v1764
        %2230 = vmatprep.subr.bf16.mxu0 %v1759
        %2231 = vmatpush1.bf16.msra.mxu0 %v1758
        %2232 = vmatprep.subr.bf16.mxu0 %v1753
        %2233 = vmatpush1.bf16.msra.mxu0 %v1752
        %2234 = vmatprep.subr.bf16.mxu0 %v1747
        %2235 = vmatpush1.bf16.msra.mxu0 %v1746
        %2236 = vmatprep.subr.bf16.mxu0 %v1741
        %2237 = vmatpush1.bf16.msra.mxu0 %v1740
        %2238 = vmatprep.subr.bf16.mxu0 %v1735
        %2239 = vmatpush1.bf16.msra.mxu0 %v1734
        %2240 = vmatprep.subr.bf16.mxu0 %v1825
        %2241 = vmatpush2.bf16.msra.mxu0 %v1824
        %2242 = vmatprep.subr.bf16.mxu0 %v1819
        %2243 = vmatpush2.bf16.msra.mxu0 %v1818
        %2244 = vmatprep.subr.bf16.mxu0 %v1813
        %2245 = vmatpush2.bf16.msra.mxu0 %v1812
        %2246 = vmatprep.subr.bf16.mxu0 %v1807
        %2247 = vmatpush2.bf16.msra.mxu0 %v1806
        %2248 = vmatprep.subr.bf16.mxu0 %v1801
        %2249 = vmatpush2.bf16.msra.mxu0 %v1800
        %2250 = vmatprep.subr.bf16.mxu0 %v1795
        %2251 = vmatpush2.bf16.msra.mxu0 %v1794
        %2252 = vmatprep.subr.bf16.mxu0 %v1789
        %2253 = vmatpush2.bf16.msra.mxu0 %v1788
        %2254 = vmatprep.subr.bf16.mxu0 %v1783
        %2255 = vmatpush2.bf16.msra.mxu0 %v1782
        %2256 = vmatprep.mubr.bf16.mxu0 %v671
        %2257 = vmatmul.mubr.bf16.gmra.mxu0 %v670
        %v2258 = vpop.f32.mrf.mxu0
        %v2259 = vadd.f32 %v2206, %v2258
        %v2260 = vpop.f32.mrf.mxu0
        %v2261 = vadd.f32 %v2208, %v2260
        %v2262 = vpop.f32.mrf.mxu0
        %v2263 = vadd.f32 %v2210, %v2262
        %v2264 = vpop.f32.mrf.mxu0
        %v2265 = vadd.f32 %v2212, %v2264
        %2266 = vmatprep.mubr.bf16.mxu0 %v677
        %2267 = vmatmul.mubr.bf16.gmra.mxu0 %v676
        %v2268 = vpop.f32.mrf.mxu0
        %v2269 = vadd.f32 %v2216, %v2268
        %v2270 = vpop.f32.mrf.mxu0
        %v2271 = vadd.f32 %v2218, %v2270
        %v2272 = vpop.f32.mrf.mxu0
        %v2273 = vadd.f32 %v2220, %v2272
        %v2274 = vpop.f32.mrf.mxu0
        %v2275 = vadd.f32 %v2222, %v2274
        %2276 = vdwg.mxu0
        %2277 = vmatprep.subr.bf16.mxu0 %v1587
        %2278 = vmatpush1.bf16.msra.mxu0 %v1586
        %2279 = vmatprep.subr.bf16.mxu0 %v1581
        %2280 = vmatpush1.bf16.msra.mxu0 %v1580
        %2281 = vmatprep.subr.bf16.mxu0 %v1575
        %2282 = vmatpush1.bf16.msra.mxu0 %v1574
        %2283 = vmatprep.subr.bf16.mxu0 %v1569
        %2284 = vmatpush1.bf16.msra.mxu0 %v1568
        %2285 = vmatprep.subr.bf16.mxu0 %v1563
        %2286 = vmatpush1.bf16.msra.mxu0 %v1562
        %2287 = vmatprep.subr.bf16.mxu0 %v1557
        %2288 = vmatpush1.bf16.msra.mxu0 %v1556
        %2289 = vmatprep.subr.bf16.mxu0 %v1551
        %2290 = vmatpush1.bf16.msra.mxu0 %v1550
        %2291 = vmatprep.subr.bf16.mxu0 %v1545
        %2292 = vmatpush1.bf16.msra.mxu0 %v1544
        %2293 = vmatprep.subr.bf16.mxu0 %v1635
        %2294 = vmatpush2.bf16.msra.mxu0 %v1634
        %2295 = vmatprep.subr.bf16.mxu0 %v1629
        %2296 = vmatpush2.bf16.msra.mxu0 %v1628
        %2297 = vmatprep.subr.bf16.mxu0 %v1623
        %2298 = vmatpush2.bf16.msra.mxu0 %v1622
        %2299 = vmatprep.subr.bf16.mxu0 %v1617
        %2300 = vmatpush2.bf16.msra.mxu0 %v1616
        %2301 = vmatprep.subr.bf16.mxu0 %v1611
        %2302 = vmatpush2.bf16.msra.mxu0 %v1610
        %2303 = vmatprep.subr.bf16.mxu0 %v1605
        %2304 = vmatpush2.bf16.msra.mxu0 %v1604
        %2305 = vmatprep.subr.bf16.mxu0 %v1599
        %2306 = vmatpush2.bf16.msra.mxu0 %v1598
        %2307 = vmatprep.subr.bf16.mxu0 %v1593
        %2308 = vmatpush2.bf16.msra.mxu0 %v1592
        %2309 = vmatprep.mubr.bf16.mxu0 %v667
        %2310 = vmatmul.mubr.bf16.gmra.mxu0 %v666
        %v2311 = vpop.f32.mrf.mxu0
        %v2312 = vadd.f32 0.0, %v2311
        %v2313 = vpop.f32.mrf.mxu0
        %v2314 = vadd.f32 0.0, %v2313
        %v2315 = vpop.f32.mrf.mxu0
        %v2316 = vadd.f32 0.0, %v2315
        %v2317 = vpop.f32.mrf.mxu0
        %v2318 = vadd.f32 0.0, %v2317
        %2319 = vmatprep.mubr.bf16.mxu0 %v673
        %2320 = vmatmul.mubr.bf16.gmra.mxu0 %v672
        %v2321 = vpop.f32.mrf.mxu0
        %v2322 = vadd.f32 0.0, %v2321
        %v2323 = vpop.f32.mrf.mxu0
        %v2324 = vadd.f32 0.0, %v2323
        %v2325 = vpop.f32.mrf.mxu0
        %v2326 = vadd.f32 0.0, %v2325
        %v2327 = vpop.f32.mrf.mxu0
        %v2328 = vadd.f32 0.0, %v2327
        %2329 = vdwg.mxu0
        %2330 = vmatprep.subr.bf16.mxu0 %v1683
        %2331 = vmatpush1.bf16.msra.mxu0 %v1682
        %2332 = vmatprep.subr.bf16.mxu0 %v1677
        %2333 = vmatpush1.bf16.msra.mxu0 %v1676
        %2334 = vmatprep.subr.bf16.mxu0 %v1671
        %2335 = vmatpush1.bf16.msra.mxu0 %v1670
        %2336 = vmatprep.subr.bf16.mxu0 %v1665
        %2337 = vmatpush1.bf16.msra.mxu0 %v1664
        %2338 = vmatprep.subr.bf16.mxu0 %v1659
        %2339 = vmatpush1.bf16.msra.mxu0 %v1658
        %2340 = vmatprep.subr.bf16.mxu0 %v1653
        %2341 = vmatpush1.bf16.msra.mxu0 %v1652
        %2342 = vmatprep.subr.bf16.mxu0 %v1647
        %2343 = vmatpush1.bf16.msra.mxu0 %v1646
        %2344 = vmatprep.subr.bf16.mxu0 %v1641
        %2345 = vmatpush1.bf16.msra.mxu0 %v1640
        %2346 = vmatprep.subr.bf16.mxu0 %v1731
        %2347 = vmatpush2.bf16.msra.mxu0 %v1730
        %2348 = vmatprep.subr.bf16.mxu0 %v1725
        %2349 = vmatpush2.bf16.msra.mxu0 %v1724
        %2350 = vmatprep.subr.bf16.mxu0 %v1719
        %2351 = vmatpush2.bf16.msra.mxu0 %v1718
        %2352 = vmatprep.subr.bf16.mxu0 %v1713
        %2353 = vmatpush2.bf16.msra.mxu0 %v1712
        %2354 = vmatprep.subr.bf16.mxu0 %v1707
        %2355 = vmatpush2.bf16.msra.mxu0 %v1706
        %2356 = vmatprep.subr.bf16.mxu0 %v1701
        %2357 = vmatpush2.bf16.msra.mxu0 %v1700
        %2358 = vmatprep.subr.bf16.mxu0 %v1695
        %2359 = vmatpush2.bf16.msra.mxu0 %v1694
        %2360 = vmatprep.subr.bf16.mxu0 %v1689
        %2361 = vmatpush2.bf16.msra.mxu0 %v1688
        %2362 = vmatprep.mubr.bf16.mxu0 %v669
        %2363 = vmatmul.mubr.bf16.gmra.mxu0 %v668
        %v2364 = vpop.f32.mrf.mxu0
        %v2365 = vadd.f32 %v2312, %v2364
        %v2366 = vpop.f32.mrf.mxu0
        %v2367 = vadd.f32 %v2314, %v2366
        %v2368 = vpop.f32.mrf.mxu0
        %v2369 = vadd.f32 %v2316, %v2368
        %v2370 = vpop.f32.mrf.mxu0
        %v2371 = vadd.f32 %v2318, %v2370
        %2372 = vmatprep.mubr.bf16.mxu0 %v675
        %2373 = vmatmul.mubr.bf16.gmra.mxu0 %v674
        %v2374 = vpop.f32.mrf.mxu0
        %v2375 = vadd.f32 %v2322, %v2374
        %v2376 = vpop.f32.mrf.mxu0
        %v2377 = vadd.f32 %v2324, %v2376
        %v2378 = vpop.f32.mrf.mxu0
        %v2379 = vadd.f32 %v2326, %v2378
        %v2380 = vpop.f32.mrf.mxu0
        %v2381 = vadd.f32 %v2328, %v2380
        %2382 = vdwg.mxu0
        %2383 = vmatprep.subr.bf16.mxu0 %v1779
        %2384 = vmatpush1.bf16.msra.mxu0 %v1778
        %2385 = vmatprep.subr.bf16.mxu0 %v1773
        %2386 = vmatpush1.bf16.msra.mxu0 %v1772
        %2387 = vmatprep.subr.bf16.mxu0 %v1767
        %2388 = vmatpush1.bf16.msra.mxu0 %v1766
        %2389 = vmatprep.subr.bf16.mxu0 %v1761
        %2390 = vmatpush1.bf16.msra.mxu0 %v1760
        %2391 = vmatprep.subr.bf16.mxu0 %v1755
        %2392 = vmatpush1.bf16.msra.mxu0 %v1754
        %2393 = vmatprep.subr.bf16.mxu0 %v1749
        %2394 = vmatpush1.bf16.msra.mxu0 %v1748
        %2395 = vmatprep.subr.bf16.mxu0 %v1743
        %2396 = vmatpush1.bf16.msra.mxu0 %v1742
        %2397 = vmatprep.subr.bf16.mxu0 %v1737
        %2398 = vmatpush1.bf16.msra.mxu0 %v1736
        %2399 = vmatprep.subr.bf16.mxu0 %v1827
        %2400 = vmatpush2.bf16.msra.mxu0 %v1826
        %2401 = vmatprep.subr.bf16.mxu0 %v1821
        %2402 = vmatpush2.bf16.msra.mxu0 %v1820
        %2403 = vmatprep.subr.bf16.mxu0 %v1815
        %2404 = vmatpush2.bf16.msra.mxu0 %v1814
        %2405 = vmatprep.subr.bf16.mxu0 %v1809
        %2406 = vmatpush2.bf16.msra.mxu0 %v1808
        %2407 = vmatprep.subr.bf16.mxu0 %v1803
        %2408 = vmatpush2.bf16.msra.mxu0 %v1802
        %2409 = vmatprep.subr.bf16.mxu0 %v1797
        %2410 = vmatpush2.bf16.msra.mxu0 %v1796
        %2411 = vmatprep.subr.bf16.mxu0 %v1791
        %2412 = vmatpush2.bf16.msra.mxu0 %v1790
        %2413 = vmatprep.subr.bf16.mxu0 %v1785
        %2414 = vmatpush2.bf16.msra.mxu0 %v1784
        %2415 = vmatprep.mubr.bf16.mxu0 %v671
        %2416 = vmatmul.mubr.bf16.gmra.mxu0 %v670
        %v2417 = vpop.f32.mrf.mxu0
        %v2418 = vadd.f32 %v2365, %v2417
        %v2419 = vpop.f32.mrf.mxu0
        %v2420 = vadd.f32 %v2367, %v2419
        %v2421 = vpop.f32.mrf.mxu0
        %v2422 = vadd.f32 %v2369, %v2421
        %v2423 = vpop.f32.mrf.mxu0
        %v2424 = vadd.f32 %v2371, %v2423
        %2425 = vmatprep.mubr.bf16.mxu0 %v677
        %2426 = vmatmul.mubr.bf16.gmra.mxu0 %v676
        %v2427 = vpop.f32.mrf.mxu0
        %v2428 = vadd.f32 %v2375, %v2427
        %v2429 = vpop.f32.mrf.mxu0
        %v2430 = vadd.f32 %v2377, %v2429
        %v2431 = vpop.f32.mrf.mxu0
        %v2432 = vadd.f32 %v2379, %v2431
        %v2433 = vpop.f32.mrf.mxu0
        %v2434 = vadd.f32 %v2381, %v2433
        %2435 = vdwg.mxu0
        %2436 = vmatprep.subr.bf16.mxu0 %v1589
        %2437 = vmatpush1.bf16.msra.mxu0 %v1588
        %2438 = vmatprep.subr.bf16.mxu0 %v1583
        %2439 = vmatpush1.bf16.msra.mxu0 %v1582
        %2440 = vmatprep.subr.bf16.mxu0 %v1577
        %2441 = vmatpush1.bf16.msra.mxu0 %v1576
        %2442 = vmatprep.subr.bf16.mxu0 %v1571
        %2443 = vmatpush1.bf16.msra.mxu0 %v1570
        %2444 = vmatprep.subr.bf16.mxu0 %v1565
        %2445 = vmatpush1.bf16.msra.mxu0 %v1564
        %2446 = vmatprep.subr.bf16.mxu0 %v1559
        %2447 = vmatpush1.bf16.msra.mxu0 %v1558
        %2448 = vmatprep.subr.bf16.mxu0 %v1553
        %2449 = vmatpush1.bf16.msra.mxu0 %v1552
        %2450 = vmatprep.subr.bf16.mxu0 %v1547
        %2451 = vmatpush1.bf16.msra.mxu0 %v1546
        %2452 = vmatprep.subr.bf16.mxu0 %v1637
        %2453 = vmatpush2.bf16.msra.mxu0 %v1636
        %2454 = vmatprep.subr.bf16.mxu0 %v1631
        %2455 = vmatpush2.bf16.msra.mxu0 %v1630
        %2456 = vmatprep.subr.bf16.mxu0 %v1625
        %2457 = vmatpush2.bf16.msra.mxu0 %v1624
        %2458 = vmatprep.subr.bf16.mxu0 %v1619
        %2459 = vmatpush2.bf16.msra.mxu0 %v1618
        %2460 = vmatprep.subr.bf16.mxu0 %v1613
        %2461 = vmatpush2.bf16.msra.mxu0 %v1612
        %2462 = vmatprep.subr.bf16.mxu0 %v1607
        %2463 = vmatpush2.bf16.msra.mxu0 %v1606
        %2464 = vmatprep.subr.bf16.mxu0 %v1601
        %2465 = vmatpush2.bf16.msra.mxu0 %v1600
        %2466 = vmatprep.subr.bf16.mxu0 %v1595
        %2467 = vmatpush2.bf16.msra.mxu0 %v1594
        %2468 = vmatprep.mubr.bf16.mxu0 %v667
        %2469 = vmatmul.mubr.bf16.gmra.mxu0 %v666
        %v2470 = vpop.f32.mrf.mxu0
        %v2471 = vadd.f32 0.0, %v2470
        %v2472 = vpop.f32.mrf.mxu0
        %v2473 = vadd.f32 0.0, %v2472
        %v2474 = vpop.f32.mrf.mxu0
        %v2475 = vadd.f32 0.0, %v2474
        %v2476 = vpop.f32.mrf.mxu0
        %v2477 = vadd.f32 0.0, %v2476
        %2478 = vmatprep.mubr.bf16.mxu0 %v673
        %2479 = vmatmul.mubr.bf16.gmra.mxu0 %v672
        %v2480 = vpop.f32.mrf.mxu0
        %v2481 = vadd.f32 0.0, %v2480
        %v2482 = vpop.f32.mrf.mxu0
        %v2483 = vadd.f32 0.0, %v2482
        %v2484 = vpop.f32.mrf.mxu0
        %v2485 = vadd.f32 0.0, %v2484
        %v2486 = vpop.f32.mrf.mxu0
        %v2487 = vadd.f32 0.0, %v2486
        %2488 = vdwg.mxu0
        %2489 = vmatprep.subr.bf16.mxu0 %v1685
        %2490 = vmatpush1.bf16.msra.mxu0 %v1684
        %2491 = vmatprep.subr.bf16.mxu0 %v1679
        %2492 = vmatpush1.bf16.msra.mxu0 %v1678
        %2493 = vmatprep.subr.bf16.mxu0 %v1673
        %2494 = vmatpush1.bf16.msra.mxu0 %v1672
        %2495 = vmatprep.subr.bf16.mxu0 %v1667
        %2496 = vmatpush1.bf16.msra.mxu0 %v1666
        %2497 = vmatprep.subr.bf16.mxu0 %v1661
        %2498 = vmatpush1.bf16.msra.mxu0 %v1660
        %2499 = vmatprep.subr.bf16.mxu0 %v1655
        %2500 = vmatpush1.bf16.msra.mxu0 %v1654
        %2501 = vmatprep.subr.bf16.mxu0 %v1649
        %2502 = vmatpush1.bf16.msra.mxu0 %v1648
        %2503 = vmatprep.subr.bf16.mxu0 %v1643
        %2504 = vmatpush1.bf16.msra.mxu0 %v1642
        %2505 = vmatprep.subr.bf16.mxu0 %v1733
        %2506 = vmatpush2.bf16.msra.mxu0 %v1732
        %2507 = vmatprep.subr.bf16.mxu0 %v1727
        %2508 = vmatpush2.bf16.msra.mxu0 %v1726
        %2509 = vmatprep.subr.bf16.mxu0 %v1721
        %2510 = vmatpush2.bf16.msra.mxu0 %v1720
        %2511 = vmatprep.subr.bf16.mxu0 %v1715
        %2512 = vmatpush2.bf16.msra.mxu0 %v1714
        %2513 = vmatprep.subr.bf16.mxu0 %v1709
        %2514 = vmatpush2.bf16.msra.mxu0 %v1708
        %2515 = vmatprep.subr.bf16.mxu0 %v1703
        %2516 = vmatpush2.bf16.msra.mxu0 %v1702
        %2517 = vmatprep.subr.bf16.mxu0 %v1697
        %2518 = vmatpush2.bf16.msra.mxu0 %v1696
        %2519 = vmatprep.subr.bf16.mxu0 %v1691
        %2520 = vmatpush2.bf16.msra.mxu0 %v1690
        %2521 = vmatprep.mubr.bf16.mxu0 %v669
        %2522 = vmatmul.mubr.bf16.gmra.mxu0 %v668
        %v2523 = vpop.f32.mrf.mxu0
        %v2524 = vadd.f32 %v2471, %v2523
        %v2525 = vpop.f32.mrf.mxu0
        %v2526 = vadd.f32 %v2473, %v2525
        %v2527 = vpop.f32.mrf.mxu0
        %v2528 = vadd.f32 %v2475, %v2527
        %v2529 = vpop.f32.mrf.mxu0
        %v2530 = vadd.f32 %v2477, %v2529
        %2531 = vmatprep.mubr.bf16.mxu0 %v675
        %2532 = vmatmul.mubr.bf16.gmra.mxu0 %v674
        %v2533 = vpop.f32.mrf.mxu0
        %v2534 = vadd.f32 %v2481, %v2533
        %v2535 = vpop.f32.mrf.mxu0
        %v2536 = vadd.f32 %v2483, %v2535
        %v2537 = vpop.f32.mrf.mxu0
        %v2538 = vadd.f32 %v2485, %v2537
        %v2539 = vpop.f32.mrf.mxu0
        %v2540 = vadd.f32 %v2487, %v2539
        %2541 = vdwg.mxu0
        %2542 = vmatprep.subr.bf16.mxu0 %v1781
        %2543 = vmatpush1.bf16.msra.mxu0 %v1780
        %2544 = vmatprep.subr.bf16.mxu0 %v1775
        %2545 = vmatpush1.bf16.msra.mxu0 %v1774
        %2546 = vmatprep.subr.bf16.mxu0 %v1769
        %2547 = vmatpush1.bf16.msra.mxu0 %v1768
        %2548 = vmatprep.subr.bf16.mxu0 %v1763
        %2549 = vmatpush1.bf16.msra.mxu0 %v1762
        %2550 = vmatprep.subr.bf16.mxu0 %v1757
        %2551 = vmatpush1.bf16.msra.mxu0 %v1756
        %2552 = vmatprep.subr.bf16.mxu0 %v1751
        %2553 = vmatpush1.bf16.msra.mxu0 %v1750
        %2554 = vmatprep.subr.bf16.mxu0 %v1745
        %2555 = vmatpush1.bf16.msra.mxu0 %v1744
        %2556 = vmatprep.subr.bf16.mxu0 %v1739
        %2557 = vmatpush1.bf16.msra.mxu0 %v1738
        %2558 = vmatprep.subr.bf16.mxu0 %v1829
        %2559 = vmatpush2.bf16.msra.mxu0 %v1828
        %2560 = vmatprep.subr.bf16.mxu0 %v1823
        %2561 = vmatpush2.bf16.msra.mxu0 %v1822
        %2562 = vmatprep.subr.bf16.mxu0 %v1817
        %2563 = vmatpush2.bf16.msra.mxu0 %v1816
        %2564 = vmatprep.subr.bf16.mxu0 %v1811
        %2565 = vmatpush2.bf16.msra.mxu0 %v1810
        %2566 = vmatprep.subr.bf16.mxu0 %v1805
        %2567 = vmatpush2.bf16.msra.mxu0 %v1804
        %2568 = vmatprep.subr.bf16.mxu0 %v1799
        %2569 = vmatpush2.bf16.msra.mxu0 %v1798
        %2570 = vmatprep.subr.bf16.mxu0 %v1793
        %2571 = vmatpush2.bf16.msra.mxu0 %v1792
        %2572 = vmatprep.subr.bf16.mxu0 %v1787
        %2573 = vmatpush2.bf16.msra.mxu0 %v1786
        %2574 = vmatprep.mubr.bf16.mxu0 %v671
        %2575 = vmatmul.mubr.bf16.gmra.mxu0 %v670
        %v2576 = vpop.f32.mrf.mxu0
        %v2577 = vadd.f32 %v2524, %v2576
        %v2578 = vpop.f32.mrf.mxu0
        %v2579 = vadd.f32 %v2526, %v2578
        %v2580 = vpop.f32.mrf.mxu0
        %v2581 = vadd.f32 %v2528, %v2580
        %v2582 = vpop.f32.mrf.mxu0
        %v2583 = vadd.f32 %v2530, %v2582
        %2584 = vmatprep.mubr.bf16.mxu0 %v677
        %2585 = vmatmul.mubr.bf16.gmra.mxu0 %v676
        %v2586 = vpop.f32.mrf.mxu0
        %v2587 = vadd.f32 %v2534, %v2586
        %v2588 = vpop.f32.mrf.mxu0
        %v2589 = vadd.f32 %v2536, %v2588
        %v2590 = vpop.f32.mrf.mxu0
        %v2591 = vadd.f32 %v2538, %v2590
        %v2592 = vpop.f32.mrf.mxu0
        %v2593 = vadd.f32 %v2540, %v2592
        %2594 = vdwg.mxu0
        %v2595 = vtanh.pop %v2259
        %v2596 = vtanh.pop %v2261
        %v2597 = vtanh.pop %v2418
        %v2598 = vtanh.pop %v2420
        %v2599 = vtanh.pop %v2577
        %v2600 = vtanh.pop %v2579
        %v2601 = vtanh.pop %v2263
        %v2602 = vtanh.pop %v2265
        %v2603 = vtanh.pop %v2422
        %v2604 = vtanh.pop %v2424
        %v2605 = vtanh.pop %v2581
        %v2606 = vtanh.pop %v2583
        %v2607 = vtanh.pop %v2269
        %v2608 = vtanh.pop %v2271
        %v2609 = vtanh.pop %v2428
        %v2610 = vtanh.pop %v2430
        %v2611 = vtanh.pop %v2587
        %v2612 = vtanh.pop %v2589
        %v2613 = vtanh.pop %v2273
        %v2614 = vtanh.pop %v2275
        %v2615 = vtanh.pop %v2432
        %v2616 = vtanh.pop %v2434
        %v2617 = vtanh.pop %v2591
        %v2618 = vtanh.pop %v2593
        %v2619 = vpack.c.bf16 %v2595, %v2595
        %v2620 = vpack.c.bf16 %v2596, %v2596
        %v2621 = vpack.c.bf16 %v2597, %v2597
        %v2622 = vpack.c.bf16 %v2598, %v2598
        %v2623 = vpack.c.bf16 %v2599, %v2599
        %v2624 = vpack.c.bf16 %v2600, %v2600
        %v2625 = vpack.c.bf16 %v2601, %v2601
        %v2626 = vpack.c.bf16 %v2602, %v2602
        %v2627 = vpack.c.bf16 %v2603, %v2603
        %v2628 = vpack.c.bf16 %v2604, %v2604
        %v2629 = vpack.c.bf16 %v2605, %v2605
        %v2630 = vpack.c.bf16 %v2606, %v2606
        %v2631 = vpack.c.bf16 %v2607, %v2607
        %v2632 = vpack.c.bf16 %v2608, %v2608
        %v2633 = vpack.c.bf16 %v2609, %v2609
        %v2634 = vpack.c.bf16 %v2610, %v2610
        %v2635 = vpack.c.bf16 %v2611, %v2611
        %v2636 = vpack.c.bf16 %v2612, %v2612
        %v2637 = vpack.c.bf16 %v2613, %v2613
        %v2638 = vpack.c.bf16 %v2614, %v2614
        %v2639 = vpack.c.bf16 %v2615, %v2615
        %v2640 = vpack.c.bf16 %v2616, %v2616
        %v2641 = vpack.c.bf16 %v2617, %v2617
        %v2642 = vpack.c.bf16 %v2618, %v2618
        %v2646 = vunpack.c.l.b16 %v342
        %v2647 = vunpack.c.h.b16 %v342
        %v2648 = vunpack.c.l.b16 %v343
        %v2649 = vunpack.c.h.b16 %v343
        %v2650 = vunpack.c.l.b16 %v344
        %v2651 = vunpack.c.h.b16 %v344
        %v2652 = vpack.c.b16 %v2646, %v2646
        %v2653 = vpack.c.b16 %v2647, %v2647
        %v2654 = vpack.c.b16 %v2648, %v2648
        %v2655 = vpack.c.b16 %v2649, %v2649
        %v2656 = vpack.c.b16 %v2650, %v2650
        %v2657 = vpack.c.b16 %v2651, %v2651
        %2664 = vmatprep.subr.bf16.mxu0 0
        %2665 = vmatpush1.bf16.xpose.msra.mxu0 0
        %2666 = vmatprep.subr.bf16.mxu0 0
        %2667 = vmatpush1.bf16.xpose.msra.mxu0 0
        %2668 = vmatprep.subr.bf16.mxu0 0
        %2669 = vmatpush1.bf16.xpose.msra.mxu0 0
        %2670 = vmatprep.subr.bf16.mxu0 0
        %2671 = vmatpush1.bf16.xpose.msra.mxu0 0
        %2672 = vmatprep.subr.bf16.mxu0 0
        %2673 = vmatpush1.bf16.xpose.msra.mxu0 0
        %2674 = vmatprep.subr.bf16.mxu0 0
        %2675 = vmatpush1.bf16.xpose.msra.mxu0 0
        %2676 = vmatprep.subr.bf16.mxu0 0
        %2677 = vmatpush1.bf16.xpose.msra.mxu0 0
        %2678 = vmatprep.subr.bf16.mxu0 %v2620
        %2679 = vmatpush1.bf16.xpose.msra.mxu0 %v2619
        %2680 = vmatprep.subr.bf16.mxu0 0
        %2681 = vmatpush2.bf16.xpose.msra.mxu0 0
        %2682 = vmatprep.subr.bf16.mxu0 0
        %2683 = vmatpush2.bf16.xpose.msra.mxu0 0
        %2684 = vmatprep.subr.bf16.mxu0 0
        %2685 = vmatpush2.bf16.xpose.msra.mxu0 0
        %2686 = vmatprep.subr.bf16.mxu0 0
        %2687 = vmatpush2.bf16.xpose.msra.mxu0 0
        %2688 = vmatprep.subr.bf16.mxu0 0
        %2689 = vmatpush2.bf16.xpose.msra.mxu0 0
        %2690 = vmatprep.subr.bf16.mxu0 0
        %2691 = vmatpush2.bf16.xpose.msra.mxu0 0
        %2692 = vmatprep.subr.bf16.mxu0 0
        %2693 = vmatpush2.bf16.xpose.msra.mxu0 0
        %2694 = vmatprep.subr.bf16.mxu0 0
        %2695 = vmatpush2.bf16.xpose.msra.mxu0 0
        %2696 = vmatprep.mubr.bf16.mxu0 %v2653
        %2697 = vmatmul.mubr.bf16.gmra.mxu0 %v2652
        %v2698 = vpop.f32.mrf.mxu0
        %v2699 = vadd.f32 0.0, %v2698
        %v2700 = vpop.f32.mrf.mxu0
        %v2701 = vpop.f32.mrf.mxu0
        %v2702 = vpop.f32.mrf.mxu0
        %2703 = vdwg.mxu0
        %2704 = vmatprep.subr.bf16.mxu0 0
        %2705 = vmatpush1.bf16.xpose.msra.mxu0 0
        %2706 = vmatprep.subr.bf16.mxu0 0
        %2707 = vmatpush1.bf16.xpose.msra.mxu0 0
        %2708 = vmatprep.subr.bf16.mxu0 0
        %2709 = vmatpush1.bf16.xpose.msra.mxu0 0
        %2710 = vmatprep.subr.bf16.mxu0 0
        %2711 = vmatpush1.bf16.xpose.msra.mxu0 0
        %2712 = vmatprep.subr.bf16.mxu0 0
        %2713 = vmatpush1.bf16.xpose.msra.mxu0 0
        %2714 = vmatprep.subr.bf16.mxu0 0
        %2715 = vmatpush1.bf16.xpose.msra.mxu0 0
        %2716 = vmatprep.subr.bf16.mxu0 0
        %2717 = vmatpush1.bf16.xpose.msra.mxu0 0
        %2718 = vmatprep.subr.bf16.mxu0 %v2622
        %2719 = vmatpush1.bf16.xpose.msra.mxu0 %v2621
        %2720 = vmatprep.subr.bf16.mxu0 0
        %2721 = vmatpush2.bf16.xpose.msra.mxu0 0
        %2722 = vmatprep.subr.bf16.mxu0 0
        %2723 = vmatpush2.bf16.xpose.msra.mxu0 0
        %2724 = vmatprep.subr.bf16.mxu0 0
        %2725 = vmatpush2.bf16.xpose.msra.mxu0 0
        %2726 = vmatprep.subr.bf16.mxu0 0
        %2727 = vmatpush2.bf16.xpose.msra.mxu0 0
        %2728 = vmatprep.subr.bf16.mxu0 0
        %2729 = vmatpush2.bf16.xpose.msra.mxu0 0
        %2730 = vmatprep.subr.bf16.mxu0 0
        %2731 = vmatpush2.bf16.xpose.msra.mxu0 0
        %2732 = vmatprep.subr.bf16.mxu0 0
        %2733 = vmatpush2.bf16.xpose.msra.mxu0 0
        %2734 = vmatprep.subr.bf16.mxu0 0
        %2735 = vmatpush2.bf16.xpose.msra.mxu0 0
        %2736 = vmatprep.mubr.bf16.mxu0 %v2655
        %2737 = vmatmul.mubr.bf16.gmra.mxu0 %v2654
        %v2738 = vpop.f32.mrf.mxu0
        %v2739 = vadd.f32 %v2699, %v2738
        %v2740 = vpop.f32.mrf.mxu0
        %v2741 = vpop.f32.mrf.mxu0
        %v2742 = vpop.f32.mrf.mxu0
        %2743 = vdwg.mxu0
        %2744 = vmatprep.subr.bf16.mxu0 0
        %2745 = vmatpush1.bf16.xpose.msra.mxu0 0
        %2746 = vmatprep.subr.bf16.mxu0 0
        %2747 = vmatpush1.bf16.xpose.msra.mxu0 0
        %2748 = vmatprep.subr.bf16.mxu0 0
        %2749 = vmatpush1.bf16.xpose.msra.mxu0 0
        %2750 = vmatprep.subr.bf16.mxu0 0
        %2751 = vmatpush1.bf16.xpose.msra.mxu0 0
        %2752 = vmatprep.subr.bf16.mxu0 0
        %2753 = vmatpush1.bf16.xpose.msra.mxu0 0
        %2754 = vmatprep.subr.bf16.mxu0 0
        %2755 = vmatpush1.bf16.xpose.msra.mxu0 0
        %2756 = vmatprep.subr.bf16.mxu0 0
        %2757 = vmatpush1.bf16.xpose.msra.mxu0 0
        %2758 = vmatprep.subr.bf16.mxu0 %v2624
        %2759 = vmatpush1.bf16.xpose.msra.mxu0 %v2623
        %2760 = vmatprep.subr.bf16.mxu0 0
        %2761 = vmatpush2.bf16.xpose.msra.mxu0 0
        %2762 = vmatprep.subr.bf16.mxu0 0
        %2763 = vmatpush2.bf16.xpose.msra.mxu0 0
        %2764 = vmatprep.subr.bf16.mxu0 0
        %2765 = vmatpush2.bf16.xpose.msra.mxu0 0
        %2766 = vmatprep.subr.bf16.mxu0 0
        %2767 = vmatpush2.bf16.xpose.msra.mxu0 0
        %2768 = vmatprep.subr.bf16.mxu0 0
        %2769 = vmatpush2.bf16.xpose.msra.mxu0 0
        %2770 = vmatprep.subr.bf16.mxu0 0
        %2771 = vmatpush2.bf16.xpose.msra.mxu0 0
        %2772 = vmatprep.subr.bf16.mxu0 0
        %2773 = vmatpush2.bf16.xpose.msra.mxu0 0
        %2774 = vmatprep.subr.bf16.mxu0 0
        %2775 = vmatpush2.bf16.xpose.msra.mxu0 0
        %2776 = vmatprep.mubr.bf16.mxu0 %v2657
        %2777 = vmatmul.mubr.bf16.gmra.mxu0 %v2656
        %v2778 = vpop.f32.mrf.mxu0
        %v2779 = vadd.f32 %v2739, %v2778
        %v2780 = vpop.f32.mrf.mxu0
        %v2781 = vpop.f32.mrf.mxu0
        %v2782 = vpop.f32.mrf.mxu0
        %2783 = vdwg.mxu0
        %v2787 = vunpack.c.l.b16 %v345
        %v2788 = vunpack.c.h.b16 %v345
        %v2789 = vunpack.c.l.b16 %v346
        %v2790 = vunpack.c.h.b16 %v346
        %v2791 = vunpack.c.l.b16 %v347
        %v2792 = vunpack.c.h.b16 %v347
        %v2793 = vpack.c.b16 %v2787, %v2787
        %v2794 = vpack.c.b16 %v2788, %v2788
        %v2795 = vpack.c.b16 %v2789, %v2789
        %v2796 = vpack.c.b16 %v2790, %v2790
        %v2797 = vpack.c.b16 %v2791, %v2791
        %v2798 = vpack.c.b16 %v2792, %v2792
        %2805 = vmatprep.subr.bf16.mxu0 0
        %2806 = vmatpush1.bf16.xpose.msra.mxu0 0
        %2807 = vmatprep.subr.bf16.mxu0 0
        %2808 = vmatpush1.bf16.xpose.msra.mxu0 0
        %2809 = vmatprep.subr.bf16.mxu0 0
        %2810 = vmatpush1.bf16.xpose.msra.mxu0 0
        %2811 = vmatprep.subr.bf16.mxu0 0
        %2812 = vmatpush1.bf16.xpose.msra.mxu0 0
        %2813 = vmatprep.subr.bf16.mxu0 0
        %2814 = vmatpush1.bf16.xpose.msra.mxu0 0
        %2815 = vmatprep.subr.bf16.mxu0 0
        %2816 = vmatpush1.bf16.xpose.msra.mxu0 0
        %2817 = vmatprep.subr.bf16.mxu0 0
        %2818 = vmatpush1.bf16.xpose.msra.mxu0 0
        %2819 = vmatprep.subr.bf16.mxu0 %v2626
        %2820 = vmatpush1.bf16.xpose.msra.mxu0 %v2625
        %2821 = vmatprep.subr.bf16.mxu0 0
        %2822 = vmatpush2.bf16.xpose.msra.mxu0 0
        %2823 = vmatprep.subr.bf16.mxu0 0
        %2824 = vmatpush2.bf16.xpose.msra.mxu0 0
        %2825 = vmatprep.subr.bf16.mxu0 0
        %2826 = vmatpush2.bf16.xpose.msra.mxu0 0
        %2827 = vmatprep.subr.bf16.mxu0 0
        %2828 = vmatpush2.bf16.xpose.msra.mxu0 0
        %2829 = vmatprep.subr.bf16.mxu0 0
        %2830 = vmatpush2.bf16.xpose.msra.mxu0 0
        %2831 = vmatprep.subr.bf16.mxu0 0
        %2832 = vmatpush2.bf16.xpose.msra.mxu0 0
        %2833 = vmatprep.subr.bf16.mxu0 0
        %2834 = vmatpush2.bf16.xpose.msra.mxu0 0
        %2835 = vmatprep.subr.bf16.mxu0 0
        %2836 = vmatpush2.bf16.xpose.msra.mxu0 0
        %2837 = vmatprep.mubr.bf16.mxu0 %v2794
        %2838 = vmatmul.mubr.bf16.gmra.mxu0 %v2793
        %v2839 = vpop.f32.mrf.mxu0
        %v2840 = vadd.f32 0.0, %v2839
        %v2841 = vpop.f32.mrf.mxu0
        %v2842 = vpop.f32.mrf.mxu0
        %v2843 = vpop.f32.mrf.mxu0
        %2844 = vdwg.mxu0
        %2845 = vmatprep.subr.bf16.mxu0 0
        %2846 = vmatpush1.bf16.xpose.msra.mxu0 0
        %2847 = vmatprep.subr.bf16.mxu0 0
        %2848 = vmatpush1.bf16.xpose.msra.mxu0 0
        %2849 = vmatprep.subr.bf16.mxu0 0
        %2850 = vmatpush1.bf16.xpose.msra.mxu0 0
        %2851 = vmatprep.subr.bf16.mxu0 0
        %2852 = vmatpush1.bf16.xpose.msra.mxu0 0
        %2853 = vmatprep.subr.bf16.mxu0 0
        %2854 = vmatpush1.bf16.xpose.msra.mxu0 0
        %2855 = vmatprep.subr.bf16.mxu0 0
        %2856 = vmatpush1.bf16.xpose.msra.mxu0 0
        %2857 = vmatprep.subr.bf16.mxu0 0
        %2858 = vmatpush1.bf16.xpose.msra.mxu0 0
        %2859 = vmatprep.subr.bf16.mxu0 %v2628
        %2860 = vmatpush1.bf16.xpose.msra.mxu0 %v2627
        %2861 = vmatprep.subr.bf16.mxu0 0
        %2862 = vmatpush2.bf16.xpose.msra.mxu0 0
        %2863 = vmatprep.subr.bf16.mxu0 0
        %2864 = vmatpush2.bf16.xpose.msra.mxu0 0
        %2865 = vmatprep.subr.bf16.mxu0 0
        %2866 = vmatpush2.bf16.xpose.msra.mxu0 0
        %2867 = vmatprep.subr.bf16.mxu0 0
        %2868 = vmatpush2.bf16.xpose.msra.mxu0 0
        %2869 = vmatprep.subr.bf16.mxu0 0
        %2870 = vmatpush2.bf16.xpose.msra.mxu0 0
        %2871 = vmatprep.subr.bf16.mxu0 0
        %2872 = vmatpush2.bf16.xpose.msra.mxu0 0
        %2873 = vmatprep.subr.bf16.mxu0 0
        %2874 = vmatpush2.bf16.xpose.msra.mxu0 0
        %2875 = vmatprep.subr.bf16.mxu0 0
        %2876 = vmatpush2.bf16.xpose.msra.mxu0 0
        %2877 = vmatprep.mubr.bf16.mxu0 %v2796
        %2878 = vmatmul.mubr.bf16.gmra.mxu0 %v2795
        %v2879 = vpop.f32.mrf.mxu0
        %v2880 = vadd.f32 %v2840, %v2879
        %v2881 = vpop.f32.mrf.mxu0
        %v2882 = vpop.f32.mrf.mxu0
        %v2883 = vpop.f32.mrf.mxu0
        %2884 = vdwg.mxu0
        %2885 = vmatprep.subr.bf16.mxu0 0
        %2886 = vmatpush1.bf16.xpose.msra.mxu0 0
        %2887 = vmatprep.subr.bf16.mxu0 0
        %2888 = vmatpush1.bf16.xpose.msra.mxu0 0
        %2889 = vmatprep.subr.bf16.mxu0 0
        %2890 = vmatpush1.bf16.xpose.msra.mxu0 0
        %2891 = vmatprep.subr.bf16.mxu0 0
        %2892 = vmatpush1.bf16.xpose.msra.mxu0 0
        %2893 = vmatprep.subr.bf16.mxu0 0
        %2894 = vmatpush1.bf16.xpose.msra.mxu0 0
        %2895 = vmatprep.subr.bf16.mxu0 0
        %2896 = vmatpush1.bf16.xpose.msra.mxu0 0
        %2897 = vmatprep.subr.bf16.mxu0 0
        %2898 = vmatpush1.bf16.xpose.msra.mxu0 0
        %2899 = vmatprep.subr.bf16.mxu0 %v2630
        %2900 = vmatpush1.bf16.xpose.msra.mxu0 %v2629
        %2901 = vmatprep.subr.bf16.mxu0 0
        %2902 = vmatpush2.bf16.xpose.msra.mxu0 0
        %2903 = vmatprep.subr.bf16.mxu0 0
        %2904 = vmatpush2.bf16.xpose.msra.mxu0 0
        %2905 = vmatprep.subr.bf16.mxu0 0
        %2906 = vmatpush2.bf16.xpose.msra.mxu0 0
        %2907 = vmatprep.subr.bf16.mxu0 0
        %2908 = vmatpush2.bf16.xpose.msra.mxu0 0
        %2909 = vmatprep.subr.bf16.mxu0 0
        %2910 = vmatpush2.bf16.xpose.msra.mxu0 0
        %2911 = vmatprep.subr.bf16.mxu0 0
        %2912 = vmatpush2.bf16.xpose.msra.mxu0 0
        %2913 = vmatprep.subr.bf16.mxu0 0
        %2914 = vmatpush2.bf16.xpose.msra.mxu0 0
        %2915 = vmatprep.subr.bf16.mxu0 0
        %2916 = vmatpush2.bf16.xpose.msra.mxu0 0
        %2917 = vmatprep.mubr.bf16.mxu0 %v2798
        %2918 = vmatmul.mubr.bf16.gmra.mxu0 %v2797
        %v2919 = vpop.f32.mrf.mxu0
        %v2920 = vadd.f32 %v2880, %v2919
        %v2921 = vpop.f32.mrf.mxu0
        %v2922 = vpop.f32.mrf.mxu0
        %v2923 = vpop.f32.mrf.mxu0
        %2924 = vdwg.mxu0
        %v2928 = vunpack.c.l.b16 %v348
        %v2929 = vunpack.c.h.b16 %v348
        %v2930 = vunpack.c.l.b16 %v349
        %v2931 = vunpack.c.h.b16 %v349
        %v2932 = vunpack.c.l.b16 %v350
        %v2933 = vunpack.c.h.b16 %v350
        %v2934 = vpack.c.b16 %v2928, %v2928
        %v2935 = vpack.c.b16 %v2929, %v2929
        %v2936 = vpack.c.b16 %v2930, %v2930
        %v2937 = vpack.c.b16 %v2931, %v2931
        %v2938 = vpack.c.b16 %v2932, %v2932
        %v2939 = vpack.c.b16 %v2933, %v2933
        %2946 = vmatprep.subr.bf16.mxu0 0
        %2947 = vmatpush1.bf16.xpose.msra.mxu0 0
        %2948 = vmatprep.subr.bf16.mxu0 0
        %2949 = vmatpush1.bf16.xpose.msra.mxu0 0
        %2950 = vmatprep.subr.bf16.mxu0 0
        %2951 = vmatpush1.bf16.xpose.msra.mxu0 0
        %2952 = vmatprep.subr.bf16.mxu0 0
        %2953 = vmatpush1.bf16.xpose.msra.mxu0 0
        %2954 = vmatprep.subr.bf16.mxu0 0
        %2955 = vmatpush1.bf16.xpose.msra.mxu0 0
        %2956 = vmatprep.subr.bf16.mxu0 0
        %2957 = vmatpush1.bf16.xpose.msra.mxu0 0
        %2958 = vmatprep.subr.bf16.mxu0 0
        %2959 = vmatpush1.bf16.xpose.msra.mxu0 0
        %2960 = vmatprep.subr.bf16.mxu0 %v2632
        %2961 = vmatpush1.bf16.xpose.msra.mxu0 %v2631
        %2962 = vmatprep.subr.bf16.mxu0 0
        %2963 = vmatpush2.bf16.xpose.msra.mxu0 0
        %2964 = vmatprep.subr.bf16.mxu0 0
        %2965 = vmatpush2.bf16.xpose.msra.mxu0 0
        %2966 = vmatprep.subr.bf16.mxu0 0
        %2967 = vmatpush2.bf16.xpose.msra.mxu0 0
        %2968 = vmatprep.subr.bf16.mxu0 0
        %2969 = vmatpush2.bf16.xpose.msra.mxu0 0
        %2970 = vmatprep.subr.bf16.mxu0 0
        %2971 = vmatpush2.bf16.xpose.msra.mxu0 0
        %2972 = vmatprep.subr.bf16.mxu0 0
        %2973 = vmatpush2.bf16.xpose.msra.mxu0 0
        %2974 = vmatprep.subr.bf16.mxu0 0
        %2975 = vmatpush2.bf16.xpose.msra.mxu0 0
        %2976 = vmatprep.subr.bf16.mxu0 0
        %2977 = vmatpush2.bf16.xpose.msra.mxu0 0
        %2978 = vmatprep.mubr.bf16.mxu0 %v2935
        %2979 = vmatmul.mubr.bf16.gmra.mxu0 %v2934
        %v2980 = vpop.f32.mrf.mxu0
        %v2981 = vadd.f32 0.0, %v2980
        %v2982 = vpop.f32.mrf.mxu0
        %v2983 = vpop.f32.mrf.mxu0
        %v2984 = vpop.f32.mrf.mxu0
        %2985 = vdwg.mxu0
        %2986 = vmatprep.subr.bf16.mxu0 0
        %2987 = vmatpush1.bf16.xpose.msra.mxu0 0
        %2988 = vmatprep.subr.bf16.mxu0 0
        %2989 = vmatpush1.bf16.xpose.msra.mxu0 0
        %2990 = vmatprep.subr.bf16.mxu0 0
        %2991 = vmatpush1.bf16.xpose.msra.mxu0 0
        %2992 = vmatprep.subr.bf16.mxu0 0
        %2993 = vmatpush1.bf16.xpose.msra.mxu0 0
        %2994 = vmatprep.subr.bf16.mxu0 0
        %2995 = vmatpush1.bf16.xpose.msra.mxu0 0
        %2996 = vmatprep.subr.bf16.mxu0 0
        %2997 = vmatpush1.bf16.xpose.msra.mxu0 0
        %2998 = vmatprep.subr.bf16.mxu0 0
        %2999 = vmatpush1.bf16.xpose.msra.mxu0 0
        %3000 = vmatprep.subr.bf16.mxu0 %v2634
        %3001 = vmatpush1.bf16.xpose.msra.mxu0 %v2633
        %3002 = vmatprep.subr.bf16.mxu0 0
        %3003 = vmatpush2.bf16.xpose.msra.mxu0 0
        %3004 = vmatprep.subr.bf16.mxu0 0
        %3005 = vmatpush2.bf16.xpose.msra.mxu0 0
        %3006 = vmatprep.subr.bf16.mxu0 0
        %3007 = vmatpush2.bf16.xpose.msra.mxu0 0
        %3008 = vmatprep.subr.bf16.mxu0 0
        %3009 = vmatpush2.bf16.xpose.msra.mxu0 0
        %3010 = vmatprep.subr.bf16.mxu0 0
        %3011 = vmatpush2.bf16.xpose.msra.mxu0 0
        %3012 = vmatprep.subr.bf16.mxu0 0
        %3013 = vmatpush2.bf16.xpose.msra.mxu0 0
        %3014 = vmatprep.subr.bf16.mxu0 0
        %3015 = vmatpush2.bf16.xpose.msra.mxu0 0
        %3016 = vmatprep.subr.bf16.mxu0 0
        %3017 = vmatpush2.bf16.xpose.msra.mxu0 0
        %3018 = vmatprep.mubr.bf16.mxu0 %v2937
        %3019 = vmatmul.mubr.bf16.gmra.mxu0 %v2936
        %v3020 = vpop.f32.mrf.mxu0
        %v3021 = vadd.f32 %v2981, %v3020
        %v3022 = vpop.f32.mrf.mxu0
        %v3023 = vpop.f32.mrf.mxu0
        %v3024 = vpop.f32.mrf.mxu0
        %3025 = vdwg.mxu0
        %3026 = vmatprep.subr.bf16.mxu0 0
        %3027 = vmatpush1.bf16.xpose.msra.mxu0 0
        %3028 = vmatprep.subr.bf16.mxu0 0
        %3029 = vmatpush1.bf16.xpose.msra.mxu0 0
        %3030 = vmatprep.subr.bf16.mxu0 0
        %3031 = vmatpush1.bf16.xpose.msra.mxu0 0
        %3032 = vmatprep.subr.bf16.mxu0 0
        %3033 = vmatpush1.bf16.xpose.msra.mxu0 0
        %3034 = vmatprep.subr.bf16.mxu0 0
        %3035 = vmatpush1.bf16.xpose.msra.mxu0 0
        %3036 = vmatprep.subr.bf16.mxu0 0
        %3037 = vmatpush1.bf16.xpose.msra.mxu0 0
        %3038 = vmatprep.subr.bf16.mxu0 0
        %3039 = vmatpush1.bf16.xpose.msra.mxu0 0
        %3040 = vmatprep.subr.bf16.mxu0 %v2636
        %3041 = vmatpush1.bf16.xpose.msra.mxu0 %v2635
        %3042 = vmatprep.subr.bf16.mxu0 0
        %3043 = vmatpush2.bf16.xpose.msra.mxu0 0
        %3044 = vmatprep.subr.bf16.mxu0 0
        %3045 = vmatpush2.bf16.xpose.msra.mxu0 0
        %3046 = vmatprep.subr.bf16.mxu0 0
        %3047 = vmatpush2.bf16.xpose.msra.mxu0 0
        %3048 = vmatprep.subr.bf16.mxu0 0
        %3049 = vmatpush2.bf16.xpose.msra.mxu0 0
        %3050 = vmatprep.subr.bf16.mxu0 0
        %3051 = vmatpush2.bf16.xpose.msra.mxu0 0
        %3052 = vmatprep.subr.bf16.mxu0 0
        %3053 = vmatpush2.bf16.xpose.msra.mxu0 0
        %3054 = vmatprep.subr.bf16.mxu0 0
        %3055 = vmatpush2.bf16.xpose.msra.mxu0 0
        %3056 = vmatprep.subr.bf16.mxu0 0
        %3057 = vmatpush2.bf16.xpose.msra.mxu0 0
        %3058 = vmatprep.mubr.bf16.mxu0 %v2939
        %3059 = vmatmul.mubr.bf16.gmra.mxu0 %v2938
        %v3060 = vpop.f32.mrf.mxu0
        %v3061 = vadd.f32 %v3021, %v3060
        %v3062 = vpop.f32.mrf.mxu0
        %v3063 = vpop.f32.mrf.mxu0
        %v3064 = vpop.f32.mrf.mxu0
        %3065 = vdwg.mxu0
        %v3069 = vunpack.c.l.b16 %v351
        %v3070 = vunpack.c.h.b16 %v351
        %v3071 = vunpack.c.l.b16 %v352
        %v3072 = vunpack.c.h.b16 %v352
        %v3073 = vunpack.c.l.b16 %v353
        %v3074 = vunpack.c.h.b16 %v353
        %v3075 = vpack.c.b16 %v3069, %v3069
        %v3076 = vpack.c.b16 %v3070, %v3070
        %v3077 = vpack.c.b16 %v3071, %v3071
        %v3078 = vpack.c.b16 %v3072, %v3072
        %v3079 = vpack.c.b16 %v3073, %v3073
        %v3080 = vpack.c.b16 %v3074, %v3074
        %3087 = vmatprep.subr.bf16.mxu0 0
        %3088 = vmatpush1.bf16.xpose.msra.mxu0 0
        %3089 = vmatprep.subr.bf16.mxu0 0
        %3090 = vmatpush1.bf16.xpose.msra.mxu0 0
        %3091 = vmatprep.subr.bf16.mxu0 0
        %3092 = vmatpush1.bf16.xpose.msra.mxu0 0
        %3093 = vmatprep.subr.bf16.mxu0 0
        %3094 = vmatpush1.bf16.xpose.msra.mxu0 0
        %3095 = vmatprep.subr.bf16.mxu0 0
        %3096 = vmatpush1.bf16.xpose.msra.mxu0 0
        %3097 = vmatprep.subr.bf16.mxu0 0
        %3098 = vmatpush1.bf16.xpose.msra.mxu0 0
        %3099 = vmatprep.subr.bf16.mxu0 0
        %3100 = vmatpush1.bf16.xpose.msra.mxu0 0
        %3101 = vmatprep.subr.bf16.mxu0 %v2638
        %3102 = vmatpush1.bf16.xpose.msra.mxu0 %v2637
        %3103 = vmatprep.subr.bf16.mxu0 0
        %3104 = vmatpush2.bf16.xpose.msra.mxu0 0
        %3105 = vmatprep.subr.bf16.mxu0 0
        %3106 = vmatpush2.bf16.xpose.msra.mxu0 0
        %3107 = vmatprep.subr.bf16.mxu0 0
        %3108 = vmatpush2.bf16.xpose.msra.mxu0 0
        %3109 = vmatprep.subr.bf16.mxu0 0
        %3110 = vmatpush2.bf16.xpose.msra.mxu0 0
        %3111 = vmatprep.subr.bf16.mxu0 0
        %3112 = vmatpush2.bf16.xpose.msra.mxu0 0
        %3113 = vmatprep.subr.bf16.mxu0 0
        %3114 = vmatpush2.bf16.xpose.msra.mxu0 0
        %3115 = vmatprep.subr.bf16.mxu0 0
        %3116 = vmatpush2.bf16.xpose.msra.mxu0 0
        %3117 = vmatprep.subr.bf16.mxu0 0
        %3118 = vmatpush2.bf16.xpose.msra.mxu0 0
        %3119 = vmatprep.mubr.bf16.mxu0 %v3076
        %3120 = vmatmul.mubr.bf16.gmra.mxu0 %v3075
        %v3121 = vpop.f32.mrf.mxu0
        %v3122 = vadd.f32 0.0, %v3121
        %v3123 = vpop.f32.mrf.mxu0
        %v3124 = vpop.f32.mrf.mxu0
        %v3125 = vpop.f32.mrf.mxu0
        %3126 = vdwg.mxu0
        %3127 = vmatprep.subr.bf16.mxu0 0
        %3128 = vmatpush1.bf16.xpose.msra.mxu0 0
        %3129 = vmatprep.subr.bf16.mxu0 0
        %3130 = vmatpush1.bf16.xpose.msra.mxu0 0
        %3131 = vmatprep.subr.bf16.mxu0 0
        %3132 = vmatpush1.bf16.xpose.msra.mxu0 0
        %3133 = vmatprep.subr.bf16.mxu0 0
        %3134 = vmatpush1.bf16.xpose.msra.mxu0 0
        %3135 = vmatprep.subr.bf16.mxu0 0
        %3136 = vmatpush1.bf16.xpose.msra.mxu0 0
        %3137 = vmatprep.subr.bf16.mxu0 0
        %3138 = vmatpush1.bf16.xpose.msra.mxu0 0
        %3139 = vmatprep.subr.bf16.mxu0 0
        %3140 = vmatpush1.bf16.xpose.msra.mxu0 0
        %3141 = vmatprep.subr.bf16.mxu0 %v2640
        %3142 = vmatpush1.bf16.xpose.msra.mxu0 %v2639
        %3143 = vmatprep.subr.bf16.mxu0 0
        %3144 = vmatpush2.bf16.xpose.msra.mxu0 0
        %3145 = vmatprep.subr.bf16.mxu0 0
        %3146 = vmatpush2.bf16.xpose.msra.mxu0 0
        %3147 = vmatprep.subr.bf16.mxu0 0
        %3148 = vmatpush2.bf16.xpose.msra.mxu0 0
        %3149 = vmatprep.subr.bf16.mxu0 0
        %3150 = vmatpush2.bf16.xpose.msra.mxu0 0
        %3151 = vmatprep.subr.bf16.mxu0 0
        %3152 = vmatpush2.bf16.xpose.msra.mxu0 0
        %3153 = vmatprep.subr.bf16.mxu0 0
        %3154 = vmatpush2.bf16.xpose.msra.mxu0 0
        %3155 = vmatprep.subr.bf16.mxu0 0
        %3156 = vmatpush2.bf16.xpose.msra.mxu0 0
        %3157 = vmatprep.subr.bf16.mxu0 0
        %3158 = vmatpush2.bf16.xpose.msra.mxu0 0
        %3159 = vmatprep.mubr.bf16.mxu0 %v3078
        %3160 = vmatmul.mubr.bf16.gmra.mxu0 %v3077
        %v3161 = vpop.f32.mrf.mxu0
        %v3162 = vadd.f32 %v3122, %v3161
        %v3163 = vpop.f32.mrf.mxu0
        %v3164 = vpop.f32.mrf.mxu0
        %v3165 = vpop.f32.mrf.mxu0
        %3166 = vdwg.mxu0
        %3167 = vmatprep.subr.bf16.mxu0 0
        %3168 = vmatpush1.bf16.xpose.msra.mxu0 0
        %3169 = vmatprep.subr.bf16.mxu0 0
        %3170 = vmatpush1.bf16.xpose.msra.mxu0 0
        %3171 = vmatprep.subr.bf16.mxu0 0
        %3172 = vmatpush1.bf16.xpose.msra.mxu0 0
        %3173 = vmatprep.subr.bf16.mxu0 0
        %3174 = vmatpush1.bf16.xpose.msra.mxu0 0
        %3175 = vmatprep.subr.bf16.mxu0 0
        %3176 = vmatpush1.bf16.xpose.msra.mxu0 0
        %3177 = vmatprep.subr.bf16.mxu0 0
        %3178 = vmatpush1.bf16.xpose.msra.mxu0 0
        %3179 = vmatprep.subr.bf16.mxu0 0
        %3180 = vmatpush1.bf16.xpose.msra.mxu0 0
        %3181 = vmatprep.subr.bf16.mxu0 %v2642
        %3182 = vmatpush1.bf16.xpose.msra.mxu0 %v2641
        %3183 = vmatprep.subr.bf16.mxu0 0
        %3184 = vmatpush2.bf16.xpose.msra.mxu0 0
        %3185 = vmatprep.subr.bf16.mxu0 0
        %3186 = vmatpush2.bf16.xpose.msra.mxu0 0
        %3187 = vmatprep.subr.bf16.mxu0 0
        %3188 = vmatpush2.bf16.xpose.msra.mxu0 0
        %3189 = vmatprep.subr.bf16.mxu0 0
        %3190 = vmatpush2.bf16.xpose.msra.mxu0 0
        %3191 = vmatprep.subr.bf16.mxu0 0
        %3192 = vmatpush2.bf16.xpose.msra.mxu0 0
        %3193 = vmatprep.subr.bf16.mxu0 0
        %3194 = vmatpush2.bf16.xpose.msra.mxu0 0
        %3195 = vmatprep.subr.bf16.mxu0 0
        %3196 = vmatpush2.bf16.xpose.msra.mxu0 0
        %3197 = vmatprep.subr.bf16.mxu0 0
        %3198 = vmatpush2.bf16.xpose.msra.mxu0 0
        %3199 = vmatprep.mubr.bf16.mxu0 %v3080
        %3200 = vmatmul.mubr.bf16.gmra.mxu0 %v3079
        %v3201 = vpop.f32.mrf.mxu0
        %v3202 = vadd.f32 %v3162, %v3201
        %v3203 = vpop.f32.mrf.mxu0
        %v3204 = vpop.f32.mrf.mxu0
        %v3205 = vpop.f32.mrf.mxu0
        %3206 = vdwg.mxu0
        %vm3207 = vcmask 64512
        %v3208 = vsel %vm3207, %v2779, -inf
        %3209 = vmax.xlane.f32.xlu0 %v3208
        %v3210 = vpop.xlane.xlu0 %3209
        %v3211 = vsel %vm3207, %v2920, -inf
        %3212 = vmax.xlane.f32.xlu0 %v3211
        %v3213 = vpop.xlane.xlu0 %3212
        %v3214 = vsel %vm3207, %v3061, -inf
        %3215 = vmax.xlane.f32.xlu0 %v3214
        %v3216 = vpop.xlane.xlu0 %3215
        %v3217 = vsel %vm3207, %v3202, -inf
        %3218 = vmax.xlane.f32.xlu0 %v3217
        %v3219 = vpop.xlane.xlu0 %3218
        %v3220 = vsub.f32 %v2779, %v3210
        %v3221 = vsub.f32 %v2920, %v3213
        %v3222 = vsub.f32 %v3061, %v3216
        %v3223 = vsub.f32 %v3202, %v3219
        %v3224 = vmul.f32 %v3220, 1.442695
        %v3225 = vpow.pop %v3224
        %v3226 = vmul.f32 %v3221, 1.442695
        %v3227 = vpow.pop %v3226
        %v3228 = vmul.f32 %v3222, 1.442695
        %v3229 = vpow.pop %v3228
        %v3230 = vmul.f32 %v3223, 1.442695
        %v3231 = vpow.pop %v3230
        %v3232 = vsel %vm3207, %v3225, 0.0
        %3233 = vadd.xlane.f32.xlu0 %v3232
        %v3234 = vpop.xlane.xlu0 %3233
        %v3235 = vsel %vm3207, %v3227, 0.0
        %3236 = vadd.xlane.f32.xlu0 %v3235
        %v3237 = vpop.xlane.xlu0 %3236
        %v3238 = vsel %vm3207, %v3229, 0.0
        %3239 = vadd.xlane.f32.xlu0 %v3238
        %v3240 = vpop.xlane.xlu0 %3239
        %v3241 = vsel %vm3207, %v3231, 0.0
        %3242 = vadd.xlane.f32.xlu0 %v3241
        %v3243 = vpop.xlane.xlu0 %3242
        %v3244 = vrcp.pop %v3234
        %v3245 = vrcp.pop %v3237
        %v3246 = vrcp.pop %v3240
        %v3247 = vrcp.pop %v3243
        %v3248 = vmul.f32 %v3225, %v3244
        %v3249 = vmul.f32 %v3227, %v3245
        %v3250 = vmul.f32 %v3229, %v3246
        %v3251 = vmul.f32 %v3231, %v3247
        %v3252 = vpack.c.bf16 %v3248, %v3248
        %v3253 = vpack.c.bf16 %v3249, %v3249
        %v3254 = vpack.c.bf16 %v3250, %v3250
        %v3255 = vpack.c.bf16 %v3251, %v3251
        %v3259 = vunpack.c.l.b16 %v330
        %v3260 = vunpack.c.h.b16 %v330
        %v3261 = vunpack.c.l.b16 %v331
        %v3262 = vunpack.c.h.b16 %v331
        %v3263 = vunpack.c.l.b16 %v332
        %v3264 = vunpack.c.h.b16 %v332
        %v3265 = vpack.c.b16 %v3259, %v3259
        %v3266 = vpack.c.b16 %v3260, %v3260
        %v3267 = vpack.c.b16 %v3261, %v3261
        %v3268 = vpack.c.b16 %v3262, %v3262
        %v3269 = vpack.c.b16 %v3263, %v3263
        %v3270 = vpack.c.b16 %v3264, %v3264
        %v3272 = vsel %vm3207, %v3252, 0
        %vm3274 = vcmask 1043456
        %v3276 = vsel %vm3274, %v3265, 0
        %v3279 = vsel %vm3274, %v3266, 0
        %v3282 = vsel %vm3274, %v3267, 0
        %v3285 = vsel %vm3274, %v3268, 0
        %v3288 = vsel %vm3274, %v3269, 0
        %v3291 = vsel %vm3274, %v3270, 0
        %3293 = vmatprep.subr.bf16.mxu0 0
        %3294 = vmatpush1.bf16.msra.mxu0 0
        %3295 = vmatprep.subr.bf16.mxu0 0
        %3296 = vmatpush1.bf16.msra.mxu0 0
        %3297 = vmatprep.subr.bf16.mxu0 0
        %3298 = vmatpush1.bf16.msra.mxu0 0
        %3299 = vmatprep.subr.bf16.mxu0 0
        %3300 = vmatpush1.bf16.msra.mxu0 0
        %3301 = vmatprep.subr.bf16.mxu0 0
        %3302 = vmatpush1.bf16.msra.mxu0 0
        %3303 = vmatprep.subr.bf16.mxu0 0
        %3304 = vmatpush1.bf16.msra.mxu0 0
        %3305 = vmatprep.subr.bf16.mxu0 0
        %3306 = vmatpush1.bf16.msra.mxu0 0
        %3307 = vmatprep.subr.bf16.mxu0 %v3279
        %3308 = vmatpush1.bf16.msra.mxu0 %v3276
        %3309 = vmatprep.subr.bf16.mxu0 0
        %3310 = vmatpush2.bf16.msra.mxu0 0
        %3311 = vmatprep.subr.bf16.mxu0 0
        %3312 = vmatpush2.bf16.msra.mxu0 0
        %3313 = vmatprep.subr.bf16.mxu0 0
        %3314 = vmatpush2.bf16.msra.mxu0 0
        %3315 = vmatprep.subr.bf16.mxu0 0
        %3316 = vmatpush2.bf16.msra.mxu0 0
        %3317 = vmatprep.subr.bf16.mxu0 0
        %3318 = vmatpush2.bf16.msra.mxu0 0
        %3319 = vmatprep.subr.bf16.mxu0 0
        %3320 = vmatpush2.bf16.msra.mxu0 0
        %3321 = vmatprep.subr.bf16.mxu0 0
        %3322 = vmatpush2.bf16.msra.mxu0 0
        %3323 = vmatprep.subr.bf16.mxu0 0
        %3324 = vmatpush2.bf16.msra.mxu0 0
        %3325 = vmatprep.mubr.bf16.mxu0 0
        %3326 = vmatmul.mubr.bf16.gmra.mxu0 %v3272
        %v3327 = vpop.f32.mrf.mxu0
        %v3328 = vadd.f32 0.0, %v3327
        %v3329 = vpop.f32.mrf.mxu0
        %v3330 = vadd.f32 0.0, %v3329
        %v3331 = vpop.f32.mrf.mxu0
        %v3332 = vpop.f32.mrf.mxu0
        %3333 = vdwg.mxu0
        %3334 = vmatprep.subr.bf16.mxu0 0
        %3335 = vmatpush1.bf16.msra.mxu0 0
        %3336 = vmatprep.subr.bf16.mxu0 0
        %3337 = vmatpush1.bf16.msra.mxu0 0
        %3338 = vmatprep.subr.bf16.mxu0 0
        %3339 = vmatpush1.bf16.msra.mxu0 0
        %3340 = vmatprep.subr.bf16.mxu0 0
        %3341 = vmatpush1.bf16.msra.mxu0 0
        %3342 = vmatprep.subr.bf16.mxu0 0
        %3343 = vmatpush1.bf16.msra.mxu0 0
        %3344 = vmatprep.subr.bf16.mxu0 0
        %3345 = vmatpush1.bf16.msra.mxu0 0
        %3346 = vmatprep.subr.bf16.mxu0 0
        %3347 = vmatpush1.bf16.msra.mxu0 0
        %3348 = vmatprep.subr.bf16.mxu0 %v3285
        %3349 = vmatpush1.bf16.msra.mxu0 %v3282
        %3350 = vmatprep.subr.bf16.mxu0 0
        %3351 = vmatpush2.bf16.msra.mxu0 0
        %3352 = vmatprep.subr.bf16.mxu0 0
        %3353 = vmatpush2.bf16.msra.mxu0 0
        %3354 = vmatprep.subr.bf16.mxu0 0
        %3355 = vmatpush2.bf16.msra.mxu0 0
        %3356 = vmatprep.subr.bf16.mxu0 0
        %3357 = vmatpush2.bf16.msra.mxu0 0
        %3358 = vmatprep.subr.bf16.mxu0 0
        %3359 = vmatpush2.bf16.msra.mxu0 0
        %3360 = vmatprep.subr.bf16.mxu0 0
        %3361 = vmatpush2.bf16.msra.mxu0 0
        %3362 = vmatprep.subr.bf16.mxu0 0
        %3363 = vmatpush2.bf16.msra.mxu0 0
        %3364 = vmatprep.subr.bf16.mxu0 0
        %3365 = vmatpush2.bf16.msra.mxu0 0
        %3366 = vmatprep.mubr.bf16.mxu0 0
        %3367 = vmatmul.mubr.bf16.gmra.mxu0 %v3272
        %v3368 = vpop.f32.mrf.mxu0
        %v3369 = vadd.f32 0.0, %v3368
        %v3370 = vpop.f32.mrf.mxu0
        %v3371 = vadd.f32 0.0, %v3370
        %v3372 = vpop.f32.mrf.mxu0
        %v3373 = vpop.f32.mrf.mxu0
        %3374 = vdwg.mxu0
        %3375 = vmatprep.subr.bf16.mxu0 0
        %3376 = vmatpush1.bf16.msra.mxu0 0
        %3377 = vmatprep.subr.bf16.mxu0 0
        %3378 = vmatpush1.bf16.msra.mxu0 0
        %3379 = vmatprep.subr.bf16.mxu0 0
        %3380 = vmatpush1.bf16.msra.mxu0 0
        %3381 = vmatprep.subr.bf16.mxu0 0
        %3382 = vmatpush1.bf16.msra.mxu0 0
        %3383 = vmatprep.subr.bf16.mxu0 0
        %3384 = vmatpush1.bf16.msra.mxu0 0
        %3385 = vmatprep.subr.bf16.mxu0 0
        %3386 = vmatpush1.bf16.msra.mxu0 0
        %3387 = vmatprep.subr.bf16.mxu0 0
        %3388 = vmatpush1.bf16.msra.mxu0 0
        %3389 = vmatprep.subr.bf16.mxu0 %v3291
        %3390 = vmatpush1.bf16.msra.mxu0 %v3288
        %3391 = vmatprep.subr.bf16.mxu0 0
        %3392 = vmatpush2.bf16.msra.mxu0 0
        %3393 = vmatprep.subr.bf16.mxu0 0
        %3394 = vmatpush2.bf16.msra.mxu0 0
        %3395 = vmatprep.subr.bf16.mxu0 0
        %3396 = vmatpush2.bf16.msra.mxu0 0
        %3397 = vmatprep.subr.bf16.mxu0 0
        %3398 = vmatpush2.bf16.msra.mxu0 0
        %3399 = vmatprep.subr.bf16.mxu0 0
        %3400 = vmatpush2.bf16.msra.mxu0 0
        %3401 = vmatprep.subr.bf16.mxu0 0
        %3402 = vmatpush2.bf16.msra.mxu0 0
        %3403 = vmatprep.subr.bf16.mxu0 0
        %3404 = vmatpush2.bf16.msra.mxu0 0
        %3405 = vmatprep.subr.bf16.mxu0 0
        %3406 = vmatpush2.bf16.msra.mxu0 0
        %3407 = vmatprep.mubr.bf16.mxu0 0
        %3408 = vmatmul.mubr.bf16.gmra.mxu0 %v3272
        %v3409 = vpop.f32.mrf.mxu0
        %v3410 = vadd.f32 0.0, %v3409
        %v3411 = vpop.f32.mrf.mxu0
        %v3412 = vadd.f32 0.0, %v3411
        %v3413 = vpop.f32.mrf.mxu0
        %v3414 = vpop.f32.mrf.mxu0
        %3415 = vdwg.mxu0
        %v3419 = vunpack.c.l.b16 %v333
        %v3420 = vunpack.c.h.b16 %v333
        %v3421 = vunpack.c.l.b16 %v334
        %v3422 = vunpack.c.h.b16 %v334
        %v3423 = vunpack.c.l.b16 %v335
        %v3424 = vunpack.c.h.b16 %v335
        %v3425 = vpack.c.b16 %v3419, %v3419
        %v3426 = vpack.c.b16 %v3420, %v3420
        %v3427 = vpack.c.b16 %v3421, %v3421
        %v3428 = vpack.c.b16 %v3422, %v3422
        %v3429 = vpack.c.b16 %v3423, %v3423
        %v3430 = vpack.c.b16 %v3424, %v3424
        %v3432 = vsel %vm3207, %v3253, 0
        %v3435 = vsel %vm3274, %v3425, 0
        %v3438 = vsel %vm3274, %v3426, 0
        %v3441 = vsel %vm3274, %v3427, 0
        %v3444 = vsel %vm3274, %v3428, 0
        %v3447 = vsel %vm3274, %v3429, 0
        %v3450 = vsel %vm3274, %v3430, 0
        %3452 = vmatprep.subr.bf16.mxu0 0
        %3453 = vmatpush1.bf16.msra.mxu0 0
        %3454 = vmatprep.subr.bf16.mxu0 0
        %3455 = vmatpush1.bf16.msra.mxu0 0
        %3456 = vmatprep.subr.bf16.mxu0 0
        %3457 = vmatpush1.bf16.msra.mxu0 0
        %3458 = vmatprep.subr.bf16.mxu0 0
        %3459 = vmatpush1.bf16.msra.mxu0 0
        %3460 = vmatprep.subr.bf16.mxu0 0
        %3461 = vmatpush1.bf16.msra.mxu0 0
        %3462 = vmatprep.subr.bf16.mxu0 0
        %3463 = vmatpush1.bf16.msra.mxu0 0
        %3464 = vmatprep.subr.bf16.mxu0 0
        %3465 = vmatpush1.bf16.msra.mxu0 0
        %3466 = vmatprep.subr.bf16.mxu0 %v3438
        %3467 = vmatpush1.bf16.msra.mxu0 %v3435
        %3468 = vmatprep.subr.bf16.mxu0 0
        %3469 = vmatpush2.bf16.msra.mxu0 0
        %3470 = vmatprep.subr.bf16.mxu0 0
        %3471 = vmatpush2.bf16.msra.mxu0 0
        %3472 = vmatprep.subr.bf16.mxu0 0
        %3473 = vmatpush2.bf16.msra.mxu0 0
        %3474 = vmatprep.subr.bf16.mxu0 0
        %3475 = vmatpush2.bf16.msra.mxu0 0
        %3476 = vmatprep.subr.bf16.mxu0 0
        %3477 = vmatpush2.bf16.msra.mxu0 0
        %3478 = vmatprep.subr.bf16.mxu0 0
        %3479 = vmatpush2.bf16.msra.mxu0 0
        %3480 = vmatprep.subr.bf16.mxu0 0
        %3481 = vmatpush2.bf16.msra.mxu0 0
        %3482 = vmatprep.subr.bf16.mxu0 0
        %3483 = vmatpush2.bf16.msra.mxu0 0
        %3484 = vmatprep.mubr.bf16.mxu0 0
        %3485 = vmatmul.mubr.bf16.gmra.mxu0 %v3432
        %v3486 = vpop.f32.mrf.mxu0
        %v3487 = vadd.f32 0.0, %v3486
        %v3488 = vpop.f32.mrf.mxu0
        %v3489 = vadd.f32 0.0, %v3488
        %v3490 = vpop.f32.mrf.mxu0
        %v3491 = vpop.f32.mrf.mxu0
        %3492 = vdwg.mxu0
        %3493 = vmatprep.subr.bf16.mxu0 0
        %3494 = vmatpush1.bf16.msra.mxu0 0
        %3495 = vmatprep.subr.bf16.mxu0 0
        %3496 = vmatpush1.bf16.msra.mxu0 0
        %3497 = vmatprep.subr.bf16.mxu0 0
        %3498 = vmatpush1.bf16.msra.mxu0 0
        %3499 = vmatprep.subr.bf16.mxu0 0
        %3500 = vmatpush1.bf16.msra.mxu0 0
        %3501 = vmatprep.subr.bf16.mxu0 0
        %3502 = vmatpush1.bf16.msra.mxu0 0
        %3503 = vmatprep.subr.bf16.mxu0 0
        %3504 = vmatpush1.bf16.msra.mxu0 0
        %3505 = vmatprep.subr.bf16.mxu0 0
        %3506 = vmatpush1.bf16.msra.mxu0 0
        %3507 = vmatprep.subr.bf16.mxu0 %v3444
        %3508 = vmatpush1.bf16.msra.mxu0 %v3441
        %3509 = vmatprep.subr.bf16.mxu0 0
        %3510 = vmatpush2.bf16.msra.mxu0 0
        %3511 = vmatprep.subr.bf16.mxu0 0
        %3512 = vmatpush2.bf16.msra.mxu0 0
        %3513 = vmatprep.subr.bf16.mxu0 0
        %3514 = vmatpush2.bf16.msra.mxu0 0
        %3515 = vmatprep.subr.bf16.mxu0 0
        %3516 = vmatpush2.bf16.msra.mxu0 0
        %3517 = vmatprep.subr.bf16.mxu0 0
        %3518 = vmatpush2.bf16.msra.mxu0 0
        %3519 = vmatprep.subr.bf16.mxu0 0
        %3520 = vmatpush2.bf16.msra.mxu0 0
        %3521 = vmatprep.subr.bf16.mxu0 0
        %3522 = vmatpush2.bf16.msra.mxu0 0
        %3523 = vmatprep.subr.bf16.mxu0 0
        %3524 = vmatpush2.bf16.msra.mxu0 0
        %3525 = vmatprep.mubr.bf16.mxu0 0
        %3526 = vmatmul.mubr.bf16.gmra.mxu0 %v3432
        %v3527 = vpop.f32.mrf.mxu0
        %v3528 = vadd.f32 0.0, %v3527
        %v3529 = vpop.f32.mrf.mxu0
        %v3530 = vadd.f32 0.0, %v3529
        %v3531 = vpop.f32.mrf.mxu0
        %v3532 = vpop.f32.mrf.mxu0
        %3533 = vdwg.mxu0
        %3534 = vmatprep.subr.bf16.mxu0 0
        %3535 = vmatpush1.bf16.msra.mxu0 0
        %3536 = vmatprep.subr.bf16.mxu0 0
        %3537 = vmatpush1.bf16.msra.mxu0 0
        %3538 = vmatprep.subr.bf16.mxu0 0
        %3539 = vmatpush1.bf16.msra.mxu0 0
        %3540 = vmatprep.subr.bf16.mxu0 0
        %3541 = vmatpush1.bf16.msra.mxu0 0
        %3542 = vmatprep.subr.bf16.mxu0 0
        %3543 = vmatpush1.bf16.msra.mxu0 0
        %3544 = vmatprep.subr.bf16.mxu0 0
        %3545 = vmatpush1.bf16.msra.mxu0 0
        %3546 = vmatprep.subr.bf16.mxu0 0
        %3547 = vmatpush1.bf16.msra.mxu0 0
        %3548 = vmatprep.subr.bf16.mxu0 %v3450
        %3549 = vmatpush1.bf16.msra.mxu0 %v3447
        %3550 = vmatprep.subr.bf16.mxu0 0
        %3551 = vmatpush2.bf16.msra.mxu0 0
        %3552 = vmatprep.subr.bf16.mxu0 0
        %3553 = vmatpush2.bf16.msra.mxu0 0
        %3554 = vmatprep.subr.bf16.mxu0 0
        %3555 = vmatpush2.bf16.msra.mxu0 0
        %3556 = vmatprep.subr.bf16.mxu0 0
        %3557 = vmatpush2.bf16.msra.mxu0 0
        %3558 = vmatprep.subr.bf16.mxu0 0
        %3559 = vmatpush2.bf16.msra.mxu0 0
        %3560 = vmatprep.subr.bf16.mxu0 0
        %3561 = vmatpush2.bf16.msra.mxu0 0
        %3562 = vmatprep.subr.bf16.mxu0 0
        %3563 = vmatpush2.bf16.msra.mxu0 0
        %3564 = vmatprep.subr.bf16.mxu0 0
        %3565 = vmatpush2.bf16.msra.mxu0 0
        %3566 = vmatprep.mubr.bf16.mxu0 0
        %3567 = vmatmul.mubr.bf16.gmra.mxu0 %v3432
        %v3568 = vpop.f32.mrf.mxu0
        %v3569 = vadd.f32 0.0, %v3568
        %v3570 = vpop.f32.mrf.mxu0
        %v3571 = vadd.f32 0.0, %v3570
        %v3572 = vpop.f32.mrf.mxu0
        %v3573 = vpop.f32.mrf.mxu0
        %3574 = vdwg.mxu0
        %v3578 = vunpack.c.l.b16 %v336
        %v3579 = vunpack.c.h.b16 %v336
        %v3580 = vunpack.c.l.b16 %v337
        %v3581 = vunpack.c.h.b16 %v337
        %v3582 = vunpack.c.l.b16 %v338
        %v3583 = vunpack.c.h.b16 %v338
        %v3584 = vpack.c.b16 %v3578, %v3578
        %v3585 = vpack.c.b16 %v3579, %v3579
        %v3586 = vpack.c.b16 %v3580, %v3580
        %v3587 = vpack.c.b16 %v3581, %v3581
        %v3588 = vpack.c.b16 %v3582, %v3582
        %v3589 = vpack.c.b16 %v3583, %v3583
        %v3591 = vsel %vm3207, %v3254, 0
        %v3594 = vsel %vm3274, %v3584, 0
        %v3597 = vsel %vm3274, %v3585, 0
        %v3600 = vsel %vm3274, %v3586, 0
        %v3603 = vsel %vm3274, %v3587, 0
        %v3606 = vsel %vm3274, %v3588, 0
        %v3609 = vsel %vm3274, %v3589, 0
        %3611 = vmatprep.subr.bf16.mxu0 0
        %3612 = vmatpush1.bf16.msra.mxu0 0
        %3613 = vmatprep.subr.bf16.mxu0 0
        %3614 = vmatpush1.bf16.msra.mxu0 0
        %3615 = vmatprep.subr.bf16.mxu0 0
        %3616 = vmatpush1.bf16.msra.mxu0 0
        %3617 = vmatprep.subr.bf16.mxu0 0
        %3618 = vmatpush1.bf16.msra.mxu0 0
        %3619 = vmatprep.subr.bf16.mxu0 0
        %3620 = vmatpush1.bf16.msra.mxu0 0
        %3621 = vmatprep.subr.bf16.mxu0 0
        %3622 = vmatpush1.bf16.msra.mxu0 0
        %3623 = vmatprep.subr.bf16.mxu0 0
        %3624 = vmatpush1.bf16.msra.mxu0 0
        %3625 = vmatprep.subr.bf16.mxu0 %v3597
        %3626 = vmatpush1.bf16.msra.mxu0 %v3594
        %3627 = vmatprep.subr.bf16.mxu0 0
        %3628 = vmatpush2.bf16.msra.mxu0 0
        %3629 = vmatprep.subr.bf16.mxu0 0
        %3630 = vmatpush2.bf16.msra.mxu0 0
        %3631 = vmatprep.subr.bf16.mxu0 0
        %3632 = vmatpush2.bf16.msra.mxu0 0
        %3633 = vmatprep.subr.bf16.mxu0 0
        %3634 = vmatpush2.bf16.msra.mxu0 0
        %3635 = vmatprep.subr.bf16.mxu0 0
        %3636 = vmatpush2.bf16.msra.mxu0 0
        %3637 = vmatprep.subr.bf16.mxu0 0
        %3638 = vmatpush2.bf16.msra.mxu0 0
        %3639 = vmatprep.subr.bf16.mxu0 0
        %3640 = vmatpush2.bf16.msra.mxu0 0
        %3641 = vmatprep.subr.bf16.mxu0 0
        %3642 = vmatpush2.bf16.msra.mxu0 0
        %3643 = vmatprep.mubr.bf16.mxu0 0
        %3644 = vmatmul.mubr.bf16.gmra.mxu0 %v3591
        %v3645 = vpop.f32.mrf.mxu0
        %v3646 = vadd.f32 0.0, %v3645
        %v3647 = vpop.f32.mrf.mxu0
        %v3648 = vadd.f32 0.0, %v3647
        %v3649 = vpop.f32.mrf.mxu0
        %v3650 = vpop.f32.mrf.mxu0
        %3651 = vdwg.mxu0
        %3652 = vmatprep.subr.bf16.mxu0 0
        %3653 = vmatpush1.bf16.msra.mxu0 0
        %3654 = vmatprep.subr.bf16.mxu0 0
        %3655 = vmatpush1.bf16.msra.mxu0 0
        %3656 = vmatprep.subr.bf16.mxu0 0
        %3657 = vmatpush1.bf16.msra.mxu0 0
        %3658 = vmatprep.subr.bf16.mxu0 0
        %3659 = vmatpush1.bf16.msra.mxu0 0
        %3660 = vmatprep.subr.bf16.mxu0 0
        %3661 = vmatpush1.bf16.msra.mxu0 0
        %3662 = vmatprep.subr.bf16.mxu0 0
        %3663 = vmatpush1.bf16.msra.mxu0 0
        %3664 = vmatprep.subr.bf16.mxu0 0
        %3665 = vmatpush1.bf16.msra.mxu0 0
        %3666 = vmatprep.subr.bf16.mxu0 %v3603
        %3667 = vmatpush1.bf16.msra.mxu0 %v3600
        %3668 = vmatprep.subr.bf16.mxu0 0
        %3669 = vmatpush2.bf16.msra.mxu0 0
        %3670 = vmatprep.subr.bf16.mxu0 0
        %3671 = vmatpush2.bf16.msra.mxu0 0
        %3672 = vmatprep.subr.bf16.mxu0 0
        %3673 = vmatpush2.bf16.msra.mxu0 0
        %3674 = vmatprep.subr.bf16.mxu0 0
        %3675 = vmatpush2.bf16.msra.mxu0 0
        %3676 = vmatprep.subr.bf16.mxu0 0
        %3677 = vmatpush2.bf16.msra.mxu0 0
        %3678 = vmatprep.subr.bf16.mxu0 0
        %3679 = vmatpush2.bf16.msra.mxu0 0
        %3680 = vmatprep.subr.bf16.mxu0 0
        %3681 = vmatpush2.bf16.msra.mxu0 0
        %3682 = vmatprep.subr.bf16.mxu0 0
        %3683 = vmatpush2.bf16.msra.mxu0 0
        %3684 = vmatprep.mubr.bf16.mxu0 0
        %3685 = vmatmul.mubr.bf16.gmra.mxu0 %v3591
        %v3686 = vpop.f32.mrf.mxu0
        %v3687 = vadd.f32 0.0, %v3686
        %v3688 = vpop.f32.mrf.mxu0
        %v3689 = vadd.f32 0.0, %v3688
        %v3690 = vpop.f32.mrf.mxu0
        %v3691 = vpop.f32.mrf.mxu0
        %3692 = vdwg.mxu0
        %3693 = vmatprep.subr.bf16.mxu0 0
        %3694 = vmatpush1.bf16.msra.mxu0 0
        %3695 = vmatprep.subr.bf16.mxu0 0
        %3696 = vmatpush1.bf16.msra.mxu0 0
        %3697 = vmatprep.subr.bf16.mxu0 0
        %3698 = vmatpush1.bf16.msra.mxu0 0
        %3699 = vmatprep.subr.bf16.mxu0 0
        %3700 = vmatpush1.bf16.msra.mxu0 0
        %3701 = vmatprep.subr.bf16.mxu0 0
        %3702 = vmatpush1.bf16.msra.mxu0 0
        %3703 = vmatprep.subr.bf16.mxu0 0
        %3704 = vmatpush1.bf16.msra.mxu0 0
        %3705 = vmatprep.subr.bf16.mxu0 0
        %3706 = vmatpush1.bf16.msra.mxu0 0
        %3707 = vmatprep.subr.bf16.mxu0 %v3609
        %3708 = vmatpush1.bf16.msra.mxu0 %v3606
        %3709 = vmatprep.subr.bf16.mxu0 0
        %3710 = vmatpush2.bf16.msra.mxu0 0
        %3711 = vmatprep.subr.bf16.mxu0 0
        %3712 = vmatpush2.bf16.msra.mxu0 0
        %3713 = vmatprep.subr.bf16.mxu0 0
        %3714 = vmatpush2.bf16.msra.mxu0 0
        %3715 = vmatprep.subr.bf16.mxu0 0
        %3716 = vmatpush2.bf16.msra.mxu0 0
        %3717 = vmatprep.subr.bf16.mxu0 0
        %3718 = vmatpush2.bf16.msra.mxu0 0
        %3719 = vmatprep.subr.bf16.mxu0 0
        %3720 = vmatpush2.bf16.msra.mxu0 0
        %3721 = vmatprep.subr.bf16.mxu0 0
        %3722 = vmatpush2.bf16.msra.mxu0 0
        %3723 = vmatprep.subr.bf16.mxu0 0
        %3724 = vmatpush2.bf16.msra.mxu0 0
        %3725 = vmatprep.mubr.bf16.mxu0 0
        %3726 = vmatmul.mubr.bf16.gmra.mxu0 %v3591
        %v3727 = vpop.f32.mrf.mxu0
        %v3728 = vadd.f32 0.0, %v3727
        %v3729 = vpop.f32.mrf.mxu0
        %v3730 = vadd.f32 0.0, %v3729
        %v3731 = vpop.f32.mrf.mxu0
        %v3732 = vpop.f32.mrf.mxu0
        %3733 = vdwg.mxu0
        %v3737 = vunpack.c.l.b16 %v339
        %v3738 = vunpack.c.h.b16 %v339
        %v3739 = vunpack.c.l.b16 %v340
        %v3740 = vunpack.c.h.b16 %v340
        %v3741 = vunpack.c.l.b16 %v341
        %v3742 = vunpack.c.h.b16 %v341
        %v3743 = vpack.c.b16 %v3737, %v3737
        %v3744 = vpack.c.b16 %v3738, %v3738
        %v3745 = vpack.c.b16 %v3739, %v3739
        %v3746 = vpack.c.b16 %v3740, %v3740
        %v3747 = vpack.c.b16 %v3741, %v3741
        %v3748 = vpack.c.b16 %v3742, %v3742
        %v3750 = vsel %vm3207, %v3255, 0
        %v3753 = vsel %vm3274, %v3743, 0
        %v3756 = vsel %vm3274, %v3744, 0
        %v3759 = vsel %vm3274, %v3745, 0
        %v3762 = vsel %vm3274, %v3746, 0
        %v3765 = vsel %vm3274, %v3747, 0
        %v3768 = vsel %vm3274, %v3748, 0
        %3770 = vmatprep.subr.bf16.mxu0 0
        %3771 = vmatpush1.bf16.msra.mxu0 0
        %3772 = vmatprep.subr.bf16.mxu0 0
        %3773 = vmatpush1.bf16.msra.mxu0 0
        %3774 = vmatprep.subr.bf16.mxu0 0
        %3775 = vmatpush1.bf16.msra.mxu0 0
        %3776 = vmatprep.subr.bf16.mxu0 0
        %3777 = vmatpush1.bf16.msra.mxu0 0
        %3778 = vmatprep.subr.bf16.mxu0 0
        %3779 = vmatpush1.bf16.msra.mxu0 0
        %3780 = vmatprep.subr.bf16.mxu0 0
        %3781 = vmatpush1.bf16.msra.mxu0 0
        %3782 = vmatprep.subr.bf16.mxu0 0
        %3783 = vmatpush1.bf16.msra.mxu0 0
        %3784 = vmatprep.subr.bf16.mxu0 %v3756
        %3785 = vmatpush1.bf16.msra.mxu0 %v3753
        %3786 = vmatprep.subr.bf16.mxu0 0
        %3787 = vmatpush2.bf16.msra.mxu0 0
        %3788 = vmatprep.subr.bf16.mxu0 0
        %3789 = vmatpush2.bf16.msra.mxu0 0
        %3790 = vmatprep.subr.bf16.mxu0 0
        %3791 = vmatpush2.bf16.msra.mxu0 0
        %3792 = vmatprep.subr.bf16.mxu0 0
        %3793 = vmatpush2.bf16.msra.mxu0 0
        %3794 = vmatprep.subr.bf16.mxu0 0
        %3795 = vmatpush2.bf16.msra.mxu0 0
        %3796 = vmatprep.subr.bf16.mxu0 0
        %3797 = vmatpush2.bf16.msra.mxu0 0
        %3798 = vmatprep.subr.bf16.mxu0 0
        %3799 = vmatpush2.bf16.msra.mxu0 0
        %3800 = vmatprep.subr.bf16.mxu0 0
        %3801 = vmatpush2.bf16.msra.mxu0 0
        %3802 = vmatprep.mubr.bf16.mxu0 0
        %3803 = vmatmul.mubr.bf16.gmra.mxu0 %v3750
        %v3804 = vpop.f32.mrf.mxu0
        %v3805 = vadd.f32 0.0, %v3804
        %v3806 = vpop.f32.mrf.mxu0
        %v3807 = vadd.f32 0.0, %v3806
        %v3808 = vpop.f32.mrf.mxu0
        %v3809 = vpop.f32.mrf.mxu0
        %3810 = vdwg.mxu0
        %3811 = vmatprep.subr.bf16.mxu0 0
        %3812 = vmatpush1.bf16.msra.mxu0 0
        %3813 = vmatprep.subr.bf16.mxu0 0
        %3814 = vmatpush1.bf16.msra.mxu0 0
        %3815 = vmatprep.subr.bf16.mxu0 0
        %3816 = vmatpush1.bf16.msra.mxu0 0
        %3817 = vmatprep.subr.bf16.mxu0 0
        %3818 = vmatpush1.bf16.msra.mxu0 0
        %3819 = vmatprep.subr.bf16.mxu0 0
        %3820 = vmatpush1.bf16.msra.mxu0 0
        %3821 = vmatprep.subr.bf16.mxu0 0
        %3822 = vmatpush1.bf16.msra.mxu0 0
        %3823 = vmatprep.subr.bf16.mxu0 0
        %3824 = vmatpush1.bf16.msra.mxu0 0
        %3825 = vmatprep.subr.bf16.mxu0 %v3762
        %3826 = vmatpush1.bf16.msra.mxu0 %v3759
        %3827 = vmatprep.subr.bf16.mxu0 0
        %3828 = vmatpush2.bf16.msra.mxu0 0
        %3829 = vmatprep.subr.bf16.mxu0 0
        %3830 = vmatpush2.bf16.msra.mxu0 0
        %3831 = vmatprep.subr.bf16.mxu0 0
        %3832 = vmatpush2.bf16.msra.mxu0 0
        %3833 = vmatprep.subr.bf16.mxu0 0
        %3834 = vmatpush2.bf16.msra.mxu0 0
        %3835 = vmatprep.subr.bf16.mxu0 0
        %3836 = vmatpush2.bf16.msra.mxu0 0
        %3837 = vmatprep.subr.bf16.mxu0 0
        %3838 = vmatpush2.bf16.msra.mxu0 0
        %3839 = vmatprep.subr.bf16.mxu0 0
        %3840 = vmatpush2.bf16.msra.mxu0 0
        %3841 = vmatprep.subr.bf16.mxu0 0
        %3842 = vmatpush2.bf16.msra.mxu0 0
        %3843 = vmatprep.mubr.bf16.mxu0 0
        %3844 = vmatmul.mubr.bf16.gmra.mxu0 %v3750
        %v3845 = vpop.f32.mrf.mxu0
        %v3846 = vadd.f32 0.0, %v3845
        %v3847 = vpop.f32.mrf.mxu0
        %v3848 = vadd.f32 0.0, %v3847
        %v3849 = vpop.f32.mrf.mxu0
        %v3850 = vpop.f32.mrf.mxu0
        %3851 = vdwg.mxu0
        %3852 = vmatprep.subr.bf16.mxu0 0
        %3853 = vmatpush1.bf16.msra.mxu0 0
        %3854 = vmatprep.subr.bf16.mxu0 0
        %3855 = vmatpush1.bf16.msra.mxu0 0
        %3856 = vmatprep.subr.bf16.mxu0 0
        %3857 = vmatpush1.bf16.msra.mxu0 0
        %3858 = vmatprep.subr.bf16.mxu0 0
        %3859 = vmatpush1.bf16.msra.mxu0 0
        %3860 = vmatprep.subr.bf16.mxu0 0
        %3861 = vmatpush1.bf16.msra.mxu0 0
        %3862 = vmatprep.subr.bf16.mxu0 0
        %3863 = vmatpush1.bf16.msra.mxu0 0
        %3864 = vmatprep.subr.bf16.mxu0 0
        %3865 = vmatpush1.bf16.msra.mxu0 0
        %3866 = vmatprep.subr.bf16.mxu0 %v3768
        %3867 = vmatpush1.bf16.msra.mxu0 %v3765
        %3868 = vmatprep.subr.bf16.mxu0 0
        %3869 = vmatpush2.bf16.msra.mxu0 0
        %3870 = vmatprep.subr.bf16.mxu0 0
        %3871 = vmatpush2.bf16.msra.mxu0 0
        %3872 = vmatprep.subr.bf16.mxu0 0
        %3873 = vmatpush2.bf16.msra.mxu0 0
        %3874 = vmatprep.subr.bf16.mxu0 0
        %3875 = vmatpush2.bf16.msra.mxu0 0
        %3876 = vmatprep.subr.bf16.mxu0 0
        %3877 = vmatpush2.bf16.msra.mxu0 0
        %3878 = vmatprep.subr.bf16.mxu0 0
        %3879 = vmatpush2.bf16.msra.mxu0 0
        %3880 = vmatprep.subr.bf16.mxu0 0
        %3881 = vmatpush2.bf16.msra.mxu0 0
        %3882 = vmatprep.subr.bf16.mxu0 0
        %3883 = vmatpush2.bf16.msra.mxu0 0
        %3884 = vmatprep.mubr.bf16.mxu0 0
        %3885 = vmatmul.mubr.bf16.gmra.mxu0 %v3750
        %v3886 = vpop.f32.mrf.mxu0
        %v3887 = vadd.f32 0.0, %v3886
        %v3888 = vpop.f32.mrf.mxu0
        %v3889 = vadd.f32 0.0, %v3888
        %v3890 = vpop.f32.mrf.mxu0
        %v3891 = vpop.f32.mrf.mxu0
        %3892 = vdwg.mxu0
        %v3893 = vld [vmem:[#allocation7] sm:$0xff]
        %v3894 = vld [vmem:[#allocation7 + $0x8] sm:$0xf]
        %v3895 = vld [vmem:[#allocation7 + $0xc] sm:$0xff]
        %v3896 = vld [vmem:[#allocation7 + $0x14] sm:$0xf]
        %v3897 = vld [vmem:[#allocation7 + $0x18] sm:$0xff]
        %v3898 = vld [vmem:[#allocation7 + $0x20] sm:$0xf]
        %v3899 = vunpack.c.l.bf16 %v342
        %v3900 = vunpack.c.h.bf16 %v342
        %v3901 = vunpack.c.l.bf16 %v343
        %v3902 = vunpack.c.h.bf16 %v343
        %v3903 = vunpack.c.l.bf16 %v344
        %v3904 = vunpack.c.h.bf16 %v344
        %v3905 = vunpack.c.l.bf16 %v345
        %v3906 = vunpack.c.h.bf16 %v345
        %v3907 = vunpack.c.l.bf16 %v346
        %v3908 = vunpack.c.h.bf16 %v346
        %v3909 = vunpack.c.l.bf16 %v347
        %v3910 = vunpack.c.h.bf16 %v347
        %v3911 = vunpack.c.l.bf16 %v348
        %v3912 = vunpack.c.h.bf16 %v348
        %v3913 = vunpack.c.l.bf16 %v349
        %v3914 = vunpack.c.h.bf16 %v349
        %v3915 = vunpack.c.l.bf16 %v350
        %v3916 = vunpack.c.h.bf16 %v350
        %v3917 = vunpack.c.l.bf16 %v351
        %v3918 = vunpack.c.h.bf16 %v351
        %v3919 = vunpack.c.l.bf16 %v352
        %v3920 = vunpack.c.h.bf16 %v352
        %v3921 = vunpack.c.l.bf16 %v353
        %v3922 = vunpack.c.h.bf16 %v353
        %v3923 = vrot.slane %v642, 4
        %v3924 = vmax.f32 %v642, %v3923
        %v3925 = vrot.slane %v3924, 2
        %v3926 = vmax.f32 %v3924, %v3925
        %v3927 = vrot.slane %v3926, 1
        %v3928 = vmax.f32 %v3926, %v3927
        %v3929 = vrot.slane %v643, 4
        %v3930 = vmax.f32 %v643, %v3929
        %v3931 = vrot.slane %v3930, 2
        %v3932 = vmax.f32 %v3930, %v3931
        %v3933 = vrot.slane %v3932, 1
        %v3934 = vmax.f32 %v3932, %v3933
        %v3935 = vrot.slane %v644, 4
        %v3936 = vmax.f32 %v644, %v3935
        %v3937 = vrot.slane %v3936, 2
        %v3938 = vmax.f32 %v3936, %v3937
        %v3939 = vrot.slane %v3938, 1
        %v3940 = vmax.f32 %v3938, %v3939
        %v3941 = vrot.slane %v645, 4
        %v3942 = vmax.f32 %v645, %v3941
        %v3943 = vrot.slane %v3942, 2
        %v3944 = vmax.f32 %v3942, %v3943
        %v3945 = vrot.slane %v3944, 1
        %v3946 = vmax.f32 %v3944, %v3945
        %v3947 = vrot.slane %v646, 4
        %v3948 = vmax.f32 %v646, %v3947
        %v3949 = vrot.slane %v3948, 2
        %v3950 = vmax.f32 %v3948, %v3949
        %v3951 = vrot.slane %v3950, 1
        %v3952 = vmax.f32 %v3950, %v3951
        %v3953 = vrot.slane %v647, 4
        %v3954 = vmax.f32 %v647, %v3953
        %v3955 = vrot.slane %v3954, 2
        %v3956 = vmax.f32 %v3954, %v3955
        %v3957 = vrot.slane %v3956, 1
        %v3958 = vmax.f32 %v3956, %v3957
        %v3959 = vrot.slane %v648, 4
        %v3960 = vmax.f32 %v648, %v3959
        %v3961 = vrot.slane %v3960, 2
        %v3962 = vmax.f32 %v3960, %v3961
        %v3963 = vrot.slane %v3962, 1
        %v3964 = vmax.f32 %v3962, %v3963
        %v3965 = vrot.slane %v649, 4
        %v3966 = vmax.f32 %v649, %v3965
        %v3967 = vrot.slane %v3966, 2
        %v3968 = vmax.f32 %v3966, %v3967
        %v3969 = vrot.slane %v3968, 1
        %v3970 = vmax.f32 %v3968, %v3969
        %v3971 = vrot.slane %v650, 4
        %v3972 = vmax.f32 %v650, %v3971
        %v3973 = vrot.slane %v3972, 2
        %v3974 = vmax.f32 %v3972, %v3973
        %v3975 = vrot.slane %v3974, 1
        %v3976 = vmax.f32 %v3974, %v3975
        %v3977 = vrot.slane %v651, 4
        %v3978 = vmax.f32 %v651, %v3977
        %v3979 = vrot.slane %v3978, 2
        %v3980 = vmax.f32 %v3978, %v3979
        %v3981 = vrot.slane %v3980, 1
        %v3982 = vmax.f32 %v3980, %v3981
        %v3983 = vrot.slane %v652, 4
        %v3984 = vmax.f32 %v652, %v3983
        %v3985 = vrot.slane %v3984, 2
        %v3986 = vmax.f32 %v3984, %v3985
        %v3987 = vrot.slane %v3986, 1
        %v3988 = vmax.f32 %v3986, %v3987
        %v3989 = vrot.slane %v653, 4
        %v3990 = vmax.f32 %v653, %v3989
        %v3991 = vrot.slane %v3990, 2
        %v3992 = vmax.f32 %v3990, %v3991
        %v3993 = vrot.slane %v3992, 1
        %v3994 = vmax.f32 %v3992, %v3993
        %v3995 = vrot.slane %v654, 4
        %v3996 = vmax.f32 %v654, %v3995
        %v3997 = vrot.slane %v3996, 2
        %v3998 = vmax.f32 %v3996, %v3997
        %v3999 = vrot.slane %v3998, 1
        %v4000 = vmax.f32 %v3998, %v3999
        %v4001 = vrot.slane %v655, 4
        %v4002 = vmax.f32 %v655, %v4001
        %v4003 = vrot.slane %v4002, 2
        %v4004 = vmax.f32 %v4002, %v4003
        %v4005 = vrot.slane %v4004, 1
        %v4006 = vmax.f32 %v4004, %v4005
        %v4007 = vrot.slane %v656, 4
        %v4008 = vmax.f32 %v656, %v4007
        %v4009 = vrot.slane %v4008, 2
        %v4010 = vmax.f32 %v4008, %v4009
        %v4011 = vrot.slane %v4010, 1
        %v4012 = vmax.f32 %v4010, %v4011
        %v4013 = vrot.slane %v657, 4
        %v4014 = vmax.f32 %v657, %v4013
        %v4015 = vrot.slane %v4014, 2
        %v4016 = vmax.f32 %v4014, %v4015
        %v4017 = vrot.slane %v4016, 1
        %v4018 = vmax.f32 %v4016, %v4017
        %v4019 = vrot.slane %v658, 4
        %v4020 = vmax.f32 %v658, %v4019
        %v4021 = vrot.slane %v4020, 2
        %v4022 = vmax.f32 %v4020, %v4021
        %v4023 = vrot.slane %v4022, 1
        %v4024 = vmax.f32 %v4022, %v4023
        %v4025 = vrot.slane %v659, 4
        %v4026 = vmax.f32 %v659, %v4025
        %v4027 = vrot.slane %v4026, 2
        %v4028 = vmax.f32 %v4026, %v4027
        %v4029 = vrot.slane %v4028, 1
        %v4030 = vmax.f32 %v4028, %v4029
        %v4031 = vrot.slane %v660, 4
        %v4032 = vmax.f32 %v660, %v4031
        %v4033 = vrot.slane %v4032, 2
        %v4034 = vmax.f32 %v4032, %v4033
        %v4035 = vrot.slane %v4034, 1
        %v4036 = vmax.f32 %v4034, %v4035
        %v4037 = vrot.slane %v661, 4
        %v4038 = vmax.f32 %v661, %v4037
        %v4039 = vrot.slane %v4038, 2
        %v4040 = vmax.f32 %v4038, %v4039
        %v4041 = vrot.slane %v4040, 1
        %v4042 = vmax.f32 %v4040, %v4041
        %v4043 = vrot.slane %v662, 4
        %v4044 = vmax.f32 %v662, %v4043
        %v4045 = vrot.slane %v4044, 2
        %v4046 = vmax.f32 %v4044, %v4045
        %v4047 = vrot.slane %v4046, 1
        %v4048 = vmax.f32 %v4046, %v4047
        %v4049 = vrot.slane %v663, 4
        %v4050 = vmax.f32 %v663, %v4049
        %v4051 = vrot.slane %v4050, 2
        %v4052 = vmax.f32 %v4050, %v4051
        %v4053 = vrot.slane %v4052, 1
        %v4054 = vmax.f32 %v4052, %v4053
        %v4055 = vrot.slane %v664, 4
        %v4056 = vmax.f32 %v664, %v4055
        %v4057 = vrot.slane %v4056, 2
        %v4058 = vmax.f32 %v4056, %v4057
        %v4059 = vrot.slane %v4058, 1
        %v4060 = vmax.f32 %v4058, %v4059
        %v4061 = vrot.slane %v665, 4
        %v4062 = vmax.f32 %v665, %v4061
        %v4063 = vrot.slane %v4062, 2
        %v4064 = vmax.f32 %v4062, %v4063
        %v4065 = vrot.slane %v4064, 1
        %v4066 = vmax.f32 %v4064, %v4065
        %v4069 = vcombine.high %v3895, %v3895
        %v4071 = vunpack.c.l.s4 1983009808
        %v4072 = vunpack.c.0.s8 %v4071
        %v4073 = vlaneseq
        %v4074 = vshrl.u32 %v4073, 7
        %v4075 = vsub.s32 %v4072, %v4074
        %v4076 = vrot.slane %v3895, %v4075
        %v4078 = vunpack.c.l.s4 1983009808
        %v4079 = vunpack.c.0.s8 %v4078
        %v4080 = vlaneseq
        %v4081 = vshrl.u32 %v4080, 7
        %v4082 = vsub.s32 %v4079, %v4081
        %v4083 = vrot.slane %v4069, %v4082
        %v4084 = vcombine.high %v4076, %v4076
        %v4085 = vcombine.high %v4083, %v4083
        %v4087 = vunpack.c.l.s4 1983009808
        %v4088 = vunpack.c.0.s8 %v4087
        %v4089 = vlaneseq
        %v4090 = vshrl.u32 %v4089, 7
        %v4091 = vsub.s32 %v4088, %v4090
        %v4092 = vrot.slane %v3896, %v4091
        %v4093 = vcombine.high %v4092, %v4092
        %4100 = vmatprep.subr.mxu0 0.0
        %4101 = vmatpush1.xpose.msra.mxu0 0.0
        %4102 = vmatprep.subr.mxu0 0.0
        %4103 = vmatpush1.xpose.msra.mxu0 0.0
        %4104 = vmatprep.subr.mxu0 0.0
        %4105 = vmatpush1.xpose.msra.mxu0 0.0
        %4106 = vmatprep.subr.mxu0 0.0
        %4107 = vmatpush1.xpose.msra.mxu0 0.0
        %4108 = vmatprep.subr.mxu0 0.0
        %4109 = vmatpush1.xpose.msra.mxu0 0.0
        %4110 = vmatprep.subr.mxu0 0.0
        %4111 = vmatpush1.xpose.msra.mxu0 0.0
        %4112 = vmatprep.subr.mxu0 0.0
        %4113 = vmatpush1.xpose.msra.mxu0 0.0
        %4114 = vmatprep.subr.mxu0 0.0
        %4115 = vmatpush1.xpose.msra.mxu0 0.0
        %4116 = vmatprep.subr.mxu0 0.0
        %4117 = vmatpush1.xpose.msra.mxu0 0.0
        %4118 = vmatprep.subr.mxu0 0.0
        %4119 = vmatpush1.xpose.msra.mxu0 0.0
        %4120 = vmatprep.subr.mxu0 0.0
        %4121 = vmatpush1.xpose.msra.mxu0 0.0
        %4122 = vmatprep.subr.mxu0 0.0
        %4123 = vmatpush1.xpose.msra.mxu0 0.0
        %4124 = vmatprep.subr.mxu0 0.0
        %4125 = vmatpush1.xpose.msra.mxu0 0.0
        %4126 = vmatprep.subr.mxu0 0.0
        %4127 = vmatpush1.xpose.msra.mxu0 0.0
        %4128 = vmatprep.subr.mxu0 0.0
        %4129 = vmatpush1.xpose.msra.mxu0 0.0
        %4130 = vmatprep.subr.mxu0 %v4084
        %4131 = vmatpush1.xpose.msra.mxu0 %v4076
        %4132 = vmatprep.subr.mxu0 0.0
        %4133 = vmatpush2.xpose.msra.mxu0 0.0
        %4134 = vmatprep.subr.mxu0 0.0
        %4135 = vmatpush2.xpose.msra.mxu0 0.0
        %4136 = vmatprep.subr.mxu0 0.0
        %4137 = vmatpush2.xpose.msra.mxu0 0.0
        %4138 = vmatprep.subr.mxu0 0.0
        %4139 = vmatpush2.xpose.msra.mxu0 0.0
        %4140 = vmatprep.subr.mxu0 0.0
        %4141 = vmatpush2.xpose.msra.mxu0 0.0
        %4142 = vmatprep.subr.mxu0 0.0
        %4143 = vmatpush2.xpose.msra.mxu0 0.0
        %4144 = vmatprep.subr.mxu0 0.0
        %4145 = vmatpush2.xpose.msra.mxu0 0.0
        %4146 = vmatprep.subr.mxu0 0.0
        %4147 = vmatpush2.xpose.msra.mxu0 0.0
        %4148 = vmatprep.subr.mxu0 0.0
        %4149 = vmatpush2.xpose.msra.mxu0 0.0
        %4150 = vmatprep.subr.mxu0 0.0
        %4151 = vmatpush2.xpose.msra.mxu0 0.0
        %4152 = vmatprep.subr.mxu0 0.0
        %4153 = vmatpush2.xpose.msra.mxu0 0.0
        %4154 = vmatprep.subr.mxu0 0.0
        %4155 = vmatpush2.xpose.msra.mxu0 0.0
        %4156 = vmatprep.subr.mxu0 0.0
        %4157 = vmatpush2.xpose.msra.mxu0 0.0
        %4158 = vmatprep.subr.mxu0 0.0
        %4159 = vmatpush2.xpose.msra.mxu0 0.0
        %4160 = vmatprep.subr.mxu0 0.0
        %4161 = vmatpush2.xpose.msra.mxu0 0.0
        %4162 = vmatprep.subr.mxu0 0.0
        %4163 = vmatpush2.xpose.msra.mxu0 0.0
        %4164 = vmatprep.mubr.f32.mxu0 %v3900
        %4165 = vmatmul.mubr.f32.gmra.mxu0 %v3899
        %v4166 = vpop.f32.mrf.mxu0
        %v4167 = vadd.f32 0.0, %v4166
        %v4168 = vpop.f32.mrf.mxu0
        %4169 = vmatprep.mubr.f32.mxu0 %v3906
        %4170 = vmatmul.mubr.f32.gmra.mxu0 %v3905
        %v4171 = vpop.f32.mrf.mxu0
        %v4172 = vadd.f32 0.0, %v4171
        %v4173 = vpop.f32.mrf.mxu0
        %4174 = vmatprep.mubr.f32.mxu0 %v3912
        %4175 = vmatmul.mubr.f32.gmra.mxu0 %v3911
        %v4176 = vpop.f32.mrf.mxu0
        %v4177 = vadd.f32 0.0, %v4176
        %v4178 = vpop.f32.mrf.mxu0
        %4179 = vmatprep.mubr.f32.mxu0 %v3918
        %4180 = vmatmul.mubr.f32.gmra.mxu0 %v3917
        %v4181 = vpop.f32.mrf.mxu0
        %v4182 = vadd.f32 0.0, %v4181
        %v4183 = vpop.f32.mrf.mxu0
        %4184 = vdwg.mxu0
        %4185 = vmatprep.subr.mxu0 0.0
        %4186 = vmatpush1.xpose.msra.mxu0 0.0
        %4187 = vmatprep.subr.mxu0 0.0
        %4188 = vmatpush1.xpose.msra.mxu0 0.0
        %4189 = vmatprep.subr.mxu0 0.0
        %4190 = vmatpush1.xpose.msra.mxu0 0.0
        %4191 = vmatprep.subr.mxu0 0.0
        %4192 = vmatpush1.xpose.msra.mxu0 0.0
        %4193 = vmatprep.subr.mxu0 0.0
        %4194 = vmatpush1.xpose.msra.mxu0 0.0
        %4195 = vmatprep.subr.mxu0 0.0
        %4196 = vmatpush1.xpose.msra.mxu0 0.0
        %4197 = vmatprep.subr.mxu0 0.0
        %4198 = vmatpush1.xpose.msra.mxu0 0.0
        %4199 = vmatprep.subr.mxu0 0.0
        %4200 = vmatpush1.xpose.msra.mxu0 0.0
        %4201 = vmatprep.subr.mxu0 0.0
        %4202 = vmatpush1.xpose.msra.mxu0 0.0
        %4203 = vmatprep.subr.mxu0 0.0
        %4204 = vmatpush1.xpose.msra.mxu0 0.0
        %4205 = vmatprep.subr.mxu0 0.0
        %4206 = vmatpush1.xpose.msra.mxu0 0.0
        %4207 = vmatprep.subr.mxu0 0.0
        %4208 = vmatpush1.xpose.msra.mxu0 0.0
        %4209 = vmatprep.subr.mxu0 0.0
        %4210 = vmatpush1.xpose.msra.mxu0 0.0
        %4211 = vmatprep.subr.mxu0 0.0
        %4212 = vmatpush1.xpose.msra.mxu0 0.0
        %4213 = vmatprep.subr.mxu0 0.0
        %4214 = vmatpush1.xpose.msra.mxu0 0.0
        %4215 = vmatprep.subr.mxu0 %v4085
        %4216 = vmatpush1.xpose.msra.mxu0 %v4083
        %4217 = vmatprep.subr.mxu0 0.0
        %4218 = vmatpush2.xpose.msra.mxu0 0.0
        %4219 = vmatprep.subr.mxu0 0.0
        %4220 = vmatpush2.xpose.msra.mxu0 0.0
        %4221 = vmatprep.subr.mxu0 0.0
        %4222 = vmatpush2.xpose.msra.mxu0 0.0
        %4223 = vmatprep.subr.mxu0 0.0
        %4224 = vmatpush2.xpose.msra.mxu0 0.0
        %4225 = vmatprep.subr.mxu0 0.0
        %4226 = vmatpush2.xpose.msra.mxu0 0.0
        %4227 = vmatprep.subr.mxu0 0.0
        %4228 = vmatpush2.xpose.msra.mxu0 0.0
        %4229 = vmatprep.subr.mxu0 0.0
        %4230 = vmatpush2.xpose.msra.mxu0 0.0
        %4231 = vmatprep.subr.mxu0 0.0
        %4232 = vmatpush2.xpose.msra.mxu0 0.0
        %4233 = vmatprep.subr.mxu0 0.0
        %4234 = vmatpush2.xpose.msra.mxu0 0.0
        %4235 = vmatprep.subr.mxu0 0.0
        %4236 = vmatpush2.xpose.msra.mxu0 0.0
        %4237 = vmatprep.subr.mxu0 0.0
        %4238 = vmatpush2.xpose.msra.mxu0 0.0
        %4239 = vmatprep.subr.mxu0 0.0
        %4240 = vmatpush2.xpose.msra.mxu0 0.0
        %4241 = vmatprep.subr.mxu0 0.0
        %4242 = vmatpush2.xpose.msra.mxu0 0.0
        %4243 = vmatprep.subr.mxu0 0.0
        %4244 = vmatpush2.xpose.msra.mxu0 0.0
        %4245 = vmatprep.subr.mxu0 0.0
        %4246 = vmatpush2.xpose.msra.mxu0 0.0
        %4247 = vmatprep.subr.mxu0 0.0
        %4248 = vmatpush2.xpose.msra.mxu0 0.0
        %4249 = vmatprep.mubr.f32.mxu0 %v3902
        %4250 = vmatmul.mubr.f32.gmra.mxu0 %v3901
        %v4251 = vpop.f32.mrf.mxu0
        %v4252 = vadd.f32 %v4167, %v4251
        %v4253 = vpop.f32.mrf.mxu0
        %4254 = vmatprep.mubr.f32.mxu0 %v3908
        %4255 = vmatmul.mubr.f32.gmra.mxu0 %v3907
        %v4256 = vpop.f32.mrf.mxu0
        %v4257 = vadd.f32 %v4172, %v4256
        %v4258 = vpop.f32.mrf.mxu0
        %4259 = vmatprep.mubr.f32.mxu0 %v3914
        %4260 = vmatmul.mubr.f32.gmra.mxu0 %v3913
        %v4261 = vpop.f32.mrf.mxu0
        %v4262 = vadd.f32 %v4177, %v4261
        %v4263 = vpop.f32.mrf.mxu0
        %4264 = vmatprep.mubr.f32.mxu0 %v3920
        %4265 = vmatmul.mubr.f32.gmra.mxu0 %v3919
        %v4266 = vpop.f32.mrf.mxu0
        %v4267 = vadd.f32 %v4182, %v4266
        %v4268 = vpop.f32.mrf.mxu0
        %4269 = vdwg.mxu0
        %4270 = vmatprep.subr.mxu0 0.0
        %4271 = vmatpush1.xpose.msra.mxu0 0.0
        %4272 = vmatprep.subr.mxu0 0.0
        %4273 = vmatpush1.xpose.msra.mxu0 0.0
        %4274 = vmatprep.subr.mxu0 0.0
        %4275 = vmatpush1.xpose.msra.mxu0 0.0
        %4276 = vmatprep.subr.mxu0 0.0
        %4277 = vmatpush1.xpose.msra.mxu0 0.0
        %4278 = vmatprep.subr.mxu0 0.0
        %4279 = vmatpush1.xpose.msra.mxu0 0.0
        %4280 = vmatprep.subr.mxu0 0.0
        %4281 = vmatpush1.xpose.msra.mxu0 0.0
        %4282 = vmatprep.subr.mxu0 0.0
        %4283 = vmatpush1.xpose.msra.mxu0 0.0
        %4284 = vmatprep.subr.mxu0 0.0
        %4285 = vmatpush1.xpose.msra.mxu0 0.0
        %4286 = vmatprep.subr.mxu0 0.0
        %4287 = vmatpush1.xpose.msra.mxu0 0.0
        %4288 = vmatprep.subr.mxu0 0.0
        %4289 = vmatpush1.xpose.msra.mxu0 0.0
        %4290 = vmatprep.subr.mxu0 0.0
        %4291 = vmatpush1.xpose.msra.mxu0 0.0
        %4292 = vmatprep.subr.mxu0 0.0
        %4293 = vmatpush1.xpose.msra.mxu0 0.0
        %4294 = vmatprep.subr.mxu0 0.0
        %4295 = vmatpush1.xpose.msra.mxu0 0.0
        %4296 = vmatprep.subr.mxu0 0.0
        %4297 = vmatpush1.xpose.msra.mxu0 0.0
        %4298 = vmatprep.subr.mxu0 0.0
        %4299 = vmatpush1.xpose.msra.mxu0 0.0
        %4300 = vmatprep.subr.mxu0 %v4093
        %4301 = vmatpush1.xpose.msra.mxu0 %v4092
        %4302 = vmatprep.subr.mxu0 0.0
        %4303 = vmatpush2.xpose.msra.mxu0 0.0
        %4304 = vmatprep.subr.mxu0 0.0
        %4305 = vmatpush2.xpose.msra.mxu0 0.0
        %4306 = vmatprep.subr.mxu0 0.0
        %4307 = vmatpush2.xpose.msra.mxu0 0.0
        %4308 = vmatprep.subr.mxu0 0.0
        %4309 = vmatpush2.xpose.msra.mxu0 0.0
        %4310 = vmatprep.subr.mxu0 0.0
        %4311 = vmatpush2.xpose.msra.mxu0 0.0
        %4312 = vmatprep.subr.mxu0 0.0
        %4313 = vmatpush2.xpose.msra.mxu0 0.0
        %4314 = vmatprep.subr.mxu0 0.0
        %4315 = vmatpush2.xpose.msra.mxu0 0.0
        %4316 = vmatprep.subr.mxu0 0.0
        %4317 = vmatpush2.xpose.msra.mxu0 0.0
        %4318 = vmatprep.subr.mxu0 0.0
        %4319 = vmatpush2.xpose.msra.mxu0 0.0
        %4320 = vmatprep.subr.mxu0 0.0
        %4321 = vmatpush2.xpose.msra.mxu0 0.0
        %4322 = vmatprep.subr.mxu0 0.0
        %4323 = vmatpush2.xpose.msra.mxu0 0.0
        %4324 = vmatprep.subr.mxu0 0.0
        %4325 = vmatpush2.xpose.msra.mxu0 0.0
        %4326 = vmatprep.subr.mxu0 0.0
        %4327 = vmatpush2.xpose.msra.mxu0 0.0
        %4328 = vmatprep.subr.mxu0 0.0
        %4329 = vmatpush2.xpose.msra.mxu0 0.0
        %4330 = vmatprep.subr.mxu0 0.0
        %4331 = vmatpush2.xpose.msra.mxu0 0.0
        %4332 = vmatprep.subr.mxu0 0.0
        %4333 = vmatpush2.xpose.msra.mxu0 0.0
        %4334 = vmatprep.mubr.f32.mxu0 %v3904
        %4335 = vmatmul.mubr.f32.gmra.mxu0 %v3903
        %v4336 = vpop.f32.mrf.mxu0
        %v4337 = vadd.f32 %v4252, %v4336
        %v4338 = vpop.f32.mrf.mxu0
        %4339 = vmatprep.mubr.f32.mxu0 %v3910
        %4340 = vmatmul.mubr.f32.gmra.mxu0 %v3909
        %v4341 = vpop.f32.mrf.mxu0
        %v4342 = vadd.f32 %v4257, %v4341
        %v4343 = vpop.f32.mrf.mxu0
        %4344 = vmatprep.mubr.f32.mxu0 %v3916
        %4345 = vmatmul.mubr.f32.gmra.mxu0 %v3915
        %v4346 = vpop.f32.mrf.mxu0
        %v4347 = vadd.f32 %v4262, %v4346
        %v4348 = vpop.f32.mrf.mxu0
        %4349 = vmatprep.mubr.f32.mxu0 %v3922
        %4350 = vmatmul.mubr.f32.gmra.mxu0 %v3921
        %v4351 = vpop.f32.mrf.mxu0
        %v4352 = vadd.f32 %v4267, %v4351
        %v4353 = vpop.f32.mrf.mxu0
        %4354 = vdwg.mxu0
        %v4357 = vcombine.high %v3893, %v3893
        %v4359 = vunpack.c.l.s4 1983009808
        %v4360 = vunpack.c.0.s8 %v4359
        %v4361 = vlaneseq
        %v4362 = vshrl.u32 %v4361, 7
        %v4363 = vsub.s32 %v4360, %v4362
        %v4364 = vrot.slane %v3893, %v4363
        %v4366 = vunpack.c.l.s4 1983009808
        %v4367 = vunpack.c.0.s8 %v4366
        %v4368 = vlaneseq
        %v4369 = vshrl.u32 %v4368, 7
        %v4370 = vsub.s32 %v4367, %v4369
        %v4371 = vrot.slane %v4357, %v4370
        %v4372 = vcombine.high %v4364, %v4364
        %v4373 = vcombine.high %v4371, %v4371
        %v4375 = vunpack.c.l.s4 1983009808
        %v4376 = vunpack.c.0.s8 %v4375
        %v4377 = vlaneseq
        %v4378 = vshrl.u32 %v4377, 7
        %v4379 = vsub.s32 %v4376, %v4378
        %v4380 = vrot.slane %v3894, %v4379
        %v4381 = vcombine.high %v4380, %v4380
        %4388 = vmatprep.subr.mxu0 0.0
        %4389 = vmatpush1.xpose.msra.mxu0 0.0
        %4390 = vmatprep.subr.mxu0 0.0
        %4391 = vmatpush1.xpose.msra.mxu0 0.0
        %4392 = vmatprep.subr.mxu0 0.0
        %4393 = vmatpush1.xpose.msra.mxu0 0.0
        %4394 = vmatprep.subr.mxu0 0.0
        %4395 = vmatpush1.xpose.msra.mxu0 0.0
        %4396 = vmatprep.subr.mxu0 0.0
        %4397 = vmatpush1.xpose.msra.mxu0 0.0
        %4398 = vmatprep.subr.mxu0 0.0
        %4399 = vmatpush1.xpose.msra.mxu0 0.0
        %4400 = vmatprep.subr.mxu0 0.0
        %4401 = vmatpush1.xpose.msra.mxu0 0.0
        %4402 = vmatprep.subr.mxu0 0.0
        %4403 = vmatpush1.xpose.msra.mxu0 0.0
        %4404 = vmatprep.subr.mxu0 0.0
        %4405 = vmatpush1.xpose.msra.mxu0 0.0
        %4406 = vmatprep.subr.mxu0 0.0
        %4407 = vmatpush1.xpose.msra.mxu0 0.0
        %4408 = vmatprep.subr.mxu0 0.0
        %4409 = vmatpush1.xpose.msra.mxu0 0.0
        %4410 = vmatprep.subr.mxu0 0.0
        %4411 = vmatpush1.xpose.msra.mxu0 0.0
        %4412 = vmatprep.subr.mxu0 0.0
        %4413 = vmatpush1.xpose.msra.mxu0 0.0
        %4414 = vmatprep.subr.mxu0 0.0
        %4415 = vmatpush1.xpose.msra.mxu0 0.0
        %4416 = vmatprep.subr.mxu0 0.0
        %4417 = vmatpush1.xpose.msra.mxu0 0.0
        %4418 = vmatprep.subr.mxu0 %v4372
        %4419 = vmatpush1.xpose.msra.mxu0 %v4364
        %4420 = vmatprep.subr.mxu0 0.0
        %4421 = vmatpush2.xpose.msra.mxu0 0.0
        %4422 = vmatprep.subr.mxu0 0.0
        %4423 = vmatpush2.xpose.msra.mxu0 0.0
        %4424 = vmatprep.subr.mxu0 0.0
        %4425 = vmatpush2.xpose.msra.mxu0 0.0
        %4426 = vmatprep.subr.mxu0 0.0
        %4427 = vmatpush2.xpose.msra.mxu0 0.0
        %4428 = vmatprep.subr.mxu0 0.0
        %4429 = vmatpush2.xpose.msra.mxu0 0.0
        %4430 = vmatprep.subr.mxu0 0.0
        %4431 = vmatpush2.xpose.msra.mxu0 0.0
        %4432 = vmatprep.subr.mxu0 0.0
        %4433 = vmatpush2.xpose.msra.mxu0 0.0
        %4434 = vmatprep.subr.mxu0 0.0
        %4435 = vmatpush2.xpose.msra.mxu0 0.0
        %4436 = vmatprep.subr.mxu0 0.0
        %4437 = vmatpush2.xpose.msra.mxu0 0.0
        %4438 = vmatprep.subr.mxu0 0.0
        %4439 = vmatpush2.xpose.msra.mxu0 0.0
        %4440 = vmatprep.subr.mxu0 0.0
        %4441 = vmatpush2.xpose.msra.mxu0 0.0
        %4442 = vmatprep.subr.mxu0 0.0
        %4443 = vmatpush2.xpose.msra.mxu0 0.0
        %4444 = vmatprep.subr.mxu0 0.0
        %4445 = vmatpush2.xpose.msra.mxu0 0.0
        %4446 = vmatprep.subr.mxu0 0.0
        %4447 = vmatpush2.xpose.msra.mxu0 0.0
        %4448 = vmatprep.subr.mxu0 0.0
        %4449 = vmatpush2.xpose.msra.mxu0 0.0
        %4450 = vmatprep.subr.mxu0 0.0
        %4451 = vmatpush2.xpose.msra.mxu0 0.0
        %4452 = vmatprep.mubr.f32.mxu0 %v3330
        %4453 = vmatmul.mubr.f32.gmra.mxu0 %v3328
        %v4454 = vpop.f32.mrf.mxu0
        %v4455 = vadd.f32 %v4337, %v4454
        %v4456 = vpop.f32.mrf.mxu0
        %4457 = vmatprep.mubr.f32.mxu0 %v3489
        %4458 = vmatmul.mubr.f32.gmra.mxu0 %v3487
        %v4459 = vpop.f32.mrf.mxu0
        %v4460 = vadd.f32 %v4342, %v4459
        %v4461 = vpop.f32.mrf.mxu0
        %4462 = vmatprep.mubr.f32.mxu0 %v3648
        %4463 = vmatmul.mubr.f32.gmra.mxu0 %v3646
        %v4464 = vpop.f32.mrf.mxu0
        %v4465 = vadd.f32 %v4347, %v4464
        %v4466 = vpop.f32.mrf.mxu0
        %4467 = vmatprep.mubr.f32.mxu0 %v3807
        %4468 = vmatmul.mubr.f32.gmra.mxu0 %v3805
        %v4469 = vpop.f32.mrf.mxu0
        %v4470 = vadd.f32 %v4352, %v4469
        %v4471 = vpop.f32.mrf.mxu0
        %4472 = vdwg.mxu0
        %4473 = vmatprep.subr.mxu0 0.0
        %4474 = vmatpush1.xpose.msra.mxu0 0.0
        %4475 = vmatprep.subr.mxu0 0.0
        %4476 = vmatpush1.xpose.msra.mxu0 0.0
        %4477 = vmatprep.subr.mxu0 0.0
        %4478 = vmatpush1.xpose.msra.mxu0 0.0
        %4479 = vmatprep.subr.mxu0 0.0
        %4480 = vmatpush1.xpose.msra.mxu0 0.0
        %4481 = vmatprep.subr.mxu0 0.0
        %4482 = vmatpush1.xpose.msra.mxu0 0.0
        %4483 = vmatprep.subr.mxu0 0.0
        %4484 = vmatpush1.xpose.msra.mxu0 0.0
        %4485 = vmatprep.subr.mxu0 0.0
        %4486 = vmatpush1.xpose.msra.mxu0 0.0
        %4487 = vmatprep.subr.mxu0 0.0
        %4488 = vmatpush1.xpose.msra.mxu0 0.0
        %4489 = vmatprep.subr.mxu0 0.0
        %4490 = vmatpush1.xpose.msra.mxu0 0.0
        %4491 = vmatprep.subr.mxu0 0.0
        %4492 = vmatpush1.xpose.msra.mxu0 0.0
        %4493 = vmatprep.subr.mxu0 0.0
        %4494 = vmatpush1.xpose.msra.mxu0 0.0
        %4495 = vmatprep.subr.mxu0 0.0
        %4496 = vmatpush1.xpose.msra.mxu0 0.0
        %4497 = vmatprep.subr.mxu0 0.0
        %4498 = vmatpush1.xpose.msra.mxu0 0.0
        %4499 = vmatprep.subr.mxu0 0.0
        %4500 = vmatpush1.xpose.msra.mxu0 0.0
        %4501 = vmatprep.subr.mxu0 0.0
        %4502 = vmatpush1.xpose.msra.mxu0 0.0
        %4503 = vmatprep.subr.mxu0 %v4373
        %4504 = vmatpush1.xpose.msra.mxu0 %v4371
        %4505 = vmatprep.subr.mxu0 0.0
        %4506 = vmatpush2.xpose.msra.mxu0 0.0
        %4507 = vmatprep.subr.mxu0 0.0
        %4508 = vmatpush2.xpose.msra.mxu0 0.0
        %4509 = vmatprep.subr.mxu0 0.0
        %4510 = vmatpush2.xpose.msra.mxu0 0.0
        %4511 = vmatprep.subr.mxu0 0.0
        %4512 = vmatpush2.xpose.msra.mxu0 0.0
        %4513 = vmatprep.subr.mxu0 0.0
        %4514 = vmatpush2.xpose.msra.mxu0 0.0
        %4515 = vmatprep.subr.mxu0 0.0
        %4516 = vmatpush2.xpose.msra.mxu0 0.0
        %4517 = vmatprep.subr.mxu0 0.0
        %4518 = vmatpush2.xpose.msra.mxu0 0.0
        %4519 = vmatprep.subr.mxu0 0.0
        %4520 = vmatpush2.xpose.msra.mxu0 0.0
        %4521 = vmatprep.subr.mxu0 0.0
        %4522 = vmatpush2.xpose.msra.mxu0 0.0
        %4523 = vmatprep.subr.mxu0 0.0
        %4524 = vmatpush2.xpose.msra.mxu0 0.0
        %4525 = vmatprep.subr.mxu0 0.0
        %4526 = vmatpush2.xpose.msra.mxu0 0.0
        %4527 = vmatprep.subr.mxu0 0.0
        %4528 = vmatpush2.xpose.msra.mxu0 0.0
        %4529 = vmatprep.subr.mxu0 0.0
        %4530 = vmatpush2.xpose.msra.mxu0 0.0
        %4531 = vmatprep.subr.mxu0 0.0
        %4532 = vmatpush2.xpose.msra.mxu0 0.0
        %4533 = vmatprep.subr.mxu0 0.0
        %4534 = vmatpush2.xpose.msra.mxu0 0.0
        %4535 = vmatprep.subr.mxu0 0.0
        %4536 = vmatpush2.xpose.msra.mxu0 0.0
        %4537 = vmatprep.mubr.f32.mxu0 %v3371
        %4538 = vmatmul.mubr.f32.gmra.mxu0 %v3369
        %v4539 = vpop.f32.mrf.mxu0
        %v4540 = vadd.f32 %v4455, %v4539
        %v4541 = vpop.f32.mrf.mxu0
        %4542 = vmatprep.mubr.f32.mxu0 %v3530
        %4543 = vmatmul.mubr.f32.gmra.mxu0 %v3528
        %v4544 = vpop.f32.mrf.mxu0
        %v4545 = vadd.f32 %v4460, %v4544
        %v4546 = vpop.f32.mrf.mxu0
        %4547 = vmatprep.mubr.f32.mxu0 %v3689
        %4548 = vmatmul.mubr.f32.gmra.mxu0 %v3687
        %v4549 = vpop.f32.mrf.mxu0
        %v4550 = vadd.f32 %v4465, %v4549
        %v4551 = vpop.f32.mrf.mxu0
        %4552 = vmatprep.mubr.f32.mxu0 %v3848
        %4553 = vmatmul.mubr.f32.gmra.mxu0 %v3846
        %v4554 = vpop.f32.mrf.mxu0
        %v4555 = vadd.f32 %v4470, %v4554
        %v4556 = vpop.f32.mrf.mxu0
        %4557 = vdwg.mxu0
        %4558 = vmatprep.subr.mxu0 0.0
        %4559 = vmatpush1.xpose.msra.mxu0 0.0
        %4560 = vmatprep.subr.mxu0 0.0
        %4561 = vmatpush1.xpose.msra.mxu0 0.0
        %4562 = vmatprep.subr.mxu0 0.0
        %4563 = vmatpush1.xpose.msra.mxu0 0.0
        %4564 = vmatprep.subr.mxu0 0.0
        %4565 = vmatpush1.xpose.msra.mxu0 0.0
        %4566 = vmatprep.subr.mxu0 0.0
        %4567 = vmatpush1.xpose.msra.mxu0 0.0
        %4568 = vmatprep.subr.mxu0 0.0
        %4569 = vmatpush1.xpose.msra.mxu0 0.0
        %4570 = vmatprep.subr.mxu0 0.0
        %4571 = vmatpush1.xpose.msra.mxu0 0.0
        %4572 = vmatprep.subr.mxu0 0.0
        %4573 = vmatpush1.xpose.msra.mxu0 0.0
        %4574 = vmatprep.subr.mxu0 0.0
        %4575 = vmatpush1.xpose.msra.mxu0 0.0
        %4576 = vmatprep.subr.mxu0 0.0
        %4577 = vmatpush1.xpose.msra.mxu0 0.0
        %4578 = vmatprep.subr.mxu0 0.0
        %4579 = vmatpush1.xpose.msra.mxu0 0.0
        %4580 = vmatprep.subr.mxu0 0.0
        %4581 = vmatpush1.xpose.msra.mxu0 0.0
        %4582 = vmatprep.subr.mxu0 0.0
        %4583 = vmatpush1.xpose.msra.mxu0 0.0
        %4584 = vmatprep.subr.mxu0 0.0
        %4585 = vmatpush1.xpose.msra.mxu0 0.0
        %4586 = vmatprep.subr.mxu0 0.0
        %4587 = vmatpush1.xpose.msra.mxu0 0.0
        %4588 = vmatprep.subr.mxu0 %v4381
        %4589 = vmatpush1.xpose.msra.mxu0 %v4380
        %4590 = vmatprep.subr.mxu0 0.0
        %4591 = vmatpush2.xpose.msra.mxu0 0.0
        %4592 = vmatprep.subr.mxu0 0.0
        %4593 = vmatpush2.xpose.msra.mxu0 0.0
        %4594 = vmatprep.subr.mxu0 0.0
        %4595 = vmatpush2.xpose.msra.mxu0 0.0
        %4596 = vmatprep.subr.mxu0 0.0
        %4597 = vmatpush2.xpose.msra.mxu0 0.0
        %4598 = vmatprep.subr.mxu0 0.0
        %4599 = vmatpush2.xpose.msra.mxu0 0.0
        %4600 = vmatprep.subr.mxu0 0.0
        %4601 = vmatpush2.xpose.msra.mxu0 0.0
        %4602 = vmatprep.subr.mxu0 0.0
        %4603 = vmatpush2.xpose.msra.mxu0 0.0
        %4604 = vmatprep.subr.mxu0 0.0
        %4605 = vmatpush2.xpose.msra.mxu0 0.0
        %4606 = vmatprep.subr.mxu0 0.0
        %4607 = vmatpush2.xpose.msra.mxu0 0.0
        %4608 = vmatprep.subr.mxu0 0.0
        %4609 = vmatpush2.xpose.msra.mxu0 0.0
        %4610 = vmatprep.subr.mxu0 0.0
        %4611 = vmatpush2.xpose.msra.mxu0 0.0
        %4612 = vmatprep.subr.mxu0 0.0
        %4613 = vmatpush2.xpose.msra.mxu0 0.0
        %4614 = vmatprep.subr.mxu0 0.0
        %4615 = vmatpush2.xpose.msra.mxu0 0.0
        %4616 = vmatprep.subr.mxu0 0.0
        %4617 = vmatpush2.xpose.msra.mxu0 0.0
        %4618 = vmatprep.subr.mxu0 0.0
        %4619 = vmatpush2.xpose.msra.mxu0 0.0
        %4620 = vmatprep.subr.mxu0 0.0
        %4621 = vmatpush2.xpose.msra.mxu0 0.0
        %4622 = vmatprep.mubr.f32.mxu0 %v3412
        %4623 = vmatmul.mubr.f32.gmra.mxu0 %v3410
        %v4624 = vpop.f32.mrf.mxu0
        %v4625 = vadd.f32 %v4540, %v4624
        %v4626 = vpop.f32.mrf.mxu0
        %4627 = vmatprep.mubr.f32.mxu0 %v3571
        %4628 = vmatmul.mubr.f32.gmra.mxu0 %v3569
        %v4629 = vpop.f32.mrf.mxu0
        %v4630 = vadd.f32 %v4545, %v4629
        %v4631 = vpop.f32.mrf.mxu0
        %4632 = vmatprep.mubr.f32.mxu0 %v3730
        %4633 = vmatmul.mubr.f32.gmra.mxu0 %v3728
        %v4634 = vpop.f32.mrf.mxu0
        %v4635 = vadd.f32 %v4550, %v4634
        %v4636 = vpop.f32.mrf.mxu0
        %4637 = vmatprep.mubr.f32.mxu0 %v3889
        %4638 = vmatmul.mubr.f32.gmra.mxu0 %v3887
        %v4639 = vpop.f32.mrf.mxu0
        %v4640 = vadd.f32 %v4555, %v4639
        %v4641 = vpop.f32.mrf.mxu0
        %4642 = vdwg.mxu0
        %vm4667 = vcmask 1041409
        %v4668 = vsel %vm4667, %v3964, %v3928
        %vm4669 = vcmask 1042434
        %v4670 = vsel %vm4669, %v4000, %v4668
        %vm4671 = vcmask 1043459
        %v4672 = vsel %vm4671, %v4036, %v4670
        %v4673 = vsel %vm4667, %v3970, %v3934
        %v4674 = vsel %vm4669, %v4006, %v4673
        %v4675 = vsel %vm4671, %v4042, %v4674
        %v4676 = vsel %vm4667, %v3976, %v3940
        %v4677 = vsel %vm4669, %v4012, %v4676
        %v4678 = vsel %vm4671, %v4048, %v4677
        %v4679 = vsel %vm4667, %v3982, %v3946
        %v4680 = vsel %vm4669, %v4018, %v4679
        %v4681 = vsel %vm4671, %v4054, %v4680
        %v4682 = vsel %vm4667, %v3988, %v3952
        %v4683 = vsel %vm4669, %v4024, %v4682
        %v4684 = vsel %vm4671, %v4060, %v4683
        %v4685 = vsel %vm4667, %v3994, %v3958
        %v4686 = vsel %vm4669, %v4030, %v4685
        %v4687 = vsel %vm4671, %v4066, %v4686
        %v4696 = vcombine.high %v3897, %v3897
        %v4698 = vunpack.c.l.s4 1983009808
        %v4699 = vunpack.c.0.s8 %v4698
        %v4700 = vlaneseq
        %v4701 = vshrl.u32 %v4700, 7
        %v4702 = vsub.s32 %v4699, %v4701
        %v4703 = vrot.slane %v3897, %v4702
        %v4705 = vunpack.c.l.s4 1983009808
        %v4706 = vunpack.c.0.s8 %v4705
        %v4707 = vlaneseq
        %v4708 = vshrl.u32 %v4707, 7
        %v4709 = vsub.s32 %v4706, %v4708
        %v4710 = vrot.slane %v4696, %v4709
        %v4711 = vcombine.high %v4703, %v4703
        %v4712 = vcombine.high %v4710, %v4710
        %v4714 = vunpack.c.l.s4 1983009808
        %v4715 = vunpack.c.0.s8 %v4714
        %v4716 = vlaneseq
        %v4717 = vshrl.u32 %v4716, 7
        %v4718 = vsub.s32 %v4715, %v4717
        %v4719 = vrot.slane %v3898, %v4718
        %v4720 = vcombine.high %v4719, %v4719
        %4727 = vmatprep.subr.mxu0 0.0
        %4728 = vmatpush1.xpose.msra.mxu0 0.0
        %4729 = vmatprep.subr.mxu0 0.0
        %4730 = vmatpush1.xpose.msra.mxu0 0.0
        %4731 = vmatprep.subr.mxu0 0.0
        %4732 = vmatpush1.xpose.msra.mxu0 0.0
        %4733 = vmatprep.subr.mxu0 0.0
        %4734 = vmatpush1.xpose.msra.mxu0 0.0
        %4735 = vmatprep.subr.mxu0 0.0
        %4736 = vmatpush1.xpose.msra.mxu0 0.0
        %4737 = vmatprep.subr.mxu0 0.0
        %4738 = vmatpush1.xpose.msra.mxu0 0.0
        %4739 = vmatprep.subr.mxu0 0.0
        %4740 = vmatpush1.xpose.msra.mxu0 0.0
        %4741 = vmatprep.subr.mxu0 0.0
        %4742 = vmatpush1.xpose.msra.mxu0 0.0
        %4743 = vmatprep.subr.mxu0 0.0
        %4744 = vmatpush1.xpose.msra.mxu0 0.0
        %4745 = vmatprep.subr.mxu0 0.0
        %4746 = vmatpush1.xpose.msra.mxu0 0.0
        %4747 = vmatprep.subr.mxu0 0.0
        %4748 = vmatpush1.xpose.msra.mxu0 0.0
        %4749 = vmatprep.subr.mxu0 0.0
        %4750 = vmatpush1.xpose.msra.mxu0 0.0
        %4751 = vmatprep.subr.mxu0 0.0
        %4752 = vmatpush1.xpose.msra.mxu0 0.0
        %4753 = vmatprep.subr.mxu0 0.0
        %4754 = vmatpush1.xpose.msra.mxu0 0.0
        %4755 = vmatprep.subr.mxu0 0.0
        %4756 = vmatpush1.xpose.msra.mxu0 0.0
        %4757 = vmatprep.subr.mxu0 %v4711
        %4758 = vmatpush1.xpose.msra.mxu0 %v4703
        %4759 = vmatprep.subr.mxu0 0.0
        %4760 = vmatpush2.xpose.msra.mxu0 0.0
        %4761 = vmatprep.subr.mxu0 0.0
        %4762 = vmatpush2.xpose.msra.mxu0 0.0
        %4763 = vmatprep.subr.mxu0 0.0
        %4764 = vmatpush2.xpose.msra.mxu0 0.0
        %4765 = vmatprep.subr.mxu0 0.0
        %4766 = vmatpush2.xpose.msra.mxu0 0.0
        %4767 = vmatprep.subr.mxu0 0.0
        %4768 = vmatpush2.xpose.msra.mxu0 0.0
        %4769 = vmatprep.subr.mxu0 0.0
        %4770 = vmatpush2.xpose.msra.mxu0 0.0
        %4771 = vmatprep.subr.mxu0 0.0
        %4772 = vmatpush2.xpose.msra.mxu0 0.0
        %4773 = vmatprep.subr.mxu0 0.0
        %4774 = vmatpush2.xpose.msra.mxu0 0.0
        %4775 = vmatprep.subr.mxu0 0.0
        %4776 = vmatpush2.xpose.msra.mxu0 0.0
        %4777 = vmatprep.subr.mxu0 0.0
        %4778 = vmatpush2.xpose.msra.mxu0 0.0
        %4779 = vmatprep.subr.mxu0 0.0
        %4780 = vmatpush2.xpose.msra.mxu0 0.0
        %4781 = vmatprep.subr.mxu0 0.0
        %4782 = vmatpush2.xpose.msra.mxu0 0.0
        %4783 = vmatprep.subr.mxu0 0.0
        %4784 = vmatpush2.xpose.msra.mxu0 0.0
        %4785 = vmatprep.subr.mxu0 0.0
        %4786 = vmatpush2.xpose.msra.mxu0 0.0
        %4787 = vmatprep.subr.mxu0 0.0
        %4788 = vmatpush2.xpose.msra.mxu0 0.0
        %4789 = vmatprep.subr.mxu0 0.0
        %4790 = vmatpush2.xpose.msra.mxu0 0.0
        %4791 = vmatprep.mubr.f32.mxu0 %v4675
        %4792 = vmatmul.mubr.f32.gmra.mxu0 %v4672
        %v4793 = vpop.f32.mrf.mxu0
        %v4794 = vadd.f32 0.0, %v4793
        %v4795 = vpop.f32.mrf.mxu0
        %4796 = vdwg.mxu0
        %4797 = vmatprep.subr.mxu0 0.0
        %4798 = vmatpush1.xpose.msra.mxu0 0.0
        %4799 = vmatprep.subr.mxu0 0.0
        %4800 = vmatpush1.xpose.msra.mxu0 0.0
        %4801 = vmatprep.subr.mxu0 0.0
        %4802 = vmatpush1.xpose.msra.mxu0 0.0
        %4803 = vmatprep.subr.mxu0 0.0
        %4804 = vmatpush1.xpose.msra.mxu0 0.0
        %4805 = vmatprep.subr.mxu0 0.0
        %4806 = vmatpush1.xpose.msra.mxu0 0.0
        %4807 = vmatprep.subr.mxu0 0.0
        %4808 = vmatpush1.xpose.msra.mxu0 0.0
        %4809 = vmatprep.subr.mxu0 0.0
        %4810 = vmatpush1.xpose.msra.mxu0 0.0
        %4811 = vmatprep.subr.mxu0 0.0
        %4812 = vmatpush1.xpose.msra.mxu0 0.0
        %4813 = vmatprep.subr.mxu0 0.0
        %4814 = vmatpush1.xpose.msra.mxu0 0.0
        %4815 = vmatprep.subr.mxu0 0.0
        %4816 = vmatpush1.xpose.msra.mxu0 0.0
        %4817 = vmatprep.subr.mxu0 0.0
        %4818 = vmatpush1.xpose.msra.mxu0 0.0
        %4819 = vmatprep.subr.mxu0 0.0
        %4820 = vmatpush1.xpose.msra.mxu0 0.0
        %4821 = vmatprep.subr.mxu0 0.0
        %4822 = vmatpush1.xpose.msra.mxu0 0.0
        %4823 = vmatprep.subr.mxu0 0.0
        %4824 = vmatpush1.xpose.msra.mxu0 0.0
        %4825 = vmatprep.subr.mxu0 0.0
        %4826 = vmatpush1.xpose.msra.mxu0 0.0
        %4827 = vmatprep.subr.mxu0 %v4712
        %4828 = vmatpush1.xpose.msra.mxu0 %v4710
        %4829 = vmatprep.subr.mxu0 0.0
        %4830 = vmatpush2.xpose.msra.mxu0 0.0
        %4831 = vmatprep.subr.mxu0 0.0
        %4832 = vmatpush2.xpose.msra.mxu0 0.0
        %4833 = vmatprep.subr.mxu0 0.0
        %4834 = vmatpush2.xpose.msra.mxu0 0.0
        %4835 = vmatprep.subr.mxu0 0.0
        %4836 = vmatpush2.xpose.msra.mxu0 0.0
        %4837 = vmatprep.subr.mxu0 0.0
        %4838 = vmatpush2.xpose.msra.mxu0 0.0
        %4839 = vmatprep.subr.mxu0 0.0
        %4840 = vmatpush2.xpose.msra.mxu0 0.0
        %4841 = vmatprep.subr.mxu0 0.0
        %4842 = vmatpush2.xpose.msra.mxu0 0.0
        %4843 = vmatprep.subr.mxu0 0.0
        %4844 = vmatpush2.xpose.msra.mxu0 0.0
        %4845 = vmatprep.subr.mxu0 0.0
        %4846 = vmatpush2.xpose.msra.mxu0 0.0
        %4847 = vmatprep.subr.mxu0 0.0
        %4848 = vmatpush2.xpose.msra.mxu0 0.0
        %4849 = vmatprep.subr.mxu0 0.0
        %4850 = vmatpush2.xpose.msra.mxu0 0.0
        %4851 = vmatprep.subr.mxu0 0.0
        %4852 = vmatpush2.xpose.msra.mxu0 0.0
        %4853 = vmatprep.subr.mxu0 0.0
        %4854 = vmatpush2.xpose.msra.mxu0 0.0
        %4855 = vmatprep.subr.mxu0 0.0
        %4856 = vmatpush2.xpose.msra.mxu0 0.0
        %4857 = vmatprep.subr.mxu0 0.0
        %4858 = vmatpush2.xpose.msra.mxu0 0.0
        %4859 = vmatprep.subr.mxu0 0.0
        %4860 = vmatpush2.xpose.msra.mxu0 0.0
        %4861 = vmatprep.mubr.f32.mxu0 %v4681
        %4862 = vmatmul.mubr.f32.gmra.mxu0 %v4678
        %v4863 = vpop.f32.mrf.mxu0
        %v4864 = vadd.f32 %v4794, %v4863
        %v4865 = vpop.f32.mrf.mxu0
        %4866 = vdwg.mxu0
        %4867 = vmatprep.subr.mxu0 0.0
        %4868 = vmatpush1.xpose.msra.mxu0 0.0
        %4869 = vmatprep.subr.mxu0 0.0
        %4870 = vmatpush1.xpose.msra.mxu0 0.0
        %4871 = vmatprep.subr.mxu0 0.0
        %4872 = vmatpush1.xpose.msra.mxu0 0.0
        %4873 = vmatprep.subr.mxu0 0.0
        %4874 = vmatpush1.xpose.msra.mxu0 0.0
        %4875 = vmatprep.subr.mxu0 0.0
        %4876 = vmatpush1.xpose.msra.mxu0 0.0
        %4877 = vmatprep.subr.mxu0 0.0
        %4878 = vmatpush1.xpose.msra.mxu0 0.0
        %4879 = vmatprep.subr.mxu0 0.0
        %4880 = vmatpush1.xpose.msra.mxu0 0.0
        %4881 = vmatprep.subr.mxu0 0.0
        %4882 = vmatpush1.xpose.msra.mxu0 0.0
        %4883 = vmatprep.subr.mxu0 0.0
        %4884 = vmatpush1.xpose.msra.mxu0 0.0
        %4885 = vmatprep.subr.mxu0 0.0
        %4886 = vmatpush1.xpose.msra.mxu0 0.0
        %4887 = vmatprep.subr.mxu0 0.0
        %4888 = vmatpush1.xpose.msra.mxu0 0.0
        %4889 = vmatprep.subr.mxu0 0.0
        %4890 = vmatpush1.xpose.msra.mxu0 0.0
        %4891 = vmatprep.subr.mxu0 0.0
        %4892 = vmatpush1.xpose.msra.mxu0 0.0
        %4893 = vmatprep.subr.mxu0 0.0
        %4894 = vmatpush1.xpose.msra.mxu0 0.0
        %4895 = vmatprep.subr.mxu0 0.0
        %4896 = vmatpush1.xpose.msra.mxu0 0.0
        %4897 = vmatprep.subr.mxu0 %v4720
        %4898 = vmatpush1.xpose.msra.mxu0 %v4719
        %4899 = vmatprep.subr.mxu0 0.0
        %4900 = vmatpush2.xpose.msra.mxu0 0.0
        %4901 = vmatprep.subr.mxu0 0.0
        %4902 = vmatpush2.xpose.msra.mxu0 0.0
        %4903 = vmatprep.subr.mxu0 0.0
        %4904 = vmatpush2.xpose.msra.mxu0 0.0
        %4905 = vmatprep.subr.mxu0 0.0
        %4906 = vmatpush2.xpose.msra.mxu0 0.0
        %4907 = vmatprep.subr.mxu0 0.0
        %4908 = vmatpush2.xpose.msra.mxu0 0.0
        %4909 = vmatprep.subr.mxu0 0.0
        %4910 = vmatpush2.xpose.msra.mxu0 0.0
        %4911 = vmatprep.subr.mxu0 0.0
        %4912 = vmatpush2.xpose.msra.mxu0 0.0
        %4913 = vmatprep.subr.mxu0 0.0
        %4914 = vmatpush2.xpose.msra.mxu0 0.0
        %4915 = vmatprep.subr.mxu0 0.0
        %4916 = vmatpush2.xpose.msra.mxu0 0.0
        %4917 = vmatprep.subr.mxu0 0.0
        %4918 = vmatpush2.xpose.msra.mxu0 0.0
        %4919 = vmatprep.subr.mxu0 0.0
        %4920 = vmatpush2.xpose.msra.mxu0 0.0
        %4921 = vmatprep.subr.mxu0 0.0
        %4922 = vmatpush2.xpose.msra.mxu0 0.0
        %4923 = vmatprep.subr.mxu0 0.0
        %4924 = vmatpush2.xpose.msra.mxu0 0.0
        %4925 = vmatprep.subr.mxu0 0.0
        %4926 = vmatpush2.xpose.msra.mxu0 0.0
        %4927 = vmatprep.subr.mxu0 0.0
        %4928 = vmatpush2.xpose.msra.mxu0 0.0
        %4929 = vmatprep.subr.mxu0 0.0
        %4930 = vmatpush2.xpose.msra.mxu0 0.0
        %4931 = vmatprep.mubr.f32.mxu0 %v4687
        %4932 = vmatmul.mubr.f32.gmra.mxu0 %v4684
        %v4933 = vpop.f32.mrf.mxu0
        %v4934 = vadd.f32 %v4864, %v4933
        %v4935 = vpop.f32.mrf.mxu0
        %4936 = vdwg.mxu0
        %v4939 = vunpack.c.l.s4 1966171168
        %v4940 = vunpack.c.0.s8 %v4939
        %v4941 = vlaneseq
        %v4942 = vshrl.u32 %v4941, 7
        %v4943 = vsub.s32 %v4940, %v4942
        %v4944 = vrot.slane %v4934, %v4943
        %v4945 = vcombine.high %v4944, %v4944
        %v4947 = vunpack.c.l.s4 1966171168
        %v4948 = vunpack.c.0.s8 %v4947
        %v4949 = vlaneseq
        %v4950 = vshrl.u32 %v4949, 7
        %v4951 = vsub.s32 %v4948, %v4950
        %v4952 = vrot.slane %v4944, %v4951
        %v4954 = vunpack.c.l.s4 1966171168
        %v4955 = vunpack.c.0.s8 %v4954
        %v4956 = vlaneseq
        %v4957 = vshrl.u32 %v4956, 7
        %v4958 = vsub.s32 %v4955, %v4957
        %v4959 = vrot.slane %v4945, %v4958
        %v4960 = vcombine.high %v4952, %v4952
        %v4961 = vcombine.high %v4959, %v4959
        %v4962 = vlaneseq
        %v4963 = vshrl.u32 %v4962, 7
        %v4964 = vsub.s32 0, %v4963
        %v4965 = vrot.slane %v4952, %v4964
        %v4966 = vlaneseq
        %v4967 = vshrl.u32 %v4966, 7
        %v4968 = vsub.s32 0, %v4967
        %v4969 = vrot.slane %v4959, %v4968
        %v4970 = vlaneseq
        %v4971 = vshrl.u32 %v4970, 7
        %v4972 = vsub.s32 0, %v4971
        %v4973 = vrot.slane %v4960, %v4972
        %v4974 = vlaneseq
        %v4975 = vshrl.u32 %v4974, 7
        %v4976 = vsub.s32 0, %v4975
        %v4977 = vrot.slane %v4961, %v4976
        %v4982 = vadd.f32 %v4625, %v4965
        %v4983 = vadd.f32 %v4630, %v4969
        %v4984 = vadd.f32 %v4635, %v4973
        %v4985 = vadd.f32 %v4640, %v4977
        %v4986 = vld [vmem:[#allocation9] sm:$0x1]
        %v4988 = vlaneseq
        %v4989 = vshrl.u32 %v4988, 7
        %v4990 = vsub.s32 0, %v4989
        %v4991 = vrot.slane %v4986, %v4990
        %v4993 = vadd.f32 %v4982, %v4991
        %v4994 = vadd.f32 %v4983, %v4991
        %v4995 = vadd.f32 %v4984, %v4991
        %v4996 = vadd.f32 %v4985, %v4991
        %vm4997 = vcmask 15360
        %4998 = vst.msk [vmem:[%s327] sm:$0xff] %vm4997, %v4993
        %4999 = vst.msk [vmem:[%s327 + $0x8] sm:$0xff] %vm4997, %v4994
        %5000 = vst.msk [vmem:[%s327 + $0x10] sm:$0xff] %vm4997, %v4995
        %5001 = vst.msk [vmem:[%s327 + $0x18] sm:$0xff] %vm4997, %v4996
        %s5002 = smul.u32 4, %s23
        %p5003 = scmp.lt.s32.totalorder %s5002, 7
        %s5004 = scalar_select %p5003, %s5002, 7
        %s5005 = smul.addr %s5004, 8
        %s5006 = scalar_lea.vmem %s5, %s5005
        // Predicated region
        $region61: #{tpu_custom_call.1} parent=39 // pred_check
          %p5007 = pneg %p156
        $region62: #{tpu_custom_call.1} parent=39 // pred_check_branch
          %5009 = sbr.rel (%p5007) target = $region64
        $region63: #{tpu_custom_call.1} parent=39 // pred_region
          %s5010 = smul.u32 4, %s23
        $region64: #{tpu_custom_call.1} parent=39 // pred_fallthru
          _
      $region40: #{tpu_custom_call.1} parent=5 // pred_fallthru
        _
      %p5011 = scmp.le.s32.totalorder 2, %s18
      // Predicated region
      $region65: #{tpu_custom_call.1} parent=5 // pred_check
        %p5012 = pneg %p5011
      $region66: #{tpu_custom_call.1} parent=5 // pred_check_branch
        %5014 = sbr.rel (%p5012) target = $region68
      $region67: #{tpu_custom_call.1} parent=5 // pred_region
        %s5015 = ssub.s32 %s18, 2
        // Predicated region
        $region69: #{tpu_custom_call.1} parent=67 // pred_check
          %p5016 = pneg %p162
        $region70: #{tpu_custom_call.1} parent=67 // pred_check_branch
          %5018 = sbr.rel (%p5016) target = $region72
        $region71: #{tpu_custom_call.1} parent=67 // pred_region
          %s5019 = smul.u32 4, %s24
          %p5020 = scmp.lt.s32.totalorder %s5019, 7
          %s5021 = scalar_select %p5020, %s5019, 7
          %s5022 = smul.addr %s5021, 8
          %s5023 = scalar_lea.vmem %s5, %s5022
        $region72: #{tpu_custom_call.1} parent=67 // pred_fallthru
          _
      $region68: #{tpu_custom_call.1} parent=5 // pred_fallthru
        _
    $region6: #{tpu_custom_call.1} parent=1 // loop_footer
      %s22 = sadd.s32 1, %s18
    $region7: #{tpu_custom_call.1} parent=1 // loop_footer_branch
      %17 = sbr.rel target = $region3
    $region8: #{tpu_custom_call.1} parent=1 // loop_exit
      _
    %5024 = vsyncpa [#allocation3], 1
    %s5025 = scalar_lea.sflag [#allocation3], 1
    %5026 = vsyncpa %s5025, 1
    %5027 = vsyncpa [#allocation5], 1
    %s5028 = scalar_lea.sflag [#allocation5], 1
    %5029 = vsyncpa %s5028, 1
    %5030 = vsyncpa [#allocation8], 1

</llo_original>
